<compile_context>
chip_gen: v6e
topology: v6e:2x2x1
jax: 0.10.0
libtpu: 0.0.40
codegen_flags: <defaults>
</compile_context>

<pallas_src>
import jax
import jax.numpy as jnp
from jax.experimental import pallas as pl
from jax.experimental.pallas import tpu as pltpu


# ----------------------------- helpers used inside the kernel ----------------------------------
def _silu(x):
    return x * jax.nn.sigmoid(x)


def _softplus(x):
    return jnp.maximum(x, 0.0) + jnp.log1p(jnp.exp(-jnp.abs(x)))


_N_LAYER_REFS = 6  # w_in_cat, w_xproj_stack, w_out_stack, w_ffn_stack, a_cat, smalls_layer


# ------------------------------------- fused forward kernel ------------------------------------
def _make_fused_kernel(cfg, S):
    L = cfg['seq_len']
    P = cfg['patch_len']
    stride = cfg['stride']
    N = (L - P) // stride + 1
    D = cfg['d_model']
    d_state = cfg['d_state']
    d_conv = cfg['d_conv']
    di = cfg['expand'] * D
    d_ff = cfg['d_ff']
    e_layers = cfg['e_layers']
    pred_len = cfg['pred_len']
    ds_di = d_state * di

    n_refs = 7 + e_layers * _N_LAYER_REFS + 1  # inputs + single output ref

    def layernorm(x2, g, b):
        mu = jnp.mean(x2, axis=-1, keepdims=True)
        xc = x2 - mu
        var = jnp.mean(xc * xc, axis=-1, keepdims=True)
        return xc * jax.lax.rsqrt(var + 1e-5) * g + b

    def mamba_dir(x_dir, z_dir, w_xproj, a_flat, w_conv, b_conv, b_dt, d_skip,
                  t_dt, t_st, r_sum, reverse):
        # One Mamba direction.  x_dir, z_dir: time-major [N*S, di].
        # --- depthwise conv (causal fwd / anti-causal bwd) + SiLU, via static S-row slices ---
        bconv = jnp.broadcast_to(b_conv, (S, di))
        taps = [w_conv[k:k + 1, :] for k in range(d_conv)]
        conv_rows = []
        for t in range(N):
            acc = bconv
            for k in range(d_conv):
                shift = d_conv - 1 - k
                src = t - shift if not reverse else t + shift
                if 0 <= src < N:
                    acc = acc + x_dir[src * S:(src + 1) * S, :] * taps[k]
            conv_rows.append(_silu(acc))
        xact = jnp.concatenate(conv_rows, axis=0)                        # [N*S, di]

        # --- fused x_proj (+ folded dt_proj): [dt | B | C] in one matmul ---
        dbc = jnp.dot(xact, w_xproj, preferred_element_type=jnp.float32)  # [N*S, di+2*ds]
        dt = _softplus(dbc[:, 0:di] + b_dt)                               # [N*S, di]
        Bm = dbc[:, di:di + d_state]                                      # [N*S, ds]
        Cm = dbc[:, di + d_state:di + 2 * d_state]                        # [N*S, ds]

        # --- replicate onto the flat lane-dense state layout [., d_state*di] ---
        dt_rep = jnp.dot(dt, t_dt, preferred_element_type=jnp.float32)          # [N*S, ds*di]
        u_rep = jnp.dot(dt * xact, t_dt, preferred_element_type=jnp.float32)    # [N*S, ds*di]
        B_rep = jnp.dot(Bm, t_st, preferred_element_type=jnp.float32)           # [N*S, ds*di]
        C_rep = jnp.dot(Cm, t_st, preferred_element_type=jnp.float32)           # [N*S, ds*di]
        dA = jnp.exp(dt_rep * a_flat)
        dBu = B_rep * u_rep

        # --- sequential selective scan; each step is one aligned 8-row sublane tile ---
        order = range(N) if not reverse else range(N - 1, -1, -1)
        h = jnp.zeros((S, ds_di), jnp.float32)
        hs = [None] * N
        for t in order:
            h = dA[t * S:(t + 1) * S, :] * h + dBu[t * S:(t + 1) * S, :]
            hs[t] = h
        h_all = jnp.concatenate(hs, axis=0)                               # [N*S, ds*di]
        # y[., i] = sum_j C[., j] * h[., j, i]  -> one dense K=256 matmul
        y = jnp.dot(h_all * C_rep, r_sum, preferred_element_type=jnp.float32)   # [N*S, di]

        # --- D-skip + SiLU(z) gate (out_proj fused with the other direction by the caller) ---
        y = y + d_skip * xact
        return y * _silu(z_dir)

    def kernel(*refs):
        assert len(refs) == n_refs
        (x_ref, w_embed_bd_ref, t_dt_ref, t_st_ref, r_sum_ref, w_head_ref, sg_ref) = refs[:7]
        layer_refs = [refs[7 + l * _N_LAYER_REFS: 7 + (l + 1) * _N_LAYER_REFS]
                      for l in range(e_layers)]
        o_ref = refs[-1]

        t_dt = t_dt_ref[...]
        t_st = t_st_ref[...]
        r_sum = r_sum_ref[...]
        sg = sg_ref[...]
        lnf_g = sg[:, 0:D]
        lnf_b = sg[:, D:2 * D]
        b_embed = sg[:, 2 * D:3 * D]
        b_head = sg[:, 3 * D:3 * D + pred_len]

        # ---- RevIN normalization: per (batch, variate) series, stats over time ----
        x = x_ref[...]                                                    # [S, L]
        mu = jnp.mean(x, axis=1, keepdims=True)
        xc = x - mu
        var = jnp.mean(xc * xc, axis=1, keepdims=True)
        std = jnp.sqrt(var + 1e-5)
        xn = xc / std

        # ---- patch value-embedding: one [S,L]@[L,N*D] block-diagonal matmul, then static
        #      lane slices -> time-major [N*S, D] tokens ----
        emb_wide = jnp.dot(xn, w_embed_bd_ref[...], preferred_element_type=jnp.float32)
        enc2 = jnp.concatenate([emb_wide[:, n * D:(n + 1) * D] for n in range(N)],
                               axis=0) + b_embed                          # [N*S, D]

        # ---- encoder layers: bidirectional Mamba + residual/LN + position-wise FFN + LN ----
        for (w_in_ref, w_xp_ref, w_out_ref, w_ffn_ref, a_ref, sl_ref) in layer_refs:
            sl = sl_ref[...]
            ln1_g = sl[0:1, 0:D];           ln1_b = sl[0:1, D:2 * D]
            ln2_g = sl[0:1, 2 * D:3 * D];   ln2_b = sl[0:1, 3 * D:4 * D]
            b_ff1 = sl[1:2, 0:d_ff];        b_ff2 = sl[1:2, d_ff:d_ff + D]
            b_conv_f = sl[1:2, d_ff + D:d_ff + D + di]
            b_conv_b = sl[1:2, d_ff + D + di:d_ff + D + 2 * di]
            b_dt_f = sl[2:3, 0:di];         b_dt_b = sl[2:3, di:2 * di]
            dsk_f = sl[2:3, 2 * di:3 * di]; dsk_b = sl[2:3, 3 * di:4 * di]
            wconv_f = sl[3:3 + d_conv, 0:di]
            wconv_b = sl[3:3 + d_conv, di:2 * di]
            a_f = a_ref[0:1, :]
            a_b = a_ref[1:2, :]
            w_xp = w_xp_ref[...]
            wxp_f = w_xp[0:di, :]
            wxp_b = w_xp[di:2 * di, :]
            w_ffn = w_ffn_ref[...]
            w_ff1 = w_ffn[0:D, 0:d_ff]
            w_ff2 = w_ffn[D:D + d_ff, 0:D]

            # fused in_proj of both directions: one [N*S, D] @ [D, 4*di] lane-dense matmul
            xz = jnp.dot(enc2, w_in_ref[...], preferred_element_type=jnp.float32)
            y_f = mamba_dir(xz[:, 0:di], xz[:, di:2 * di], wxp_f, a_f, wconv_f,
                            b_conv_f, b_dt_f, dsk_f, t_dt, t_st, r_sum, reverse=False)
            y_b = mamba_dir(xz[:, 2 * di:3 * di], xz[:, 3 * di:4 * di], wxp_b, a_b, wconv_b,
                            b_conv_b, b_dt_b, dsk_b, t_dt, t_st, r_sum, reverse=True)
            # fused out_proj of both directions (also fuses the fwd+bwd add): K = 2*di
            mix = jnp.dot(jnp.concatenate([y_f, y_b], axis=1), w_out_ref[...],
                          preferred_element_type=jnp.float32)             # [N*S, D]

            x1 = layernorm(mix + enc2, ln1_g, ln1_b)
            hff = jnp.maximum(
                jnp.dot(x1, w_ff1, preferred_element_type=jnp.float32) + b_ff1, 0.0)
            yff = jnp.dot(hff, w_ff2, preferred_element_type=jnp.float32) + b_ff2
            enc2 = layernorm(x1 + yff, ln2_g, ln2_b)

        # ---- final encoder LayerNorm ----
        encf = layernorm(enc2, lnf_g, lnf_b)                              # [N*S, D]

        # ---- Flatten_Head as ONE [S, N*D] @ [N*D, pred_len] matmul (K=128) + RevIN denorm ----
        flat = jnp.concatenate([encf[n * S:(n + 1) * S, :] for n in range(N)], axis=1)  # [S, N*D]
        pred = jnp.dot(flat, w_head_ref[...], preferred_element_type=jnp.float32) + b_head
        o_ref[...] = pred * std + mu

    return kernel


# ------------------------------------ parameter construction -----------------------------------
def init_params(key, cfg):
    D = cfg['d_model']; d_state = cfg['d_state']; d_conv = cfg['d_conv']
    di = cfg['expand'] * D
    dt_rank = -(-D // 16)
    d_ff = cfg['d_ff']
    L = cfg['seq_len']; P = cfg['patch_len']; stride = cfg['stride']
    N = (L - P) // stride + 1
    pred_len = cfg['pred_len']
    slab_w = 4 * D                       # 128 for this config

    keys = iter(jax.random.split(key, 512))

    def nrm(shape, s=0.02):
        return jax.random.normal(next(keys), shape, dtype=jnp.float32) * s

    def mamba_dir_params():
        w_x_dt = nrm((di, dt_rank))
        w_dt = nrm((dt_rank, di), 0.5)
        a_log = jnp.log(jnp.broadcast_to(
            jnp.arange(1, d_state + 1, dtype=jnp.float32), (di, d_state)))
        return dict(
            w_in_x=nrm((D, di)), w_in_z=nrm((D, di)),
            w_conv=nrm((d_conv, di)), b_conv=jnp.zeros((di,), jnp.float32),
            # dt_proj folded into x_proj (valid: no nonlinearity between them; bias inside softplus)
            w_dt_eff=w_x_dt @ w_dt, b_dt=jnp.full((di,), 0.05, jnp.float32),
            w_b=nrm((di, d_state)), w_c=nrm((di, d_state)),
            a_flat=(-jnp.exp(a_log)).T.reshape(-1),      # [d_state*di], index = j*di + i
            d_skip=jnp.ones((di,), jnp.float32),
            w_out=nrm((di, D)))

    layers = []
    for _ in range(cfg['e_layers']):
        f = mamba_dir_params()
        b = mamba_dir_params()
        w_in_cat = jnp.concatenate([f['w_in_x'], f['w_in_z'], b['w_in_x'], b['w_in_z']], axis=1)
        w_xproj_stack = jnp.concatenate([
            jnp.concatenate([f['w_dt_eff'], f['w_b'], f['w_c']], axis=1),
            jnp.concatenate([b['w_dt_eff'], b['w_b'], b['w_c']], axis=1)], axis=0)  # [2*di, di+2ds]
        w_out_stack = jnp.concatenate([f['w_out'], b['w_out']], axis=0)             # [2*di, D]
        w_ff1 = nrm((D, d_ff)); w_ff2 = nrm((d_ff, D))
        ffw = max(d_ff, D)
        w_ffn_stack = jnp.zeros((D + d_ff, ffw), jnp.float32)
        w_ffn_stack = w_ffn_stack.at[0:D, 0:d_ff].set(w_ff1)
        w_ffn_stack = w_ffn_stack.at[D:D + d_ff, 0:D].set(w_ff2)
        a_cat = jnp.stack([f['a_flat'], b['a_flat']], axis=0)                       # [2, ds*di]

        # packed small-parameter slab [3+d_conv, 4*D]
        sl = jnp.zeros((3 + d_conv, slab_w), jnp.float32)
        sl = sl.at[0, 0:D].set(jnp.ones((D,))).at[0, D:2 * D].set(jnp.zeros((D,)))      # ln1 g/b
        sl = sl.at[0, 2 * D:3 * D].set(jnp.ones((D,))).at[0, 3 * D:4 * D].set(jnp.zeros((D,)))  # ln2
        sl = sl.at[1, 0:d_ff].set(jnp.zeros((d_ff,))).at[1, d_ff:d_ff + D].set(jnp.zeros((D,)))
        sl = sl.at[1, d_ff + D:d_ff + D + di].set(f['b_conv'])
        sl = sl.at[1, d_ff + D + di:d_ff + D + 2 * di].set(b['b_conv'])
        sl = sl.at[2, 0:di].set(f['b_dt']).at[2, di:2 * di].set(b['b_dt'])
        sl = sl.at[2, 2 * di:3 * di].set(f['d_skip']).at[2, 3 * di:4 * di].set(b['d_skip'])
        sl = sl.at[3:3 + d_conv, 0:di].set(f['w_conv'])
        sl = sl.at[3:3 + d_conv, di:2 * di].set(b['w_conv'])

        layers.append(dict(w_in_cat=w_in_cat, w_xproj_stack=w_xproj_stack,
                           w_out_stack=w_out_stack, w_ffn_stack=w_ffn_stack,
                           a_cat=a_cat, smalls_layer=sl))

    # block-diagonal value embedding [L, N*D]: x @ W  ==  per-patch x[:, n*stride:n*stride+P] @ w_embed
    w_embed = nrm((P, D))
    w_embed_bd = jnp.zeros((L, N * D), jnp.float32)
    for n in range(N):
        w_embed_bd = w_embed_bd.at[n * stride:n * stride + P, n * D:(n + 1) * D].set(w_embed)

    w_head = nrm((N * D, pred_len))     # flatten order n-major / d-minor (torch flatten of [N, D])
    sg = jnp.zeros((1, slab_w), jnp.float32)
    sg = sg.at[0, 0:D].set(jnp.ones((D,)))                 # final-LN gamma
    sg = sg.at[0, D:2 * D].set(jnp.zeros((D,)))            # final-LN beta
    sg = sg.at[0, 2 * D:3 * D].set(jnp.zeros((D,)))        # embedding bias
    sg = sg.at[0, 3 * D:3 * D + pred_len].set(jnp.zeros((pred_len,)))  # head bias

    # constant replication / reduction matrices for the flat [., d_state*di] scan layout
    t_dt = jnp.tile(jnp.eye(di, dtype=jnp.float32), (1, d_state))            # [di,  ds*di]
    t_st = jnp.repeat(jnp.eye(d_state, dtype=jnp.float32), di, axis=1)       # [ds,  ds*di]
    r_sum = t_dt.T                                                           # [ds*di, di]

    return dict(w_embed_bd=w_embed_bd, t_dt=t_dt, t_st=t_st, r_sum=r_sum,
                w_head=w_head, smalls_global=sg, layers=layers)


# -------------------------------------------- forward ------------------------------------------
def bimamba_forward(history_data, params, cfg):
    # history_data: [B, L, M(=enc_in variates), C]; x_enc = feature channel 0 -> [B, L, M]
    B, L, M, _ = history_data.shape
    S = B * M
    x_enc = history_data[..., 0].astype(jnp.float32)
    x_ci = jnp.transpose(x_enc, (0, 2, 1)).reshape(S, L)    # channel-independent rows [S, L]

    args = [x_ci, params['w_embed_bd'], params['t_dt'], params['t_st'], params['r_sum'],
            params['w_head'], params['smalls_global']]
    for lp in params['layers']:
        args += [lp['w_in_cat'], lp['w_xproj_stack'], lp['w_out_stack'],
                 lp['w_ffn_stack'], lp['a_cat'], lp['smalls_layer']]

    kernel = _make_fused_kernel(cfg, S)
    # TODO(synk): when S grows to hundreds of rows, add an S grid ("parallel") with BlockSpec
    # tiling of x/o and an explicit vmem_limit_bytes so v7x uses both TensorCores; at this size
    # a gridless single invocation is fastest on single-TC v5e/v6e.
    pred = pl.pallas_call(
        kernel,
        out_shape=jax.ShapeDtypeStruct((S, cfg['pred_len']), jnp.float32),
        in_specs=[pl.BlockSpec(memory_space=pltpu.MemorySpace.VMEM)] * len(args),
        out_specs=pl.BlockSpec(memory_space=pltpu.MemorySpace.VMEM),
    )(*args)

    pred = jnp.transpose(pred.reshape(B, M, cfg['pred_len']), (0, 2, 1))
    return pred[..., None]                                   # [B, pred_len, M, 1]


# --------------------------------------------- main --------------------------------------------
if __name__ == "__main__":
    cfg = dict(seq_len=16, pred_len=8, enc_in=4, patch_len=4, stride=4,
               d_model=32, d_state=8, d_conv=4, expand=1, d_ff=32, e_layers=1)
    key = jax.random.PRNGKey(0)
    k_data, k_param = jax.random.split(key)

    B = 2
    history_data = jax.random.normal(
        k_data, (B, cfg['seq_len'], cfg['enc_in'], 1), dtype=jnp.float32)
    params = init_params(k_param, cfg)

    # TODO(synk): SRA channel-correlation selection and Dropout are config-time / train-only
    # (inference uses ch_ind=1, dropout=identity), so they are not part of the kernel path.
    fwd = jax.jit(lambda hd, p: bimamba_forward(hd, p, cfg))
    out = jax.block_until_ready(fwd(history_data, params))
    assert out.shape == (B, cfg['pred_len'], cfg['enc_in'], 1), out.shape
    assert bool(jnp.all(jnp.isfinite(out)))
    print("KERNEL_OK")
</pallas_src>

<mosaic_0001>
module attributes {stable_mosaic.version = 11 : i64} {
  func.func @kernel(%arg0: memref<8x16xf32, #tpu.memory_space<vmem>>, %arg1: memref<16x128xf32, #tpu.memory_space<vmem>>, %arg2: memref<32x256xf32, #tpu.memory_space<vmem>>, %arg3: memref<8x256xf32, #tpu.memory_space<vmem>>, %arg4: memref<256x32xf32, #tpu.memory_space<vmem>>, %arg5: memref<128x8xf32, #tpu.memory_space<vmem>>, %arg6: memref<1x128xf32, #tpu.memory_space<vmem>>, %arg7: memref<32x128xf32, #tpu.memory_space<vmem>>, %arg8: memref<64x48xf32, #tpu.memory_space<vmem>>, %arg9: memref<64x32xf32, #tpu.memory_space<vmem>>, %arg10: memref<64x32xf32, #tpu.memory_space<vmem>>, %arg11: memref<2x256xf32, #tpu.memory_space<vmem>>, %arg12: memref<7x128xf32, #tpu.memory_space<vmem>>, %arg13: memref<8x8xf32, #tpu.memory_space<vmem>>) attributes {dimension_semantics = [], scalar_prefetch = 0 : i64, scratch_operands = 0 : i64, tpu.core_type = #tpu.core_type<tc>} {
    %c0 = arith.constant 0 : index
    %c0_0 = arith.constant 0 : index
    %0 = vector.load %arg2[%c0, %c0_0] : memref<32x256xf32, #tpu.memory_space<vmem>>, vector<32x256xf32>
    %c0_1 = arith.constant 0 : index
    %c0_2 = arith.constant 0 : index
    %1 = vector.load %arg3[%c0_1, %c0_2] : memref<8x256xf32, #tpu.memory_space<vmem>>, vector<8x256xf32>
    %c0_3 = arith.constant 0 : index
    %c0_4 = arith.constant 0 : index
    %2 = vector.load %arg4[%c0_3, %c0_4] : memref<256x32xf32, #tpu.memory_space<vmem>>, vector<256x32xf32>
    %c0_5 = arith.constant 0 : index
    %c0_6 = arith.constant 0 : index
    %3 = vector.load %arg6[%c0_5, %c0_6] : memref<1x128xf32, #tpu.memory_space<vmem>>, vector<1x128xf32>
    %4 = vector.extract_strided_slice %3 {offsets = [0, 0], sizes = [1, 32], strides = [1, 1]} : vector<1x128xf32> to vector<1x32xf32>
    %5 = vector.extract_strided_slice %3 {offsets = [0, 32], sizes = [1, 32], strides = [1, 1]} : vector<1x128xf32> to vector<1x32xf32>
    %6 = vector.extract_strided_slice %3 {offsets = [0, 64], sizes = [1, 32], strides = [1, 1]} : vector<1x128xf32> to vector<1x32xf32>
    %7 = vector.extract_strided_slice %3 {offsets = [0, 96], sizes = [1, 8], strides = [1, 1]} : vector<1x128xf32> to vector<1x8xf32>
    %c0_7 = arith.constant 0 : index
    %c0_8 = arith.constant 0 : index
    %8 = vector.load %arg0[%c0_7, %c0_8] : memref<8x16xf32, #tpu.memory_space<vmem>>, vector<8x16xf32>
    %cst = arith.constant dense<0.000000e+00> : vector<8xf32>
    %9 = vector.multi_reduction <add>, %8, %cst [1] : vector<8x16xf32> to vector<8xf32>
    %10 = vector.shape_cast %9 : vector<8xf32> to vector<8x1xf32>
    %cst_9 = arith.constant 1.600000e+01 : f32
    %11 = vector.broadcast %cst_9 : f32 to vector<8x1xf32>
    %12 = arith.divf %10, %11 : vector<8x1xf32>
    %13 = vector.broadcast %12 : vector<8x1xf32> to vector<8x16xf32>
    %14 = arith.subf %8, %13 : vector<8x16xf32>
    %15 = arith.mulf %14, %14 : vector<8x16xf32>
    %cst_10 = arith.constant dense<0.000000e+00> : vector<8xf32>
    %16 = vector.multi_reduction <add>, %15, %cst_10 [1] : vector<8x16xf32> to vector<8xf32>
    %17 = vector.shape_cast %16 : vector<8xf32> to vector<8x1xf32>
    %cst_11 = arith.constant 1.600000e+01 : f32
    %18 = vector.broadcast %cst_11 : f32 to vector<8x1xf32>
    %19 = arith.divf %17, %18 : vector<8x1xf32>
    %cst_12 = arith.constant 9.99999974E-6 : f32
    %20 = vector.broadcast %cst_12 : f32 to vector<8x1xf32>
    %21 = arith.addf %19, %20 : vector<8x1xf32>
    %22 = math.sqrt %21 : vector<8x1xf32>
    %23 = vector.broadcast %22 : vector<8x1xf32> to vector<8x16xf32>
    %24 = arith.divf %14, %23 : vector<8x16xf32>
    %c0_13 = arith.constant 0 : index
    %c0_14 = arith.constant 0 : index
    %25 = vector.load %arg1[%c0_13, %c0_14] : memref<16x128xf32, #tpu.memory_space<vmem>>, vector<16x128xf32>
    %cst_15 = arith.constant dense<0.000000e+00> : vector<8x128xf32>
    %26 = tpu.matmul %24, %25, %cst_15 {dimension_numbers = #tpu.dot_dimension_numbers<[1], [0], [0], [1], [0, 0, 1, 1], [], []>} : vector<8x16xf32>, vector<16x128xf32>, vector<8x128xf32> -> vector<8x128xf32>
    %27 = vector.extract_strided_slice %26 {offsets = [0, 0], sizes = [8, 32], strides = [1, 1]} : vector<8x128xf32> to vector<8x32xf32>
    %28 = vector.extract_strided_slice %26 {offsets = [0, 32], sizes = [8, 32], strides = [1, 1]} : vector<8x128xf32> to vector<8x32xf32>
    %29 = vector.extract_strided_slice %26 {offsets = [0, 64], sizes = [8, 32], strides = [1, 1]} : vector<8x128xf32> to vector<8x32xf32>
    %30 = vector.extract_strided_slice %26 {offsets = [0, 96], sizes = [8, 32], strides = [1, 1]} : vector<8x128xf32> to vector<8x32xf32>
    %31 = tpu.concatenate %27, %28, %29, %30 in 0 : vector<8x32xf32>, vector<8x32xf32>, vector<8x32xf32>, vector<8x32xf32> -> vector<32x32xf32>
    %32 = vector.broadcast %6 : vector<1x32xf32> to vector<32x32xf32>
    %33 = arith.addf %31, %32 : vector<32x32xf32>
    %c0_16 = arith.constant 0 : index
    %c0_17 = arith.constant 0 : index
    %34 = vector.load %arg12[%c0_16, %c0_17] : memref<7x128xf32, #tpu.memory_space<vmem>>, vector<7x128xf32>
    %35 = vector.extract_strided_slice %34 {offsets = [0, 0], sizes = [1, 32], strides = [1, 1]} : vector<7x128xf32> to vector<1x32xf32>
    %36 = vector.extract_strided_slice %34 {offsets = [0, 32], sizes = [1, 32], strides = [1, 1]} : vector<7x128xf32> to vector<1x32xf32>
    %37 = vector.extract_strided_slice %34 {offsets = [0, 64], sizes = [1, 32], strides = [1, 1]} : vector<7x128xf32> to vector<1x32xf32>
    %38 = vector.extract_strided_slice %34 {offsets = [0, 96], sizes = [1, 32], strides = [1, 1]} : vector<7x128xf32> to vector<1x32xf32>
    %39 = vector.extract_strided_slice %34 {offsets = [1, 0], sizes = [1, 32], strides = [1, 1]} : vector<7x128xf32> to vector<1x32xf32>
    %40 = vector.extract_strided_slice %34 {offsets = [1, 32], sizes = [1, 32], strides = [1, 1]} : vector<7x128xf32> to vector<1x32xf32>
    %41 = vector.extract_strided_slice %34 {offsets = [1, 64], sizes = [1, 32], strides = [1, 1]} : vector<7x128xf32> to vector<1x32xf32>
    %42 = vector.extract_strided_slice %34 {offsets = [1, 96], sizes = [1, 32], strides = [1, 1]} : vector<7x128xf32> to vector<1x32xf32>
    %43 = vector.extract_strided_slice %34 {offsets = [2, 0], sizes = [1, 32], strides = [1, 1]} : vector<7x128xf32> to vector<1x32xf32>
    %44 = vector.extract_strided_slice %34 {offsets = [2, 32], sizes = [1, 32], strides = [1, 1]} : vector<7x128xf32> to vector<1x32xf32>
    %45 = vector.extract_strided_slice %34 {offsets = [2, 64], sizes = [1, 32], strides = [1, 1]} : vector<7x128xf32> to vector<1x32xf32>
    %46 = vector.extract_strided_slice %34 {offsets = [2, 96], sizes = [1, 32], strides = [1, 1]} : vector<7x128xf32> to vector<1x32xf32>
    %47 = vector.extract_strided_slice %34 {offsets = [3, 0], sizes = [4, 32], strides = [1, 1]} : vector<7x128xf32> to vector<4x32xf32>
    %48 = vector.extract_strided_slice %34 {offsets = [3, 32], sizes = [4, 32], strides = [1, 1]} : vector<7x128xf32> to vector<4x32xf32>
    %c0_18 = arith.constant 0 : index
    %c0_19 = arith.constant 0 : index
    %49 = vector.load %arg11[%c0_18, %c0_19] : memref<2x256xf32, #tpu.memory_space<vmem>>, vector<1x256xf32>
    %c1 = arith.constant 1 : index
    %c0_20 = arith.constant 0 : index
    %50 = vector.load %arg11[%c1, %c0_20] : memref<2x256xf32, #tpu.memory_space<vmem>>, vector<1x256xf32>
    %c0_21 = arith.constant 0 : index
    %c0_22 = arith.constant 0 : index
    %51 = vector.load %arg8[%c0_21, %c0_22] : memref<64x48xf32, #tpu.memory_space<vmem>>, vector<64x48xf32>
    %52 = vector.extract_strided_slice %51 {offsets = [0, 0], sizes = [32, 48], strides = [1, 1]} : vector<64x48xf32> to vector<32x48xf32>
    %53 = vector.extract_strided_slice %51 {offsets = [32, 0], sizes = [32, 48], strides = [1, 1]} : vector<64x48xf32> to vector<32x48xf32>
    %c0_23 = arith.constant 0 : index
    %c0_24 = arith.constant 0 : index
    %54 = vector.load %arg10[%c0_23, %c0_24] : memref<64x32xf32, #tpu.memory_space<vmem>>, vector<64x32xf32>
    %55 = vector.extract_strided_slice %54 {offsets = [0, 0], sizes = [32, 32], strides = [1, 1]} : vector<64x32xf32> to vector<32x32xf32>
    %56 = vector.extract_strided_slice %54 {offsets = [32, 0], sizes = [32, 32], strides = [1, 1]} : vector<64x32xf32> to vector<32x32xf32>
    %c0_25 = arith.constant 0 : index
    %c0_26 = arith.constant 0 : index
    %57 = vector.load %arg7[%c0_25, %c0_26] : memref<32x128xf32, #tpu.memory_space<vmem>>, vector<32x128xf32>
    %cst_27 = arith.constant dense<0.000000e+00> : vector<32x128xf32>
    %58 = tpu.matmul %33, %57, %cst_27 {dimension_numbers = #tpu.dot_dimension_numbers<[1], [0], [0], [1], [0, 0, 1, 1], [], []>} : vector<32x32xf32>, vector<32x128xf32>, vector<32x128xf32> -> vector<32x128xf32>
    %59 = vector.extract_strided_slice %58 {offsets = [0, 0], sizes = [32, 32], strides = [1, 1]} : vector<32x128xf32> to vector<32x32xf32>
    %60 = vector.extract_strided_slice %58 {offsets = [0, 32], sizes = [32, 32], strides = [1, 1]} : vector<32x128xf32> to vector<32x32xf32>
    %61 = vector.shape_cast %41 : vector<1x32xf32> to vector<1x32xf32>
    %62 = vector.broadcast %61 : vector<1x32xf32> to vector<8x32xf32>
    %63 = vector.extract_strided_slice %47 {offsets = [0, 0], sizes = [1, 32], strides = [1, 1]} : vector<4x32xf32> to vector<1x32xf32>
    %64 = vector.extract_strided_slice %47 {offsets = [1, 0], sizes = [1, 32], strides = [1, 1]} : vector<4x32xf32> to vector<1x32xf32>
    %65 = vector.extract_strided_slice %47 {offsets = [2, 0], sizes = [1, 32], strides = [1, 1]} : vector<4x32xf32> to vector<1x32xf32>
    %66 = vector.extract_strided_slice %47 {offsets = [3, 0], sizes = [1, 32], strides = [1, 1]} : vector<4x32xf32> to vector<1x32xf32>
    %67 = vector.extract_strided_slice %59 {offsets = [0, 0], sizes = [8, 32], strides = [1, 1]} : vector<32x32xf32> to vector<8x32xf32>
    %68 = vector.broadcast %66 : vector<1x32xf32> to vector<8x32xf32>
    %69 = arith.mulf %67, %68 : vector<8x32xf32>
    %70 = arith.addf %62, %69 : vector<8x32xf32>
    %71 = arith.negf %70 : vector<8x32xf32>
    %72 = math.exp %71 : vector<8x32xf32>
    %cst_28 = arith.constant 1.000000e+00 : f32
    %73 = vector.broadcast %cst_28 : f32 to vector<8x32xf32>
    %74 = arith.addf %73, %72 : vector<8x32xf32>
    %75 = arith.divf %73, %74 : vector<8x32xf32>
    %76 = arith.mulf %70, %75 : vector<8x32xf32>
    %77 = vector.extract_strided_slice %59 {offsets = [0, 0], sizes = [8, 32], strides = [1, 1]} : vector<32x32xf32> to vector<8x32xf32>
    %78 = vector.broadcast %65 : vector<1x32xf32> to vector<8x32xf32>
    %79 = arith.mulf %77, %78 : vector<8x32xf32>
    %80 = arith.addf %62, %79 : vector<8x32xf32>
    %81 = vector.extract_strided_slice %59 {offsets = [8, 0], sizes = [8, 32], strides = [1, 1]} : vector<32x32xf32> to vector<8x32xf32>
    %82 = vector.broadcast %66 : vector<1x32xf32> to vector<8x32xf32>
    %83 = arith.mulf %81, %82 : vector<8x32xf32>
    %84 = arith.addf %80, %83 : vector<8x32xf32>
    %85 = arith.negf %84 : vector<8x32xf32>
    %86 = math.exp %85 : vector<8x32xf32>
    %cst_29 = arith.constant 1.000000e+00 : f32
    %87 = vector.broadcast %cst_29 : f32 to vector<8x32xf32>
    %88 = arith.addf %87, %86 : vector<8x32xf32>
    %89 = arith.divf %87, %88 : vector<8x32xf32>
    %90 = arith.mulf %84, %89 : vector<8x32xf32>
    %91 = vector.extract_strided_slice %59 {offsets = [0, 0], sizes = [8, 32], strides = [1, 1]} : vector<32x32xf32> to vector<8x32xf32>
    %92 = vector.broadcast %64 : vector<1x32xf32> to vector<8x32xf32>
    %93 = arith.mulf %91, %92 : vector<8x32xf32>
    %94 = arith.addf %62, %93 : vector<8x32xf32>
    %95 = vector.extract_strided_slice %59 {offsets = [8, 0], sizes = [8, 32], strides = [1, 1]} : vector<32x32xf32> to vector<8x32xf32>
    %96 = vector.broadcast %65 : vector<1x32xf32> to vector<8x32xf32>
    %97 = arith.mulf %95, %96 : vector<8x32xf32>
    %98 = arith.addf %94, %97 : vector<8x32xf32>
    %99 = vector.extract_strided_slice %59 {offsets = [16, 0], sizes = [8, 32], strides = [1, 1]} : vector<32x32xf32> to vector<8x32xf32>
    %100 = vector.broadcast %66 : vector<1x32xf32> to vector<8x32xf32>
    %101 = arith.mulf %99, %100 : vector<8x32xf32>
    %102 = arith.addf %98, %101 : vector<8x32xf32>
    %103 = arith.negf %102 : vector<8x32xf32>
    %104 = math.exp %103 : vector<8x32xf32>
    %cst_30 = arith.constant 1.000000e+00 : f32
    %105 = vector.broadcast %cst_30 : f32 to vector<8x32xf32>
    %106 = arith.addf %105, %104 : vector<8x32xf32>
    %107 = arith.divf %105, %106 : vector<8x32xf32>
    %108 = arith.mulf %102, %107 : vector<8x32xf32>
    %109 = vector.extract_strided_slice %59 {offsets = [0, 0], sizes = [8, 32], strides = [1, 1]} : vector<32x32xf32> to vector<8x32xf32>
    %110 = vector.broadcast %63 : vector<1x32xf32> to vector<8x32xf32>
    %111 = arith.mulf %109, %110 : vector<8x32xf32>
    %112 = arith.addf %62, %111 : vector<8x32xf32>
    %113 = vector.extract_strided_slice %59 {offsets = [8, 0], sizes = [8, 32], strides = [1, 1]} : vector<32x32xf32> to vector<8x32xf32>
    %114 = vector.broadcast %64 : vector<1x32xf32> to vector<8x32xf32>
    %115 = arith.mulf %113, %114 : vector<8x32xf32>
    %116 = arith.addf %112, %115 : vector<8x32xf32>
    %117 = vector.extract_strided_slice %59 {offsets = [16, 0], sizes = [8, 32], strides = [1, 1]} : vector<32x32xf32> to vector<8x32xf32>
    %118 = vector.broadcast %65 : vector<1x32xf32> to vector<8x32xf32>
    %119 = arith.mulf %117, %118 : vector<8x32xf32>
    %120 = arith.addf %116, %119 : vector<8x32xf32>
    %121 = vector.extract_strided_slice %59 {offsets = [24, 0], sizes = [8, 32], strides = [1, 1]} : vector<32x32xf32> to vector<8x32xf32>
    %122 = vector.broadcast %66 : vector<1x32xf32> to vector<8x32xf32>
    %123 = arith.mulf %121, %122 : vector<8x32xf32>
    %124 = arith.addf %120, %123 : vector<8x32xf32>
    %125 = arith.negf %124 : vector<8x32xf32>
    %126 = math.exp %125 : vector<8x32xf32>
    %cst_31 = arith.constant 1.000000e+00 : f32
    %127 = vector.broadcast %cst_31 : f32 to vector<8x32xf32>
    %128 = arith.addf %127, %126 : vector<8x32xf32>
    %129 = arith.divf %127, %128 : vector<8x32xf32>
    %130 = arith.mulf %124, %129 : vector<8x32xf32>
    %131 = tpu.concatenate %76, %90, %108, %130 in 0 : vector<8x32xf32>, vector<8x32xf32>, vector<8x32xf32>, vector<8x32xf32> -> vector<32x32xf32>
    %cst_32 = arith.constant dense<0.000000e+00> : vector<32x48xf32>
    %132 = tpu.matmul %131, %52, %cst_32 {dimension_numbers = #tpu.dot_dimension_numbers<[1], [0], [0], [1], [0, 0, 1, 1], [], []>} : vector<32x32xf32>, vector<32x48xf32>, vector<32x48xf32> -> vector<32x48xf32>
    %133 = vector.extract_strided_slice %132 {offsets = [0, 0], sizes = [32, 32], strides = [1, 1]} : vector<32x48xf32> to vector<32x32xf32>
    %134 = vector.broadcast %43 : vector<1x32xf32> to vector<32x32xf32>
    %135 = arith.addf %133, %134 : vector<32x32xf32>
    %cst_33 = arith.constant 0.000000e+00 : f32
    %136 = vector.broadcast %cst_33 : f32 to vector<32x32xf32>
    %137 = arith.maximumf %135, %136 : vector<32x32xf32>
    %138 = math.absf %135 : vector<32x32xf32>
    %cst_34 = arith.constant 0.000000e+00 : f32
    %139 = vector.broadcast %cst_34 : f32 to vector<32x32xf32>
    %140 = arith.subf %139, %138 : vector<32x32xf32>
    %141 = math.exp %140 : vector<32x32xf32>
    %142 = math.log1p %141 : vector<32x32xf32>
    %143 = arith.addf %137, %142 : vector<32x32xf32>
    %144 = vector.extract_strided_slice %132 {offsets = [0, 32], sizes = [32, 8], strides = [1, 1]} : vector<32x48xf32> to vector<32x8xf32>
    %145 = vector.extract_strided_slice %132 {offsets = [0, 40], sizes = [32, 8], strides = [1, 1]} : vector<32x48xf32> to vector<32x8xf32>
    %cst_35 = arith.constant dense<0.000000e+00> : vector<32x256xf32>
    %146 = tpu.matmul %143, %0, %cst_35 {dimension_numbers = #tpu.dot_dimension_numbers<[1], [0], [0], [1], [0, 0, 1, 1], [], []>} : vector<32x32xf32>, vector<32x256xf32>, vector<32x256xf32> -> vector<32x256xf32>
    %147 = arith.mulf %143, %131 : vector<32x32xf32>
    %cst_36 = arith.constant dense<0.000000e+00> : vector<32x256xf32>
    %148 = tpu.matmul %147, %0, %cst_36 {dimension_numbers = #tpu.dot_dimension_numbers<[1], [0], [0], [1], [0, 0, 1, 1], [], []>} : vector<32x32xf32>, vector<32x256xf32>, vector<32x256xf32> -> vector<32x256xf32>
    %cst_37 = arith.constant dense<0.000000e+00> : vector<32x256xf32>
    %149 = tpu.matmul %144, %1, %cst_37 {dimension_numbers = #tpu.dot_dimension_numbers<[1], [0], [0], [1], [0, 0, 1, 1], [], []>} : vector<32x8xf32>, vector<8x256xf32>, vector<32x256xf32> -> vector<32x256xf32>
    %cst_38 = arith.constant dense<0.000000e+00> : vector<32x256xf32>
    %150 = tpu.matmul %145, %1, %cst_38 {dimension_numbers = #tpu.dot_dimension_numbers<[1], [0], [0], [1], [0, 0, 1, 1], [], []>} : vector<32x8xf32>, vector<8x256xf32>, vector<32x256xf32> -> vector<32x256xf32>
    %151 = vector.broadcast %49 : vector<1x256xf32> to vector<32x256xf32>
    %152 = arith.mulf %146, %151 : vector<32x256xf32>
    %153 = math.exp %152 : vector<32x256xf32>
    %154 = arith.mulf %149, %148 : vector<32x256xf32>
    %cst_39 = arith.constant 0.000000e+00 : f32
    %155 = vector.broadcast %cst_39 : f32 to vector<8x256xf32>
    %156 = vector.extract_strided_slice %153 {offsets = [0, 0], sizes = [8, 256], strides = [1, 1]} : vector<32x256xf32> to vector<8x256xf32>
    %157 = arith.mulf %156, %155 : vector<8x256xf32>
    %158 = vector.extract_strided_slice %154 {offsets = [0, 0], sizes = [8, 256], strides = [1, 1]} : vector<32x256xf32> to vector<8x256xf32>
    %159 = arith.addf %157, %158 : vector<8x256xf32>
    %160 = vector.extract_strided_slice %153 {offsets = [8, 0], sizes = [8, 256], strides = [1, 1]} : vector<32x256xf32> to vector<8x256xf32>
    %161 = arith.mulf %160, %159 : vector<8x256xf32>
    %162 = vector.extract_strided_slice %154 {offsets = [8, 0], sizes = [8, 256], strides = [1, 1]} : vector<32x256xf32> to vector<8x256xf32>
    %163 = arith.addf %161, %162 : vector<8x256xf32>
    %164 = vector.extract_strided_slice %153 {offsets = [16, 0], sizes = [8, 256], strides = [1, 1]} : vector<32x256xf32> to vector<8x256xf32>
    %165 = arith.mulf %164, %163 : vector<8x256xf32>
    %166 = vector.extract_strided_slice %154 {offsets = [16, 0], sizes = [8, 256], strides = [1, 1]} : vector<32x256xf32> to vector<8x256xf32>
    %167 = arith.addf %165, %166 : vector<8x256xf32>
    %168 = vector.extract_strided_slice %153 {offsets = [24, 0], sizes = [8, 256], strides = [1, 1]} : vector<32x256xf32> to vector<8x256xf32>
    %169 = arith.mulf %168, %167 : vector<8x256xf32>
    %170 = vector.extract_strided_slice %154 {offsets = [24, 0], sizes = [8, 256], strides = [1, 1]} : vector<32x256xf32> to vector<8x256xf32>
    %171 = arith.addf %169, %170 : vector<8x256xf32>
    %172 = tpu.concatenate %159, %163, %167, %171 in 0 : vector<8x256xf32>, vector<8x256xf32>, vector<8x256xf32>, vector<8x256xf32> -> vector<32x256xf32>
    %173 = arith.mulf %172, %150 : vector<32x256xf32>
    %cst_40 = arith.constant dense<0.000000e+00> : vector<32x32xf32>
    %174 = tpu.matmul %173, %2, %cst_40 {dimension_numbers = #tpu.dot_dimension_numbers<[1], [0], [0], [1], [0, 0, 1, 1], [], []>} : vector<32x256xf32>, vector<256x32xf32>, vector<32x32xf32> -> vector<32x32xf32>
    %175 = vector.broadcast %45 : vector<1x32xf32> to vector<32x32xf32>
    %176 = arith.mulf %175, %131 : vector<32x32xf32>
    %177 = arith.addf %174, %176 : vector<32x32xf32>
    %178 = arith.negf %60 : vector<32x32xf32>
    %179 = math.exp %178 : vector<32x32xf32>
    %cst_41 = arith.constant 1.000000e+00 : f32
    %180 = vector.broadcast %cst_41 : f32 to vector<32x32xf32>
    %181 = arith.addf %180, %179 : vector<32x32xf32>
    %182 = arith.divf %180, %181 : vector<32x32xf32>
    %183 = arith.mulf %60, %182 : vector<32x32xf32>
    %184 = arith.mulf %177, %183 : vector<32x32xf32>
    %185 = vector.extract_strided_slice %58 {offsets = [0, 64], sizes = [32, 32], strides = [1, 1]} : vector<32x128xf32> to vector<32x32xf32>
    %186 = vector.extract_strided_slice %58 {offsets = [0, 96], sizes = [32, 32], strides = [1, 1]} : vector<32x128xf32> to vector<32x32xf32>
    %187 = vector.shape_cast %42 : vector<1x32xf32> to vector<1x32xf32>
    %188 = vector.broadcast %187 : vector<1x32xf32> to vector<8x32xf32>
    %189 = vector.extract_strided_slice %48 {offsets = [0, 0], sizes = [1, 32], strides = [1, 1]} : vector<4x32xf32> to vector<1x32xf32>
    %190 = vector.extract_strided_slice %48 {offsets = [1, 0], sizes = [1, 32], strides = [1, 1]} : vector<4x32xf32> to vector<1x32xf32>
    %191 = vector.extract_strided_slice %48 {offsets = [2, 0], sizes = [1, 32], strides = [1, 1]} : vector<4x32xf32> to vector<1x32xf32>
    %192 = vector.extract_strided_slice %48 {offsets = [3, 0], sizes = [1, 32], strides = [1, 1]} : vector<4x32xf32> to vector<1x32xf32>
    %193 = vector.extract_strided_slice %185 {offsets = [24, 0], sizes = [8, 32], strides = [1, 1]} : vector<32x32xf32> to vector<8x32xf32>
    %194 = vector.broadcast %189 : vector<1x32xf32> to vector<8x32xf32>
    %195 = arith.mulf %193, %194 : vector<8x32xf32>
    %196 = arith.addf %188, %195 : vector<8x32xf32>
    %197 = vector.extract_strided_slice %185 {offsets = [16, 0], sizes = [8, 32], strides = [1, 1]} : vector<32x32xf32> to vector<8x32xf32>
    %198 = vector.broadcast %190 : vector<1x32xf32> to vector<8x32xf32>
    %199 = arith.mulf %197, %198 : vector<8x32xf32>
    %200 = arith.addf %196, %199 : vector<8x32xf32>
    %201 = vector.extract_strided_slice %185 {offsets = [8, 0], sizes = [8, 32], strides = [1, 1]} : vector<32x32xf32> to vector<8x32xf32>
    %202 = vector.broadcast %191 : vector<1x32xf32> to vector<8x32xf32>
    %203 = arith.mulf %201, %202 : vector<8x32xf32>
    %204 = arith.addf %200, %203 : vector<8x32xf32>
    %205 = vector.extract_strided_slice %185 {offsets = [0, 0], sizes = [8, 32], strides = [1, 1]} : vector<32x32xf32> to vector<8x32xf32>
    %206 = vector.broadcast %192 : vector<1x32xf32> to vector<8x32xf32>
    %207 = arith.mulf %205, %206 : vector<8x32xf32>
    %208 = arith.addf %204, %207 : vector<8x32xf32>
    %209 = arith.negf %208 : vector<8x32xf32>
    %210 = math.exp %209 : vector<8x32xf32>
    %cst_42 = arith.constant 1.000000e+00 : f32
    %211 = vector.broadcast %cst_42 : f32 to vector<8x32xf32>
    %212 = arith.addf %211, %210 : vector<8x32xf32>
    %213 = arith.divf %211, %212 : vector<8x32xf32>
    %214 = arith.mulf %208, %213 : vector<8x32xf32>
    %215 = vector.extract_strided_slice %185 {offsets = [24, 0], sizes = [8, 32], strides = [1, 1]} : vector<32x32xf32> to vector<8x32xf32>
    %216 = vector.broadcast %190 : vector<1x32xf32> to vector<8x32xf32>
    %217 = arith.mulf %215, %216 : vector<8x32xf32>
    %218 = arith.addf %188, %217 : vector<8x32xf32>
    %219 = vector.extract_strided_slice %185 {offsets = [16, 0], sizes = [8, 32], strides = [1, 1]} : vector<32x32xf32> to vector<8x32xf32>
    %220 = vector.broadcast %191 : vector<1x32xf32> to vector<8x32xf32>
    %221 = arith.mulf %219, %220 : vector<8x32xf32>
    %222 = arith.addf %218, %221 : vector<8x32xf32>
    %223 = vector.extract_strided_slice %185 {offsets = [8, 0], sizes = [8, 32], strides = [1, 1]} : vector<32x32xf32> to vector<8x32xf32>
    %224 = vector.broadcast %192 : vector<1x32xf32> to vector<8x32xf32>
    %225 = arith.mulf %223, %224 : vector<8x32xf32>
    %226 = arith.addf %222, %225 : vector<8x32xf32>
    %227 = arith.negf %226 : vector<8x32xf32>
    %228 = math.exp %227 : vector<8x32xf32>
    %cst_43 = arith.constant 1.000000e+00 : f32
    %229 = vector.broadcast %cst_43 : f32 to vector<8x32xf32>
    %230 = arith.addf %229, %228 : vector<8x32xf32>
    %231 = arith.divf %229, %230 : vector<8x32xf32>
    %232 = arith.mulf %226, %231 : vector<8x32xf32>
    %233 = vector.extract_strided_slice %185 {offsets = [24, 0], sizes = [8, 32], strides = [1, 1]} : vector<32x32xf32> to vector<8x32xf32>
    %234 = vector.broadcast %191 : vector<1x32xf32> to vector<8x32xf32>
    %235 = arith.mulf %233, %234 : vector<8x32xf32>
    %236 = arith.addf %188, %235 : vector<8x32xf32>
    %237 = vector.extract_strided_slice %185 {offsets = [16, 0], sizes = [8, 32], strides = [1, 1]} : vector<32x32xf32> to vector<8x32xf32>
    %238 = vector.broadcast %192 : vector<1x32xf32> to vector<8x32xf32>
    %239 = arith.mulf %237, %238 : vector<8x32xf32>
    %240 = arith.addf %236, %239 : vector<8x32xf32>
    %241 = arith.negf %240 : vector<8x32xf32>
    %242 = math.exp %241 : vector<8x32xf32>
    %cst_44 = arith.constant 1.000000e+00 : f32
    %243 = vector.broadcast %cst_44 : f32 to vector<8x32xf32>
    %244 = arith.addf %243, %242 : vector<8x32xf32>
    %245 = arith.divf %243, %244 : vector<8x32xf32>
    %246 = arith.mulf %240, %245 : vector<8x32xf32>
    %247 = vector.extract_strided_slice %185 {offsets = [24, 0], sizes = [8, 32], strides = [1, 1]} : vector<32x32xf32> to vector<8x32xf32>
    %248 = vector.broadcast %192 : vector<1x32xf32> to vector<8x32xf32>
    %249 = arith.mulf %247, %248 : vector<8x32xf32>
    %250 = arith.addf %188, %249 : vector<8x32xf32>
    %251 = arith.negf %250 : vector<8x32xf32>
    %252 = math.exp %251 : vector<8x32xf32>
    %cst_45 = arith.constant 1.000000e+00 : f32
    %253 = vector.broadcast %cst_45 : f32 to vector<8x32xf32>
    %254 = arith.addf %253, %252 : vector<8x32xf32>
    %255 = arith.divf %253, %254 : vector<8x32xf32>
    %256 = arith.mulf %250, %255 : vector<8x32xf32>
    %257 = tpu.concatenate %214, %232, %246, %256 in 0 : vector<8x32xf32>, vector<8x32xf32>, vector<8x32xf32>, vector<8x32xf32> -> vector<32x32xf32>
    %cst_46 = arith.constant dense<0.000000e+00> : vector<32x48xf32>
    %258 = tpu.matmul %257, %53, %cst_46 {dimension_numbers = #tpu.dot_dimension_numbers<[1], [0], [0], [1], [0, 0, 1, 1], [], []>} : vector<32x32xf32>, vector<32x48xf32>, vector<32x48xf32> -> vector<32x48xf32>
    %259 = vector.extract_strided_slice %258 {offsets = [0, 0], sizes = [32, 32], strides = [1, 1]} : vector<32x48xf32> to vector<32x32xf32>
    %260 = vector.broadcast %44 : vector<1x32xf32> to vector<32x32xf32>
    %261 = arith.addf %259, %260 : vector<32x32xf32>
    %cst_47 = arith.constant 0.000000e+00 : f32
    %262 = vector.broadcast %cst_47 : f32 to vector<32x32xf32>
    %263 = arith.maximumf %261, %262 : vector<32x32xf32>
    %264 = math.absf %261 : vector<32x32xf32>
    %cst_48 = arith.constant 0.000000e+00 : f32
    %265 = vector.broadcast %cst_48 : f32 to vector<32x32xf32>
    %266 = arith.subf %265, %264 : vector<32x32xf32>
    %267 = math.exp %266 : vector<32x32xf32>
    %268 = math.log1p %267 : vector<32x32xf32>
    %269 = arith.addf %263, %268 : vector<32x32xf32>
    %270 = vector.extract_strided_slice %258 {offsets = [0, 32], sizes = [32, 8], strides = [1, 1]} : vector<32x48xf32> to vector<32x8xf32>
    %271 = vector.extract_strided_slice %258 {offsets = [0, 40], sizes = [32, 8], strides = [1, 1]} : vector<32x48xf32> to vector<32x8xf32>
    %cst_49 = arith.constant dense<0.000000e+00> : vector<32x256xf32>
    %272 = tpu.matmul %269, %0, %cst_49 {dimension_numbers = #tpu.dot_dimension_numbers<[1], [0], [0], [1], [0, 0, 1, 1], [], []>} : vector<32x32xf32>, vector<32x256xf32>, vector<32x256xf32> -> vector<32x256xf32>
    %273 = arith.mulf %269, %257 : vector<32x32xf32>
    %cst_50 = arith.constant dense<0.000000e+00> : vector<32x256xf32>
    %274 = tpu.matmul %273, %0, %cst_50 {dimension_numbers = #tpu.dot_dimension_numbers<[1], [0], [0], [1], [0, 0, 1, 1], [], []>} : vector<32x32xf32>, vector<32x256xf32>, vector<32x256xf32> -> vector<32x256xf32>
    %cst_51 = arith.constant dense<0.000000e+00> : vector<32x256xf32>
    %275 = tpu.matmul %270, %1, %cst_51 {dimension_numbers = #tpu.dot_dimension_numbers<[1], [0], [0], [1], [0, 0, 1, 1], [], []>} : vector<32x8xf32>, vector<8x256xf32>, vector<32x256xf32> -> vector<32x256xf32>
    %cst_52 = arith.constant dense<0.000000e+00> : vector<32x256xf32>
    %276 = tpu.matmul %271, %1, %cst_52 {dimension_numbers = #tpu.dot_dimension_numbers<[1], [0], [0], [1], [0, 0, 1, 1], [], []>} : vector<32x8xf32>, vector<8x256xf32>, vector<32x256xf32> -> vector<32x256xf32>
    %277 = vector.broadcast %50 : vector<1x256xf32> to vector<32x256xf32>
    %278 = arith.mulf %272, %277 : vector<32x256xf32>
    %279 = math.exp %278 : vector<32x256xf32>
    %280 = arith.mulf %275, %274 : vector<32x256xf32>
    %cst_53 = arith.constant 0.000000e+00 : f32
    %281 = vector.broadcast %cst_53 : f32 to vector<8x256xf32>
    %282 = vector.extract_strided_slice %279 {offsets = [24, 0], sizes = [8, 256], strides = [1, 1]} : vector<32x256xf32> to vector<8x256xf32>
    %283 = arith.mulf %282, %281 : vector<8x256xf32>
    %284 = vector.extract_strided_slice %280 {offsets = [24, 0], sizes = [8, 256], strides = [1, 1]} : vector<32x256xf32> to vector<8x256xf32>
    %285 = arith.addf %283, %284 : vector<8x256xf32>
    %286 = vector.extract_strided_slice %279 {offsets = [16, 0], sizes = [8, 256], strides = [1, 1]} : vector<32x256xf32> to vector<8x256xf32>
    %287 = arith.mulf %286, %285 : vector<8x256xf32>
    %288 = vector.extract_strided_slice %280 {offsets = [16, 0], sizes = [8, 256], strides = [1, 1]} : vector<32x256xf32> to vector<8x256xf32>
    %289 = arith.addf %287, %288 : vector<8x256xf32>
    %290 = vector.extract_strided_slice %279 {offsets = [8, 0], sizes = [8, 256], strides = [1, 1]} : vector<32x256xf32> to vector<8x256xf32>
    %291 = arith.mulf %290, %289 : vector<8x256xf32>
    %292 = vector.extract_strided_slice %280 {offsets = [8, 0], sizes = [8, 256], strides = [1, 1]} : vector<32x256xf32> to vector<8x256xf32>
    %293 = arith.addf %291, %292 : vector<8x256xf32>
    %294 = vector.extract_strided_slice %279 {offsets = [0, 0], sizes = [8, 256], strides = [1, 1]} : vector<32x256xf32> to vector<8x256xf32>
    %295 = arith.mulf %294, %293 : vector<8x256xf32>
    %296 = vector.extract_strided_slice %280 {offsets = [0, 0], sizes = [8, 256], strides = [1, 1]} : vector<32x256xf32> to vector<8x256xf32>
    %297 = arith.addf %295, %296 : vector<8x256xf32>
    %298 = tpu.concatenate %297, %293, %289, %285 in 0 : vector<8x256xf32>, vector<8x256xf32>, vector<8x256xf32>, vector<8x256xf32> -> vector<32x256xf32>
    %299 = arith.mulf %298, %276 : vector<32x256xf32>
    %cst_54 = arith.constant dense<0.000000e+00> : vector<32x32xf32>
    %300 = tpu.matmul %299, %2, %cst_54 {dimension_numbers = #tpu.dot_dimension_numbers<[1], [0], [0], [1], [0, 0, 1, 1], [], []>} : vector<32x256xf32>, vector<256x32xf32>, vector<32x32xf32> -> vector<32x32xf32>
    %301 = vector.broadcast %46 : vector<1x32xf32> to vector<32x32xf32>
    %302 = arith.mulf %301, %257 : vector<32x32xf32>
    %303 = arith.addf %300, %302 : vector<32x32xf32>
    %304 = arith.negf %186 : vector<32x32xf32>
    %305 = math.exp %304 : vector<32x32xf32>
    %cst_55 = arith.constant 1.000000e+00 : f32
    %306 = vector.broadcast %cst_55 : f32 to vector<32x32xf32>
    %307 = arith.addf %306, %305 : vector<32x32xf32>
    %308 = arith.divf %306, %307 : vector<32x32xf32>
    %309 = arith.mulf %186, %308 : vector<32x32xf32>
    %310 = arith.mulf %303, %309 : vector<32x32xf32>
    %311 = tpu.concatenate %184, %310 in 1 : vector<32x32xf32>, vector<32x32xf32> -> vector<32x64xf32>
    %c0_56 = arith.constant 0 : index
    %c0_57 = arith.constant 0 : index
    %312 = vector.load %arg9[%c0_56, %c0_57] : memref<64x32xf32, #tpu.memory_space<vmem>>, vector<64x32xf32>
    %cst_58 = arith.constant dense<0.000000e+00> : vector<32x32xf32>
    %313 = tpu.matmul %311, %312, %cst_58 {dimension_numbers = #tpu.dot_dimension_numbers<[1], [0], [0], [1], [0, 0, 1, 1], [], []>} : vector<32x64xf32>, vector<64x32xf32>, vector<32x32xf32> -> vector<32x32xf32>
    %314 = arith.addf %313, %33 : vector<32x32xf32>
    %cst_59 = arith.constant dense<0.000000e+00> : vector<32xf32>
    %315 = vector.multi_reduction <add>, %314, %cst_59 [1] : vector<32x32xf32> to vector<32xf32>
    %316 = vector.shape_cast %315 : vector<32xf32> to vector<32x1xf32>
    %cst_60 = arith.constant 3.200000e+01 : f32
    %317 = vector.broadcast %cst_60 : f32 to vector<32x1xf32>
    %318 = arith.divf %316, %317 : vector<32x1xf32>
    %319 = vector.broadcast %318 : vector<32x1xf32> to vector<32x32xf32>
    %320 = arith.subf %314, %319 : vector<32x32xf32>
    %321 = arith.mulf %320, %320 : vector<32x32xf32>
    %cst_61 = arith.constant dense<0.000000e+00> : vector<32xf32>
    %322 = vector.multi_reduction <add>, %321, %cst_61 [1] : vector<32x32xf32> to vector<32xf32>
    %323 = vector.shape_cast %322 : vector<32xf32> to vector<32x1xf32>
    %cst_62 = arith.constant 3.200000e+01 : f32
    %324 = vector.broadcast %cst_62 : f32 to vector<32x1xf32>
    %325 = arith.divf %323, %324 : vector<32x1xf32>
    %cst_63 = arith.constant 9.99999974E-6 : f32
    %326 = vector.broadcast %cst_63 : f32 to vector<32x1xf32>
    %327 = arith.addf %325, %326 : vector<32x1xf32>
    %328 = math.rsqrt %327 : vector<32x1xf32>
    %329 = vector.broadcast %328 : vector<32x1xf32> to vector<32x32xf32>
    %330 = arith.mulf %320, %329 : vector<32x32xf32>
    %331 = vector.broadcast %35 : vector<1x32xf32> to vector<32x32xf32>
    %332 = arith.mulf %330, %331 : vector<32x32xf32>
    %333 = vector.broadcast %36 : vector<1x32xf32> to vector<32x32xf32>
    %334 = arith.addf %332, %333 : vector<32x32xf32>
    %cst_64 = arith.constant dense<0.000000e+00> : vector<32x32xf32>
    %335 = tpu.matmul %334, %55, %cst_64 {dimension_numbers = #tpu.dot_dimension_numbers<[1], [0], [0], [1], [0, 0, 1, 1], [], []>} : vector<32x32xf32>, vector<32x32xf32>, vector<32x32xf32> -> vector<32x32xf32>
    %336 = vector.broadcast %39 : vector<1x32xf32> to vector<32x32xf32>
    %337 = arith.addf %335, %336 : vector<32x32xf32>
    %cst_65 = arith.constant 0.000000e+00 : f32
    %338 = vector.broadcast %cst_65 : f32 to vector<32x32xf32>
    %339 = arith.maximumf %337, %338 : vector<32x32xf32>
    %cst_66 = arith.constant dense<0.000000e+00> : vector<32x32xf32>
    %340 = tpu.matmul %339, %56, %cst_66 {dimension_numbers = #tpu.dot_dimension_numbers<[1], [0], [0], [1], [0, 0, 1, 1], [], []>} : vector<32x32xf32>, vector<32x32xf32>, vector<32x32xf32> -> vector<32x32xf32>
    %341 = vector.broadcast %40 : vector<1x32xf32> to vector<32x32xf32>
    %342 = arith.addf %340, %341 : vector<32x32xf32>
    %343 = arith.addf %334, %342 : vector<32x32xf32>
    %cst_67 = arith.constant dense<0.000000e+00> : vector<32xf32>
    %344 = vector.multi_reduction <add>, %343, %cst_67 [1] : vector<32x32xf32> to vector<32xf32>
    %345 = vector.shape_cast %344 : vector<32xf32> to vector<32x1xf32>
    %cst_68 = arith.constant 3.200000e+01 : f32
    %346 = vector.broadcast %cst_68 : f32 to vector<32x1xf32>
    %347 = arith.divf %345, %346 : vector<32x1xf32>
    %348 = vector.broadcast %347 : vector<32x1xf32> to vector<32x32xf32>
    %349 = arith.subf %343, %348 : vector<32x32xf32>
    %350 = arith.mulf %349, %349 : vector<32x32xf32>
    %cst_69 = arith.constant dense<0.000000e+00> : vector<32xf32>
    %351 = vector.multi_reduction <add>, %350, %cst_69 [1] : vector<32x32xf32> to vector<32xf32>
    %352 = vector.shape_cast %351 : vector<32xf32> to vector<32x1xf32>
    %cst_70 = arith.constant 3.200000e+01 : f32
    %353 = vector.broadcast %cst_70 : f32 to vector<32x1xf32>
    %354 = arith.divf %352, %353 : vector<32x1xf32>
    %cst_71 = arith.constant 9.99999974E-6 : f32
    %355 = vector.broadcast %cst_71 : f32 to vector<32x1xf32>
    %356 = arith.addf %354, %355 : vector<32x1xf32>
    %357 = math.rsqrt %356 : vector<32x1xf32>
    %358 = vector.broadcast %357 : vector<32x1xf32> to vector<32x32xf32>
    %359 = arith.mulf %349, %358 : vector<32x32xf32>
    %360 = vector.broadcast %37 : vector<1x32xf32> to vector<32x32xf32>
    %361 = arith.mulf %359, %360 : vector<32x32xf32>
    %362 = vector.broadcast %38 : vector<1x32xf32> to vector<32x32xf32>
    %363 = arith.addf %361, %362 : vector<32x32xf32>
    %cst_72 = arith.constant dense<0.000000e+00> : vector<32xf32>
    %364 = vector.multi_reduction <add>, %363, %cst_72 [1] : vector<32x32xf32> to vector<32xf32>
    %365 = vector.shape_cast %364 : vector<32xf32> to vector<32x1xf32>
    %cst_73 = arith.constant 3.200000e+01 : f32
    %366 = vector.broadcast %cst_73 : f32 to vector<32x1xf32>
    %367 = arith.divf %365, %366 : vector<32x1xf32>
    %368 = vector.broadcast %367 : vector<32x1xf32> to vector<32x32xf32>
    %369 = arith.subf %363, %368 : vector<32x32xf32>
    %370 = arith.mulf %369, %369 : vector<32x32xf32>
    %cst_74 = arith.constant dense<0.000000e+00> : vector<32xf32>
    %371 = vector.multi_reduction <add>, %370, %cst_74 [1] : vector<32x32xf32> to vector<32xf32>
    %372 = vector.shape_cast %371 : vector<32xf32> to vector<32x1xf32>
    %cst_75 = arith.constant 3.200000e+01 : f32
    %373 = vector.broadcast %cst_75 : f32 to vector<32x1xf32>
    %374 = arith.divf %372, %373 : vector<32x1xf32>
    %cst_76 = arith.constant 9.99999974E-6 : f32
    %375 = vector.broadcast %cst_76 : f32 to vector<32x1xf32>
    %376 = arith.addf %374, %375 : vector<32x1xf32>
    %377 = math.rsqrt %376 : vector<32x1xf32>
    %378 = vector.broadcast %377 : vector<32x1xf32> to vector<32x32xf32>
    %379 = arith.mulf %369, %378 : vector<32x32xf32>
    %380 = vector.broadcast %4 : vector<1x32xf32> to vector<32x32xf32>
    %381 = arith.mulf %379, %380 : vector<32x32xf32>
    %382 = vector.broadcast %5 : vector<1x32xf32> to vector<32x32xf32>
    %383 = arith.addf %381, %382 : vector<32x32xf32>
    %384 = vector.extract_strided_slice %383 {offsets = [0, 0], sizes = [8, 32], strides = [1, 1]} : vector<32x32xf32> to vector<8x32xf32>
    %385 = vector.extract_strided_slice %383 {offsets = [8, 0], sizes = [8, 32], strides = [1, 1]} : vector<32x32xf32> to vector<8x32xf32>
    %386 = vector.extract_strided_slice %383 {offsets = [16, 0], sizes = [8, 32], strides = [1, 1]} : vector<32x32xf32> to vector<8x32xf32>
    %387 = vector.extract_strided_slice %383 {offsets = [24, 0], sizes = [8, 32], strides = [1, 1]} : vector<32x32xf32> to vector<8x32xf32>
    %388 = tpu.concatenate %384, %385, %386, %387 in 1 : vector<8x32xf32>, vector<8x32xf32>, vector<8x32xf32>, vector<8x32xf32> -> vector<8x128xf32>
    %c0_77 = arith.constant 0 : index
    %c0_78 = arith.constant 0 : index
    %389 = vector.load %arg5[%c0_77, %c0_78] : memref<128x8xf32, #tpu.memory_space<vmem>>, vector<128x8xf32>
    %cst_79 = arith.constant dense<0.000000e+00> : vector<8x8xf32>
    %390 = tpu.matmul %388, %389, %cst_79 {dimension_numbers = #tpu.dot_dimension_numbers<[1], [0], [0], [1], [0, 0, 1, 1], [], []>} : vector<8x128xf32>, vector<128x8xf32>, vector<8x8xf32> -> vector<8x8xf32>
    %391 = vector.broadcast %7 : vector<1x8xf32> to vector<8x8xf32>
    %392 = arith.addf %390, %391 : vector<8x8xf32>
    %393 = vector.broadcast %22 : vector<8x1xf32> to vector<8x8xf32>
    %394 = arith.mulf %392, %393 : vector<8x8xf32>
    %395 = vector.broadcast %12 : vector<8x1xf32> to vector<8x8xf32>
    %396 = arith.addf %394, %395 : vector<8x8xf32>
    %c0_80 = arith.constant 0 : index
    %c0_81 = arith.constant 0 : index
    %397 = vector.load %arg13[%c0_80, %c0_81] : memref<8x8xf32, #tpu.memory_space<vmem>>, vector<8x8xf32>
    tpu.vector_store %arg13[%c0_80, %c0_81], %396 {strides = array<i32>} : memref<8x8xf32, #tpu.memory_space<vmem>>, vector<8x8xf32>,
    return
  }
}

</mosaic_0001>

<llo_original>
// kernel: _lambda_.1
$region0: #{_lambda_.1}
  #allocation0 [shape = 'u32[]', space=smem, size = 0x4, offset = 0x4, fixed_abs, tag = 'smem constant byte address 0x4 - core index']
  #allocation1 [shape = 'u32[144,128]{1,0:T(1,128)}', space=vmem, size = 0x12000, scoped, tag = 'internal scratch']
  %s0 = inlined_call_operand.vmem [shape: f32[8,16], index: 0, kind: input, shape index: {}]
  %s1 = inlined_call_operand.vmem [shape: f32[16,128], index: 1, kind: input, shape index: {}]
  %s2 = inlined_call_operand.vmem [shape: f32[32,256], index: 2, kind: input, shape index: {}]
  %s3 = inlined_call_operand.vmem [shape: f32[8,256], index: 3, kind: input, shape index: {}]
  %s4 = inlined_call_operand.vmem [shape: f32[256,32], index: 4, kind: input, shape index: {}]
  %s5 = inlined_call_operand.vmem [shape: f32[128,8], index: 5, kind: input, shape index: {}]
  %s6 = inlined_call_operand.vmem [shape: f32[1,128], index: 6, kind: input, shape index: {}]
  %s7 = inlined_call_operand.vmem [shape: f32[32,128], index: 7, kind: input, shape index: {}]
  %s8 = inlined_call_operand.vmem [shape: f32[64,48], index: 8, kind: input, shape index: {}]
  %s9 = inlined_call_operand.vmem [shape: f32[64,32], index: 9, kind: input, shape index: {}]
  %s10 = inlined_call_operand.vmem [shape: f32[64,32], index: 10, kind: input, shape index: {}]
  %s11 = inlined_call_operand.vmem [shape: f32[2,256], index: 11, kind: input, shape index: {}]
  %s12 = inlined_call_operand.vmem [shape: f32[7,128], index: 12, kind: input, shape index: {}]
  %s13 = inlined_call_operand.hbm [shape: f32[8,8], index: 13, kind: output, shape index: {}]
  %s14 = sld [smem:[#allocation0]]
  $region62: #{_lambda_.1} parent=0
    _
  %s16 = ssub.s32 1, %s14
  %s17 = scalar_select 0, %s16, %s14
  $region1: #{_lambda_.1} parent=0
    #allocation2 [shape = 'u8[4096]{0}', space=vmem, size = 0x1000, scoped, tag = 'output window, operand 0, single buffered']
    #allocation3 [shape = 's32[1]{0}', space=sflag, size = 0x4, scoped, tag = 'scoped memory for _lambda_.1']
    %18 = vsyncpa [#allocation3], 0
    // Predicated region
    $region2: #{_lambda_.1} parent=1 // pred_check
      _
    $region3: #{_lambda_.1} parent=1 // pred_check_branch
      %20 = sbr.rel (0) target = $region5
    $region4: #{_lambda_.1} parent=1 // pred_region
      _
    $region5: #{_lambda_.1} parent=1 // pred_fallthru
      _
    // Predicated region
    $region6: #{_lambda_.1} parent=1 // pred_check
      _
    $region7: #{_lambda_.1} parent=1 // pred_check_branch
      %22 = sbr.rel (0) target = $region9
    $region8: #{_lambda_.1} parent=1 // pred_region
      _
    $region9: #{_lambda_.1} parent=1 // pred_fallthru
      _
    // Predicated region
    $region10: #{_lambda_.1} parent=1 // pred_check
      _
    $region11: #{_lambda_.1} parent=1 // pred_check_branch
      %24 = sbr.rel (0) target = $region13
    $region12: #{_lambda_.1} parent=1 // pred_region
      _
    $region13: #{_lambda_.1} parent=1 // pred_fallthru
      _
    // Predicated region
    $region14: #{_lambda_.1} parent=1 // pred_check
      _
    $region15: #{_lambda_.1} parent=1 // pred_check_branch
      %26 = sbr.rel (0) target = $region17
    $region16: #{_lambda_.1} parent=1 // pred_region
      _
    $region17: #{_lambda_.1} parent=1 // pred_fallthru
      _
    // Predicated region
    $region18: #{_lambda_.1} parent=1 // pred_check
      _
    $region19: #{_lambda_.1} parent=1 // pred_check_branch
      %28 = sbr.rel (0) target = $region21
    $region20: #{_lambda_.1} parent=1 // pred_region
      _
    $region21: #{_lambda_.1} parent=1 // pred_fallthru
      _
    // Predicated region
    $region22: #{_lambda_.1} parent=1 // pred_check
      _
    $region23: #{_lambda_.1} parent=1 // pred_check_branch
      %30 = sbr.rel (0) target = $region25
    $region24: #{_lambda_.1} parent=1 // pred_region
      _
    $region25: #{_lambda_.1} parent=1 // pred_fallthru
      _
    // Predicated region
    $region26: #{_lambda_.1} parent=1 // pred_check
      _
    $region27: #{_lambda_.1} parent=1 // pred_check_branch
      %32 = sbr.rel (0) target = $region29
    $region28: #{_lambda_.1} parent=1 // pred_region
      _
    $region29: #{_lambda_.1} parent=1 // pred_fallthru
      _
    // Predicated region
    $region30: #{_lambda_.1} parent=1 // pred_check
      _
    $region31: #{_lambda_.1} parent=1 // pred_check_branch
      %34 = sbr.rel (0) target = $region33
    $region32: #{_lambda_.1} parent=1 // pred_region
      _
    $region33: #{_lambda_.1} parent=1 // pred_fallthru
      _
    // Predicated region
    $region34: #{_lambda_.1} parent=1 // pred_check
      _
    $region35: #{_lambda_.1} parent=1 // pred_check_branch
      %36 = sbr.rel (0) target = $region37
    $region36: #{_lambda_.1} parent=1 // pred_region
      _
    $region37: #{_lambda_.1} parent=1 // pred_fallthru
      _
    // Predicated region
    $region38: #{_lambda_.1} parent=1 // pred_check
      _
    $region39: #{_lambda_.1} parent=1 // pred_check_branch
      %38 = sbr.rel (0) target = $region41
    $region40: #{_lambda_.1} parent=1 // pred_region
      _
    $region41: #{_lambda_.1} parent=1 // pred_fallthru
      _
    // Predicated region
    $region42: #{_lambda_.1} parent=1 // pred_check
      _
    $region43: #{_lambda_.1} parent=1 // pred_check_branch
      %40 = sbr.rel (0) target = $region45
    $region44: #{_lambda_.1} parent=1 // pred_region
      _
    $region45: #{_lambda_.1} parent=1 // pred_fallthru
      _
    // Predicated region
    $region46: #{_lambda_.1} parent=1 // pred_check
      _
    $region47: #{_lambda_.1} parent=1 // pred_check_branch
      %42 = sbr.rel (0) target = $region49
    $region48: #{_lambda_.1} parent=1 // pred_region
      _
    $region49: #{_lambda_.1} parent=1 // pred_fallthru
      _
    // Predicated region
    $region50: #{_lambda_.1} parent=1 // pred_check
      _
    $region51: #{_lambda_.1} parent=1 // pred_check_branch
      %44 = sbr.rel (0) target = $region53
    $region52: #{_lambda_.1} parent=1 // pred_region
      _
    $region53: #{_lambda_.1} parent=1 // pred_fallthru
      _
    %v45 = vld [vmem:[%s2] sm:$0xff]
    %v46 = vld [vmem:[%s2 + $0x8] sm:$0xff]
    %v47 = vld [vmem:[%s2 + $0x10] sm:$0xff]
    %v48 = vld [vmem:[%s2 + $0x18] sm:$0xff]
    %v49 = vld [vmem:[%s2 + $0x20] sm:$0xff]
    %v50 = vld [vmem:[%s2 + $0x28] sm:$0xff]
    %v51 = vld [vmem:[%s2 + $0x30] sm:$0xff]
    %v52 = vld [vmem:[%s2 + $0x38] sm:$0xff]
    %v53 = vld [vmem:[%s3] sm:$0xff]
    %v54 = vld [vmem:[%s3 + $0x8] sm:$0xff]
    %v55 = vld [vmem:[%s4] sm:$0xff]
    %v56 = vld [vmem:[%s4 + $0x8] sm:$0xff]
    %v57 = vld [vmem:[%s4 + $0x10] sm:$0xff]
    %v58 = vld [vmem:[%s4 + $0x18] sm:$0xff]
    %v59 = vld [vmem:[%s4 + $0x20] sm:$0xff]
    %v60 = vld [vmem:[%s4 + $0x28] sm:$0xff]
    %v61 = vld [vmem:[%s4 + $0x30] sm:$0xff]
    %v62 = vld [vmem:[%s4 + $0x38] sm:$0xff]
    %v63 = vld [vmem:[%s4 + $0x40] sm:$0xff]
    %v64 = vld [vmem:[%s4 + $0x48] sm:$0xff]
    %v65 = vld [vmem:[%s4 + $0x50] sm:$0xff]
    %v66 = vld [vmem:[%s4 + $0x58] sm:$0xff]
    %v67 = vld [vmem:[%s4 + $0x60] sm:$0xff]
    %v68 = vld [vmem:[%s4 + $0x68] sm:$0xff]
    %v69 = vld [vmem:[%s4 + $0x70] sm:$0xff]
    %v70 = vld [vmem:[%s4 + $0x78] sm:$0xff]
    %v71 = vld [vmem:[%s4 + $0x80] sm:$0xff]
    %v72 = vld [vmem:[%s4 + $0x88] sm:$0xff]
    %v73 = vld [vmem:[%s4 + $0x90] sm:$0xff]
    %v74 = vld [vmem:[%s4 + $0x98] sm:$0xff]
    %v75 = vld [vmem:[%s4 + $0xa0] sm:$0xff]
    %v76 = vld [vmem:[%s4 + $0xa8] sm:$0xff]
    %v77 = vld [vmem:[%s4 + $0xb0] sm:$0xff]
    %v78 = vld [vmem:[%s4 + $0xb8] sm:$0xff]
    %v79 = vld [vmem:[%s4 + $0xc0] sm:$0xff]
    %v80 = vld [vmem:[%s4 + $0xc8] sm:$0xff]
    %v81 = vld [vmem:[%s4 + $0xd0] sm:$0xff]
    %v82 = vld [vmem:[%s4 + $0xd8] sm:$0xff]
    %v83 = vld [vmem:[%s4 + $0xe0] sm:$0xff]
    %v84 = vld [vmem:[%s4 + $0xe8] sm:$0xff]
    %v85 = vld [vmem:[%s4 + $0xf0] sm:$0xff]
    %v86 = vld [vmem:[%s4 + $0xf8] sm:$0xff]
    %v87 = vld [vmem:[%s6] sm:$0x1]
    %v88 = vld [vmem:[%s0] sm:$0xff]
    %vm89 = vcmask 130048
    %v90 = vsel %vm89, %v88, 0.0
    %91 = vadd.xlane.f32.xlu0 %v90
    %v92 = vpop.xlane.xlu0 %91
    %v93 = vrcp.pop 16.0
    %v94 = vmul.f32 %v92, %v93
    %v95 = vsub.f32 %v88, %v94
    %v96 = vmul.f32 %v95, %v95
    %v97 = vsel %vm89, %v96, 0.0
    %98 = vadd.xlane.f32.xlu0 %v97
    %v99 = vpop.xlane.xlu0 %98
    %v100 = vmul.f32 %v99, %v93
    %v101 = vadd.f32 %v100, 1e-05
    %v102 = vrsqrt.pop %v101
    %v103 = vmul.f32 %v101, %v102
    %vm104 = vcmp.eq.f32.partialorder %v101, inf
    %v105 = vsel %vm104, %v101, %v103
    %vm106 = vcmp.eq.f32.partialorder %v101, 0.0
    %v107 = vand.u32 %v101, 2147483648
    %v108 = vsel %vm106, %v107, %v105
    %v109 = vrcp.pop %v108
    %v110 = vmul.f32 %v95, %v109
    %v111 = vld [vmem:[%s1] sm:$0xff]
    %v112 = vld [vmem:[%s1 + $0x8] sm:$0xff]
    %v114 = vsel %vm89, %v110, 0
    %116 = vmatprep.subr.mxu0 0.0
    %117 = vmatpush1.msra.mxu0 0.0
    %118 = vmatprep.subr.mxu0 0.0
    %119 = vmatpush1.msra.mxu0 0.0
    %120 = vmatprep.subr.mxu0 0.0
    %121 = vmatpush1.msra.mxu0 0.0
    %122 = vmatprep.subr.mxu0 0.0
    %123 = vmatpush1.msra.mxu0 0.0
    %124 = vmatprep.subr.mxu0 0.0
    %125 = vmatpush1.msra.mxu0 0.0
    %126 = vmatprep.subr.mxu0 0.0
    %127 = vmatpush1.msra.mxu0 0.0
    %128 = vmatprep.subr.mxu0 0.0
    %129 = vmatpush1.msra.mxu0 0.0
    %130 = vmatprep.subr.mxu0 0.0
    %131 = vmatpush1.msra.mxu0 0.0
    %132 = vmatprep.subr.mxu0 0.0
    %133 = vmatpush1.msra.mxu0 0.0
    %134 = vmatprep.subr.mxu0 0.0
    %135 = vmatpush1.msra.mxu0 0.0
    %136 = vmatprep.subr.mxu0 0.0
    %137 = vmatpush1.msra.mxu0 0.0
    %138 = vmatprep.subr.mxu0 0.0
    %139 = vmatpush1.msra.mxu0 0.0
    %140 = vmatprep.subr.mxu0 0.0
    %141 = vmatpush1.msra.mxu0 0.0
    %142 = vmatprep.subr.mxu0 0.0
    %143 = vmatpush1.msra.mxu0 0.0
    %144 = vmatprep.subr.mxu0 0.0
    %145 = vmatpush1.msra.mxu0 %v112
    %146 = vmatprep.subr.mxu0 0.0
    %147 = vmatpush1.msra.mxu0 %v111
    %148 = vmatprep.subr.mxu0 0.0
    %149 = vmatpush2.msra.mxu0 0.0
    %150 = vmatprep.subr.mxu0 0.0
    %151 = vmatpush2.msra.mxu0 0.0
    %152 = vmatprep.subr.mxu0 0.0
    %153 = vmatpush2.msra.mxu0 0.0
    %154 = vmatprep.subr.mxu0 0.0
    %155 = vmatpush2.msra.mxu0 0.0
    %156 = vmatprep.subr.mxu0 0.0
    %157 = vmatpush2.msra.mxu0 0.0
    %158 = vmatprep.subr.mxu0 0.0
    %159 = vmatpush2.msra.mxu0 0.0
    %160 = vmatprep.subr.mxu0 0.0
    %161 = vmatpush2.msra.mxu0 0.0
    %162 = vmatprep.subr.mxu0 0.0
    %163 = vmatpush2.msra.mxu0 0.0
    %164 = vmatprep.subr.mxu0 0.0
    %165 = vmatpush2.msra.mxu0 0.0
    %166 = vmatprep.subr.mxu0 0.0
    %167 = vmatpush2.msra.mxu0 0.0
    %168 = vmatprep.subr.mxu0 0.0
    %169 = vmatpush2.msra.mxu0 0.0
    %170 = vmatprep.subr.mxu0 0.0
    %171 = vmatpush2.msra.mxu0 0.0
    %172 = vmatprep.subr.mxu0 0.0
    %173 = vmatpush2.msra.mxu0 0.0
    %174 = vmatprep.subr.mxu0 0.0
    %175 = vmatpush2.msra.mxu0 0.0
    %176 = vmatprep.subr.mxu0 0.0
    %177 = vmatpush2.msra.mxu0 0.0
    %178 = vmatprep.subr.mxu0 0.0
    %179 = vmatpush2.msra.mxu0 0.0
    %180 = vmatprep.mubr.f32.mxu0 0.0
    %181 = vmatmul.mubr.f32.gmra.mxu0 %v114
    %v182 = vpop.f32.mrf.mxu0
    %v183 = vadd.f32 0.0, %v182
    %v184 = vpop.f32.mrf.mxu0
    %185 = vdwg.mxu0
    %187 = vrot.lane.b32.xlu0 %v183, 96
    %v188 = vpop.permute.xlu0 %187
    %190 = vrot.lane.b32.xlu0 %v183, 64
    %v191 = vpop.permute.xlu0 %190
    %193 = vrot.lane.b32.xlu0 %v183, 32
    %v194 = vpop.permute.xlu0 %193
    %v197 = vlaneseq
    %v198 = vshrl.u32 %v197, 7
    %v199 = vsub.s32 0, %v198
    %v200 = vrot.slane %v87, %v199
    %201 = vrot.lane.b32.xlu0 %v200, 64
    %v202 = vpop.permute.xlu0 %201
    %v204 = vadd.f32 %v183, %v202
    %v205 = vadd.f32 %v188, %v202
    %v206 = vadd.f32 %v191, %v202
    %v207 = vadd.f32 %v194, %v202
    %v208 = vld [vmem:[%s12] sm:$0x7f]
    %v209 = vld [vmem:[%s11] ss:$2 sm:$0x3]
    %s210 = scalar_lea.vmem %s11, 1
    %v211 = vld [vmem:[%s210] ss:$2 sm:$0x3]
    %v212 = vld [vmem:[%s8] sm:$0xff]
    %v213 = vld [vmem:[%s8 + $0x8] sm:$0xff]
    %v214 = vld [vmem:[%s8 + $0x10] sm:$0xff]
    %v215 = vld [vmem:[%s8 + $0x18] sm:$0xff]
    %v216 = vld [vmem:[%s8 + $0x20] sm:$0xff]
    %v217 = vld [vmem:[%s8 + $0x28] sm:$0xff]
    %v218 = vld [vmem:[%s8 + $0x30] sm:$0xff]
    %v219 = vld [vmem:[%s8 + $0x38] sm:$0xff]
    %v220 = vld [vmem:[%s10] sm:$0xff]
    %v221 = vld [vmem:[%s10 + $0x8] sm:$0xff]
    %v222 = vld [vmem:[%s10 + $0x10] sm:$0xff]
    %v223 = vld [vmem:[%s10 + $0x18] sm:$0xff]
    %v224 = vld [vmem:[%s10 + $0x20] sm:$0xff]
    %v225 = vld [vmem:[%s10 + $0x28] sm:$0xff]
    %v226 = vld [vmem:[%s10 + $0x30] sm:$0xff]
    %v227 = vld [vmem:[%s10 + $0x38] sm:$0xff]
    %v228 = vld [vmem:[%s7] sm:$0xff]
    %v229 = vld [vmem:[%s7 + $0x8] sm:$0xff]
    %v230 = vld [vmem:[%s7 + $0x10] sm:$0xff]
    %v231 = vld [vmem:[%s7 + $0x18] sm:$0xff]
    %vm232 = vcmask 261120
    %v234 = vsel %vm232, %v204, 0
    %v237 = vsel %vm232, %v205, 0
    %v240 = vsel %vm232, %v206, 0
    %v243 = vsel %vm232, %v207, 0
    %245 = vmatprep.subr.mxu0 0.0
    %246 = vmatpush1.msra.mxu0 0.0
    %247 = vmatprep.subr.mxu0 0.0
    %248 = vmatpush1.msra.mxu0 0.0
    %249 = vmatprep.subr.mxu0 0.0
    %250 = vmatpush1.msra.mxu0 0.0
    %251 = vmatprep.subr.mxu0 0.0
    %252 = vmatpush1.msra.mxu0 0.0
    %253 = vmatprep.subr.mxu0 0.0
    %254 = vmatpush1.msra.mxu0 0.0
    %255 = vmatprep.subr.mxu0 0.0
    %256 = vmatpush1.msra.mxu0 0.0
    %257 = vmatprep.subr.mxu0 0.0
    %258 = vmatpush1.msra.mxu0 0.0
    %259 = vmatprep.subr.mxu0 0.0
    %260 = vmatpush1.msra.mxu0 0.0
    %261 = vmatprep.subr.mxu0 0.0
    %262 = vmatpush1.msra.mxu0 0.0
    %263 = vmatprep.subr.mxu0 0.0
    %264 = vmatpush1.msra.mxu0 0.0
    %265 = vmatprep.subr.mxu0 0.0
    %266 = vmatpush1.msra.mxu0 0.0
    %267 = vmatprep.subr.mxu0 0.0
    %268 = vmatpush1.msra.mxu0 0.0
    %269 = vmatprep.subr.mxu0 0.0
    %270 = vmatpush1.msra.mxu0 %v231
    %271 = vmatprep.subr.mxu0 0.0
    %272 = vmatpush1.msra.mxu0 %v230
    %273 = vmatprep.subr.mxu0 0.0
    %274 = vmatpush1.msra.mxu0 %v229
    %275 = vmatprep.subr.mxu0 0.0
    %276 = vmatpush1.msra.mxu0 %v228
    %277 = vmatprep.subr.mxu0 0.0
    %278 = vmatpush2.msra.mxu0 0.0
    %279 = vmatprep.subr.mxu0 0.0
    %280 = vmatpush2.msra.mxu0 0.0
    %281 = vmatprep.subr.mxu0 0.0
    %282 = vmatpush2.msra.mxu0 0.0
    %283 = vmatprep.subr.mxu0 0.0
    %284 = vmatpush2.msra.mxu0 0.0
    %285 = vmatprep.subr.mxu0 0.0
    %286 = vmatpush2.msra.mxu0 0.0
    %287 = vmatprep.subr.mxu0 0.0
    %288 = vmatpush2.msra.mxu0 0.0
    %289 = vmatprep.subr.mxu0 0.0
    %290 = vmatpush2.msra.mxu0 0.0
    %291 = vmatprep.subr.mxu0 0.0
    %292 = vmatpush2.msra.mxu0 0.0
    %293 = vmatprep.subr.mxu0 0.0
    %294 = vmatpush2.msra.mxu0 0.0
    %295 = vmatprep.subr.mxu0 0.0
    %296 = vmatpush2.msra.mxu0 0.0
    %297 = vmatprep.subr.mxu0 0.0
    %298 = vmatpush2.msra.mxu0 0.0
    %299 = vmatprep.subr.mxu0 0.0
    %300 = vmatpush2.msra.mxu0 0.0
    %301 = vmatprep.subr.mxu0 0.0
    %302 = vmatpush2.msra.mxu0 0.0
    %303 = vmatprep.subr.mxu0 0.0
    %304 = vmatpush2.msra.mxu0 0.0
    %305 = vmatprep.subr.mxu0 0.0
    %306 = vmatpush2.msra.mxu0 0.0
    %307 = vmatprep.subr.mxu0 0.0
    %308 = vmatpush2.msra.mxu0 0.0
    %309 = vmatprep.mubr.f32.mxu0 0.0
    %310 = vmatmul.mubr.f32.gmra.mxu0 %v234
    %v311 = vpop.f32.mrf.mxu0
    %v312 = vadd.f32 0.0, %v311
    %v313 = vpop.f32.mrf.mxu0
    %314 = vmatprep.mubr.f32.mxu0 0.0
    %315 = vmatmul.mubr.f32.gmra.mxu0 %v237
    %v316 = vpop.f32.mrf.mxu0
    %v317 = vadd.f32 0.0, %v316
    %v318 = vpop.f32.mrf.mxu0
    %319 = vmatprep.mubr.f32.mxu0 0.0
    %320 = vmatmul.mubr.f32.gmra.mxu0 %v240
    %v321 = vpop.f32.mrf.mxu0
    %v322 = vadd.f32 0.0, %v321
    %v323 = vpop.f32.mrf.mxu0
    %324 = vmatprep.mubr.f32.mxu0 0.0
    %325 = vmatmul.mubr.f32.gmra.mxu0 %v243
    %v326 = vpop.f32.mrf.mxu0
    %v327 = vadd.f32 0.0, %v326
    %v328 = vpop.f32.mrf.mxu0
    %329 = vdwg.mxu0
    %v330 = vlaneseq
    %v331 = vshrl.u32 %v330, 7
    %v332 = vsub.s32 1, %v331
    %v333 = vrot.slane %v208, %v332
    %v334 = vlaneseq
    %v335 = vshrl.u32 %v334, 7
    %v336 = vsub.s32 6, %v335
    %v337 = vrot.slane %v208, %v336
    %v338 = vmul.f32 %v312, %v337
    %340 = vrot.lane.b32.xlu0 %v338, 64
    %v341 = vpop.permute.xlu0 %340
    %v343 = vadd.f32 %v333, %v341
    %v344 = vxor.u32 %v343, 2147483648
    %v345 = vmul.f32 %v344, 1.442695
    %v346 = vpow.pop %v345
    %v347 = vadd.f32 %v346, 1.0
    %v348 = vrcp.pop %v347
    %v349 = vmul.f32 1.0, %v348
    %v350 = vmul.f32 %v343, %v349
    %v351 = vlaneseq
    %v352 = vshrl.u32 %v351, 7
    %v353 = vsub.s32 5, %v352
    %v354 = vrot.slane %v208, %v353
    %v355 = vmul.f32 %v312, %v354
    %357 = vrot.lane.b32.xlu0 %v355, 64
    %v358 = vpop.permute.xlu0 %357
    %v360 = vadd.f32 %v333, %v358
    %v361 = vmul.f32 %v317, %v337
    %363 = vrot.lane.b32.xlu0 %v361, 64
    %v364 = vpop.permute.xlu0 %363
    %v366 = vadd.f32 %v360, %v364
    %v367 = vxor.u32 %v366, 2147483648
    %v368 = vmul.f32 %v367, 1.442695
    %v369 = vpow.pop %v368
    %v370 = vadd.f32 %v369, 1.0
    %v371 = vrcp.pop %v370
    %v372 = vmul.f32 1.0, %v371
    %v373 = vmul.f32 %v366, %v372
    %v374 = vlaneseq
    %v375 = vshrl.u32 %v374, 7
    %v376 = vsub.s32 4, %v375
    %v377 = vrot.slane %v208, %v376
    %v378 = vmul.f32 %v312, %v377
    %380 = vrot.lane.b32.xlu0 %v378, 64
    %v381 = vpop.permute.xlu0 %380
    %v383 = vadd.f32 %v333, %v381
    %v384 = vmul.f32 %v317, %v354
    %386 = vrot.lane.b32.xlu0 %v384, 64
    %v387 = vpop.permute.xlu0 %386
    %v389 = vadd.f32 %v383, %v387
    %v390 = vmul.f32 %v322, %v337
    %392 = vrot.lane.b32.xlu0 %v390, 64
    %v393 = vpop.permute.xlu0 %392
    %v395 = vadd.f32 %v389, %v393
    %v396 = vxor.u32 %v395, 2147483648
    %v397 = vmul.f32 %v396, 1.442695
    %v398 = vpow.pop %v397
    %v399 = vadd.f32 %v398, 1.0
    %v400 = vrcp.pop %v399
    %v401 = vmul.f32 1.0, %v400
    %v402 = vmul.f32 %v395, %v401
    %v403 = vlaneseq
    %v404 = vshrl.u32 %v403, 7
    %v405 = vsub.s32 3, %v404
    %v406 = vrot.slane %v208, %v405
    %v407 = vmul.f32 %v312, %v406
    %409 = vrot.lane.b32.xlu0 %v407, 64
    %v410 = vpop.permute.xlu0 %409
    %v412 = vadd.f32 %v333, %v410
    %v413 = vmul.f32 %v317, %v377
    %415 = vrot.lane.b32.xlu0 %v413, 64
    %v416 = vpop.permute.xlu0 %415
    %v418 = vadd.f32 %v412, %v416
    %v419 = vmul.f32 %v322, %v354
    %421 = vrot.lane.b32.xlu0 %v419, 64
    %v422 = vpop.permute.xlu0 %421
    %v424 = vadd.f32 %v418, %v422
    %v425 = vmul.f32 %v327, %v337
    %427 = vrot.lane.b32.xlu0 %v425, 64
    %v428 = vpop.permute.xlu0 %427
    %v430 = vadd.f32 %v424, %v428
    %v431 = vxor.u32 %v430, 2147483648
    %v432 = vmul.f32 %v431, 1.442695
    %v433 = vpow.pop %v432
    %v434 = vadd.f32 %v433, 1.0
    %v435 = vrcp.pop %v434
    %v436 = vmul.f32 1.0, %v435
    %v437 = vmul.f32 %v430, %v436
    %442 = vrot.lane.b32.xlu0 %v350, 64
    %v443 = vpop.permute.xlu0 %442
    %444 = vrot.lane.b32.xlu0 %v373, 64
    %v445 = vpop.permute.xlu0 %444
    %446 = vrot.lane.b32.xlu0 %v402, 64
    %v447 = vpop.permute.xlu0 %446
    %448 = vrot.lane.b32.xlu0 %v437, 64
    %v449 = vpop.permute.xlu0 %448
    %v450 = vsel %vm232, %v443, 0
    %v452 = vsel %vm232, %v445, 0
    %v454 = vsel %vm232, %v447, 0
    %v456 = vsel %vm232, %v449, 0
    %458 = vmatprep.subr.mxu0 0.0
    %459 = vmatpush1.msra.mxu0 0.0
    %460 = vmatprep.subr.mxu0 0.0
    %461 = vmatpush1.msra.mxu0 0.0
    %462 = vmatprep.subr.mxu0 0.0
    %463 = vmatpush1.msra.mxu0 0.0
    %464 = vmatprep.subr.mxu0 0.0
    %465 = vmatpush1.msra.mxu0 0.0
    %466 = vmatprep.subr.mxu0 0.0
    %467 = vmatpush1.msra.mxu0 0.0
    %468 = vmatprep.subr.mxu0 0.0
    %469 = vmatpush1.msra.mxu0 0.0
    %470 = vmatprep.subr.mxu0 0.0
    %471 = vmatpush1.msra.mxu0 0.0
    %472 = vmatprep.subr.mxu0 0.0
    %473 = vmatpush1.msra.mxu0 0.0
    %474 = vmatprep.subr.mxu0 0.0
    %475 = vmatpush1.msra.mxu0 0.0
    %476 = vmatprep.subr.mxu0 0.0
    %477 = vmatpush1.msra.mxu0 0.0
    %478 = vmatprep.subr.mxu0 0.0
    %479 = vmatpush1.msra.mxu0 0.0
    %480 = vmatprep.subr.mxu0 0.0
    %481 = vmatpush1.msra.mxu0 0.0
    %482 = vmatprep.subr.mxu0 0.0
    %483 = vmatpush1.msra.mxu0 %v215
    %484 = vmatprep.subr.mxu0 0.0
    %485 = vmatpush1.msra.mxu0 %v214
    %486 = vmatprep.subr.mxu0 0.0
    %487 = vmatpush1.msra.mxu0 %v213
    %488 = vmatprep.subr.mxu0 0.0
    %489 = vmatpush1.msra.mxu0 %v212
    %490 = vmatprep.subr.mxu0 0.0
    %491 = vmatpush2.msra.mxu0 0.0
    %492 = vmatprep.subr.mxu0 0.0
    %493 = vmatpush2.msra.mxu0 0.0
    %494 = vmatprep.subr.mxu0 0.0
    %495 = vmatpush2.msra.mxu0 0.0
    %496 = vmatprep.subr.mxu0 0.0
    %497 = vmatpush2.msra.mxu0 0.0
    %498 = vmatprep.subr.mxu0 0.0
    %499 = vmatpush2.msra.mxu0 0.0
    %500 = vmatprep.subr.mxu0 0.0
    %501 = vmatpush2.msra.mxu0 0.0
    %502 = vmatprep.subr.mxu0 0.0
    %503 = vmatpush2.msra.mxu0 0.0
    %504 = vmatprep.subr.mxu0 0.0
    %505 = vmatpush2.msra.mxu0 0.0
    %506 = vmatprep.subr.mxu0 0.0
    %507 = vmatpush2.msra.mxu0 0.0
    %508 = vmatprep.subr.mxu0 0.0
    %509 = vmatpush2.msra.mxu0 0.0
    %510 = vmatprep.subr.mxu0 0.0
    %511 = vmatpush2.msra.mxu0 0.0
    %512 = vmatprep.subr.mxu0 0.0
    %513 = vmatpush2.msra.mxu0 0.0
    %514 = vmatprep.subr.mxu0 0.0
    %515 = vmatpush2.msra.mxu0 0.0
    %516 = vmatprep.subr.mxu0 0.0
    %517 = vmatpush2.msra.mxu0 0.0
    %518 = vmatprep.subr.mxu0 0.0
    %519 = vmatpush2.msra.mxu0 0.0
    %520 = vmatprep.subr.mxu0 0.0
    %521 = vmatpush2.msra.mxu0 0.0
    %522 = vmatprep.mubr.f32.mxu0 0.0
    %523 = vmatmul.mubr.f32.gmra.mxu0 %v450
    %v524 = vpop.f32.mrf.mxu0
    %v525 = vadd.f32 0.0, %v524
    %v526 = vpop.f32.mrf.mxu0
    %527 = vmatprep.mubr.f32.mxu0 0.0
    %528 = vmatmul.mubr.f32.gmra.mxu0 %v452
    %v529 = vpop.f32.mrf.mxu0
    %v530 = vadd.f32 0.0, %v529
    %v531 = vpop.f32.mrf.mxu0
    %532 = vmatprep.mubr.f32.mxu0 0.0
    %533 = vmatmul.mubr.f32.gmra.mxu0 %v454
    %v534 = vpop.f32.mrf.mxu0
    %v535 = vadd.f32 0.0, %v534
    %v536 = vpop.f32.mrf.mxu0
    %537 = vmatprep.mubr.f32.mxu0 0.0
    %538 = vmatmul.mubr.f32.gmra.mxu0 %v456
    %v539 = vpop.f32.mrf.mxu0
    %v540 = vadd.f32 0.0, %v539
    %v541 = vpop.f32.mrf.mxu0
    %542 = vdwg.mxu0
    %v543 = vlaneseq
    %v544 = vshrl.u32 %v543, 7
    %v545 = vsub.s32 2, %v544
    %v546 = vrot.slane %v208, %v545
    %v547 = vadd.f32 %v525, %v546
    %v548 = vadd.f32 %v530, %v546
    %v549 = vadd.f32 %v535, %v546
    %v550 = vadd.f32 %v540, %v546
    %v551 = vmax.f32 %v547, 0.0
    %v552 = vmax.f32 %v548, 0.0
    %v553 = vmax.f32 %v549, 0.0
    %v554 = vmax.f32 %v550, 0.0
    %v555 = vand.u32 2147483647, %v547
    %v556 = vand.u32 2147483647, %v548
    %v557 = vand.u32 2147483647, %v549
    %v558 = vand.u32 2147483647, %v550
    %v559 = vsub.f32 0.0, %v555
    %v560 = vsub.f32 0.0, %v556
    %v561 = vsub.f32 0.0, %v557
    %v562 = vsub.f32 0.0, %v558
    %v563 = vmul.f32 %v559, 1.442695
    %v564 = vpow.pop %v563
    %v565 = vmul.f32 %v560, 1.442695
    %v566 = vpow.pop %v565
    %v567 = vmul.f32 %v561, 1.442695
    %v568 = vpow.pop %v567
    %v569 = vmul.f32 %v562, 1.442695
    %v570 = vpow.pop %v569
    %v571 = vadd.f32 %v564, 1.0
    %v572 = vlog2.pop %v571
    %v573 = vmul.f32 %v572, 0.6931472
    %v574 = vmul.f32 -0.5, %v564
    %v575 = vadd.f32 %v574, 1.0
    %v576 = vmul.f32 %v575, %v564
    %v577 = vand.u32 2147483647, %v564
    %vm578 = vcmp.lt.f32.partialorder %v577, 0.0004427343
    %v579 = vsel %vm578, %v576, %v573
    %v580 = vadd.f32 %v566, 1.0
    %v581 = vlog2.pop %v580
    %v582 = vmul.f32 %v581, 0.6931472
    %v583 = vmul.f32 -0.5, %v566
    %v584 = vadd.f32 %v583, 1.0
    %v585 = vmul.f32 %v584, %v566
    %v586 = vand.u32 2147483647, %v566
    %vm587 = vcmp.lt.f32.partialorder %v586, 0.0004427343
    %v588 = vsel %vm587, %v585, %v582
    %v589 = vadd.f32 %v568, 1.0
    %v590 = vlog2.pop %v589
    %v591 = vmul.f32 %v590, 0.6931472
    %v592 = vmul.f32 -0.5, %v568
    %v593 = vadd.f32 %v592, 1.0
    %v594 = vmul.f32 %v593, %v568
    %v595 = vand.u32 2147483647, %v568
    %vm596 = vcmp.lt.f32.partialorder %v595, 0.0004427343
    %v597 = vsel %vm596, %v594, %v591
    %v598 = vadd.f32 %v570, 1.0
    %v599 = vlog2.pop %v598
    %v600 = vmul.f32 %v599, 0.6931472
    %v601 = vmul.f32 -0.5, %v570
    %v602 = vadd.f32 %v601, 1.0
    %v603 = vmul.f32 %v602, %v570
    %v604 = vand.u32 2147483647, %v570
    %vm605 = vcmp.lt.f32.partialorder %v604, 0.0004427343
    %v606 = vsel %vm605, %v603, %v600
    %v607 = vadd.f32 %v551, %v579
    %v608 = vadd.f32 %v552, %v588
    %v609 = vadd.f32 %v553, %v597
    %v610 = vadd.f32 %v554, %v606
    %v612 = vsel %vm232, %v607, 0
    %v615 = vsel %vm232, %v608, 0
    %v618 = vsel %vm232, %v609, 0
    %v621 = vsel %vm232, %v610, 0
    %623 = vmatprep.subr.mxu0 0.0
    %624 = vmatpush1.msra.mxu0 0.0
    %625 = vmatprep.subr.mxu0 0.0
    %626 = vmatpush1.msra.mxu0 0.0
    %627 = vmatprep.subr.mxu0 0.0
    %628 = vmatpush1.msra.mxu0 0.0
    %629 = vmatprep.subr.mxu0 0.0
    %630 = vmatpush1.msra.mxu0 0.0
    %631 = vmatprep.subr.mxu0 0.0
    %632 = vmatpush1.msra.mxu0 0.0
    %633 = vmatprep.subr.mxu0 0.0
    %634 = vmatpush1.msra.mxu0 0.0
    %635 = vmatprep.subr.mxu0 0.0
    %636 = vmatpush1.msra.mxu0 0.0
    %637 = vmatprep.subr.mxu0 0.0
    %638 = vmatpush1.msra.mxu0 0.0
    %639 = vmatprep.subr.mxu0 0.0
    %640 = vmatpush1.msra.mxu0 0.0
    %641 = vmatprep.subr.mxu0 0.0
    %642 = vmatpush1.msra.mxu0 0.0
    %643 = vmatprep.subr.mxu0 0.0
    %644 = vmatpush1.msra.mxu0 0.0
    %645 = vmatprep.subr.mxu0 0.0
    %646 = vmatpush1.msra.mxu0 0.0
    %647 = vmatprep.subr.mxu0 %v52
    %648 = vmatpush1.msra.mxu0 %v51
    %649 = vmatprep.subr.mxu0 %v50
    %650 = vmatpush1.msra.mxu0 %v49
    %651 = vmatprep.subr.mxu0 %v48
    %652 = vmatpush1.msra.mxu0 %v47
    %653 = vmatprep.subr.mxu0 %v46
    %654 = vmatpush1.msra.mxu0 %v45
    %655 = vmatprep.subr.mxu0 0.0
    %656 = vmatpush2.msra.mxu0 0.0
    %657 = vmatprep.subr.mxu0 0.0
    %658 = vmatpush2.msra.mxu0 0.0
    %659 = vmatprep.subr.mxu0 0.0
    %660 = vmatpush2.msra.mxu0 0.0
    %661 = vmatprep.subr.mxu0 0.0
    %662 = vmatpush2.msra.mxu0 0.0
    %663 = vmatprep.subr.mxu0 0.0
    %664 = vmatpush2.msra.mxu0 0.0
    %665 = vmatprep.subr.mxu0 0.0
    %666 = vmatpush2.msra.mxu0 0.0
    %667 = vmatprep.subr.mxu0 0.0
    %668 = vmatpush2.msra.mxu0 0.0
    %669 = vmatprep.subr.mxu0 0.0
    %670 = vmatpush2.msra.mxu0 0.0
    %671 = vmatprep.subr.mxu0 0.0
    %672 = vmatpush2.msra.mxu0 0.0
    %673 = vmatprep.subr.mxu0 0.0
    %674 = vmatpush2.msra.mxu0 0.0
    %675 = vmatprep.subr.mxu0 0.0
    %676 = vmatpush2.msra.mxu0 0.0
    %677 = vmatprep.subr.mxu0 0.0
    %678 = vmatpush2.msra.mxu0 0.0
    %679 = vmatprep.subr.mxu0 0.0
    %680 = vmatpush2.msra.mxu0 0.0
    %681 = vmatprep.subr.mxu0 0.0
    %682 = vmatpush2.msra.mxu0 0.0
    %683 = vmatprep.subr.mxu0 0.0
    %684 = vmatpush2.msra.mxu0 0.0
    %685 = vmatprep.subr.mxu0 0.0
    %686 = vmatpush2.msra.mxu0 0.0
    %687 = vmatprep.mubr.f32.mxu0 0.0
    %688 = vmatmul.mubr.f32.gmra.mxu0 %v612
    %v689 = vpop.f32.mrf.mxu0
    %v690 = vadd.f32 0.0, %v689
    %v691 = vpop.f32.mrf.mxu0
    %v692 = vadd.f32 0.0, %v691
    %693 = vmatprep.mubr.f32.mxu0 0.0
    %694 = vmatmul.mubr.f32.gmra.mxu0 %v615
    %v695 = vpop.f32.mrf.mxu0
    %v696 = vadd.f32 0.0, %v695
    %v697 = vpop.f32.mrf.mxu0
    %v698 = vadd.f32 0.0, %v697
    %699 = vmatprep.mubr.f32.mxu0 0.0
    %700 = vmatmul.mubr.f32.gmra.mxu0 %v618
    %v701 = vpop.f32.mrf.mxu0
    %v702 = vadd.f32 0.0, %v701
    %v703 = vpop.f32.mrf.mxu0
    %v704 = vadd.f32 0.0, %v703
    %705 = vmatprep.mubr.f32.mxu0 0.0
    %706 = vmatmul.mubr.f32.gmra.mxu0 %v621
    %v707 = vpop.f32.mrf.mxu0
    %v708 = vadd.f32 0.0, %v707
    %v709 = vpop.f32.mrf.mxu0
    %v710 = vadd.f32 0.0, %v709
    %711 = vdwg.mxu0
    %v716 = vmul.f32 %v607, %v443
    %v717 = vmul.f32 %v608, %v445
    %v718 = vmul.f32 %v609, %v447
    %v719 = vmul.f32 %v610, %v449
    %v721 = vsel %vm232, %v716, 0
    %v724 = vsel %vm232, %v717, 0
    %v727 = vsel %vm232, %v718, 0
    %v730 = vsel %vm232, %v719, 0
    %732 = vmatprep.subr.mxu0 0.0
    %733 = vmatpush1.msra.mxu0 0.0
    %734 = vmatprep.subr.mxu0 0.0
    %735 = vmatpush1.msra.mxu0 0.0
    %736 = vmatprep.subr.mxu0 0.0
    %737 = vmatpush1.msra.mxu0 0.0
    %738 = vmatprep.subr.mxu0 0.0
    %739 = vmatpush1.msra.mxu0 0.0
    %740 = vmatprep.subr.mxu0 0.0
    %741 = vmatpush1.msra.mxu0 0.0
    %742 = vmatprep.subr.mxu0 0.0
    %743 = vmatpush1.msra.mxu0 0.0
    %744 = vmatprep.subr.mxu0 0.0
    %745 = vmatpush1.msra.mxu0 0.0
    %746 = vmatprep.subr.mxu0 0.0
    %747 = vmatpush1.msra.mxu0 0.0
    %748 = vmatprep.subr.mxu0 0.0
    %749 = vmatpush1.msra.mxu0 0.0
    %750 = vmatprep.subr.mxu0 0.0
    %751 = vmatpush1.msra.mxu0 0.0
    %752 = vmatprep.subr.mxu0 0.0
    %753 = vmatpush1.msra.mxu0 0.0
    %754 = vmatprep.subr.mxu0 0.0
    %755 = vmatpush1.msra.mxu0 0.0
    %756 = vmatprep.subr.mxu0 %v52
    %757 = vmatpush1.msra.mxu0 %v51
    %758 = vmatprep.subr.mxu0 %v50
    %759 = vmatpush1.msra.mxu0 %v49
    %760 = vmatprep.subr.mxu0 %v48
    %761 = vmatpush1.msra.mxu0 %v47
    %762 = vmatprep.subr.mxu0 %v46
    %763 = vmatpush1.msra.mxu0 %v45
    %764 = vmatprep.subr.mxu0 0.0
    %765 = vmatpush2.msra.mxu0 0.0
    %766 = vmatprep.subr.mxu0 0.0
    %767 = vmatpush2.msra.mxu0 0.0
    %768 = vmatprep.subr.mxu0 0.0
    %769 = vmatpush2.msra.mxu0 0.0
    %770 = vmatprep.subr.mxu0 0.0
    %771 = vmatpush2.msra.mxu0 0.0
    %772 = vmatprep.subr.mxu0 0.0
    %773 = vmatpush2.msra.mxu0 0.0
    %774 = vmatprep.subr.mxu0 0.0
    %775 = vmatpush2.msra.mxu0 0.0
    %776 = vmatprep.subr.mxu0 0.0
    %777 = vmatpush2.msra.mxu0 0.0
    %778 = vmatprep.subr.mxu0 0.0
    %779 = vmatpush2.msra.mxu0 0.0
    %780 = vmatprep.subr.mxu0 0.0
    %781 = vmatpush2.msra.mxu0 0.0
    %782 = vmatprep.subr.mxu0 0.0
    %783 = vmatpush2.msra.mxu0 0.0
    %784 = vmatprep.subr.mxu0 0.0
    %785 = vmatpush2.msra.mxu0 0.0
    %786 = vmatprep.subr.mxu0 0.0
    %787 = vmatpush2.msra.mxu0 0.0
    %788 = vmatprep.subr.mxu0 0.0
    %789 = vmatpush2.msra.mxu0 0.0
    %790 = vmatprep.subr.mxu0 0.0
    %791 = vmatpush2.msra.mxu0 0.0
    %792 = vmatprep.subr.mxu0 0.0
    %793 = vmatpush2.msra.mxu0 0.0
    %794 = vmatprep.subr.mxu0 0.0
    %795 = vmatpush2.msra.mxu0 0.0
    %796 = vmatprep.mubr.f32.mxu0 0.0
    %797 = vmatmul.mubr.f32.gmra.mxu0 %v721
    %v798 = vpop.f32.mrf.mxu0
    %v799 = vadd.f32 0.0, %v798
    %v800 = vpop.f32.mrf.mxu0
    %v801 = vadd.f32 0.0, %v800
    %802 = vmatprep.mubr.f32.mxu0 0.0
    %803 = vmatmul.mubr.f32.gmra.mxu0 %v724
    %v804 = vpop.f32.mrf.mxu0
    %v805 = vadd.f32 0.0, %v804
    %v806 = vpop.f32.mrf.mxu0
    %v807 = vadd.f32 0.0, %v806
    %808 = vmatprep.mubr.f32.mxu0 0.0
    %809 = vmatmul.mubr.f32.gmra.mxu0 %v727
    %v810 = vpop.f32.mrf.mxu0
    %v811 = vadd.f32 0.0, %v810
    %v812 = vpop.f32.mrf.mxu0
    %v813 = vadd.f32 0.0, %v812
    %814 = vmatprep.mubr.f32.mxu0 0.0
    %815 = vmatmul.mubr.f32.gmra.mxu0 %v730
    %v816 = vpop.f32.mrf.mxu0
    %v817 = vadd.f32 0.0, %v816
    %v818 = vpop.f32.mrf.mxu0
    %v819 = vadd.f32 0.0, %v818
    %820 = vdwg.mxu0
    %825 = vrot.lane.b32.xlu0 %v525, 96
    %v826 = vpop.permute.xlu0 %825
    %827 = vrot.lane.b32.xlu0 %v530, 96
    %v828 = vpop.permute.xlu0 %827
    %829 = vrot.lane.b32.xlu0 %v535, 96
    %v830 = vpop.permute.xlu0 %829
    %831 = vrot.lane.b32.xlu0 %v540, 96
    %v832 = vpop.permute.xlu0 %831
    %vm833 = vcmask 64512
    %v834 = vsel %vm833, %v826, 0
    %v836 = vsel %vm833, %v828, 0
    %v838 = vsel %vm833, %v830, 0
    %v840 = vsel %vm833, %v832, 0
    %842 = vmatprep.subr.mxu0 0.0
    %843 = vmatpush1.msra.mxu0 0.0
    %844 = vmatprep.subr.mxu0 0.0
    %845 = vmatpush1.msra.mxu0 0.0
    %846 = vmatprep.subr.mxu0 0.0
    %847 = vmatpush1.msra.mxu0 0.0
    %848 = vmatprep.subr.mxu0 0.0
    %849 = vmatpush1.msra.mxu0 0.0
    %850 = vmatprep.subr.mxu0 0.0
    %851 = vmatpush1.msra.mxu0 0.0
    %852 = vmatprep.subr.mxu0 0.0
    %853 = vmatpush1.msra.mxu0 0.0
    %854 = vmatprep.subr.mxu0 0.0
    %855 = vmatpush1.msra.mxu0 0.0
    %856 = vmatprep.subr.mxu0 0.0
    %857 = vmatpush1.msra.mxu0 0.0
    %858 = vmatprep.subr.mxu0 0.0
    %859 = vmatpush1.msra.mxu0 0.0
    %860 = vmatprep.subr.mxu0 0.0
    %861 = vmatpush1.msra.mxu0 0.0
    %862 = vmatprep.subr.mxu0 0.0
    %863 = vmatpush1.msra.mxu0 0.0
    %864 = vmatprep.subr.mxu0 0.0
    %865 = vmatpush1.msra.mxu0 0.0
    %866 = vmatprep.subr.mxu0 0.0
    %867 = vmatpush1.msra.mxu0 0.0
    %868 = vmatprep.subr.mxu0 0.0
    %869 = vmatpush1.msra.mxu0 0.0
    %870 = vmatprep.subr.mxu0 0.0
    %871 = vmatpush1.msra.mxu0 0.0
    %872 = vmatprep.subr.mxu0 %v54
    %873 = vmatpush1.msra.mxu0 %v53
    %874 = vmatprep.subr.mxu0 0.0
    %875 = vmatpush2.msra.mxu0 0.0
    %876 = vmatprep.subr.mxu0 0.0
    %877 = vmatpush2.msra.mxu0 0.0
    %878 = vmatprep.subr.mxu0 0.0
    %879 = vmatpush2.msra.mxu0 0.0
    %880 = vmatprep.subr.mxu0 0.0
    %881 = vmatpush2.msra.mxu0 0.0
    %882 = vmatprep.subr.mxu0 0.0
    %883 = vmatpush2.msra.mxu0 0.0
    %884 = vmatprep.subr.mxu0 0.0
    %885 = vmatpush2.msra.mxu0 0.0
    %886 = vmatprep.subr.mxu0 0.0
    %887 = vmatpush2.msra.mxu0 0.0
    %888 = vmatprep.subr.mxu0 0.0
    %889 = vmatpush2.msra.mxu0 0.0
    %890 = vmatprep.subr.mxu0 0.0
    %891 = vmatpush2.msra.mxu0 0.0
    %892 = vmatprep.subr.mxu0 0.0
    %893 = vmatpush2.msra.mxu0 0.0
    %894 = vmatprep.subr.mxu0 0.0
    %895 = vmatpush2.msra.mxu0 0.0
    %896 = vmatprep.subr.mxu0 0.0
    %897 = vmatpush2.msra.mxu0 0.0
    %898 = vmatprep.subr.mxu0 0.0
    %899 = vmatpush2.msra.mxu0 0.0
    %900 = vmatprep.subr.mxu0 0.0
    %901 = vmatpush2.msra.mxu0 0.0
    %902 = vmatprep.subr.mxu0 0.0
    %903 = vmatpush2.msra.mxu0 0.0
    %904 = vmatprep.subr.mxu0 0.0
    %905 = vmatpush2.msra.mxu0 0.0
    %906 = vmatprep.mubr.f32.mxu0 0.0
    %907 = vmatmul.mubr.f32.gmra.mxu0 %v834
    %v908 = vpop.f32.mrf.mxu0
    %v909 = vadd.f32 0.0, %v908
    %v910 = vpop.f32.mrf.mxu0
    %v911 = vadd.f32 0.0, %v910
    %912 = vmatprep.mubr.f32.mxu0 0.0
    %913 = vmatmul.mubr.f32.gmra.mxu0 %v836
    %v914 = vpop.f32.mrf.mxu0
    %v915 = vadd.f32 0.0, %v914
    %v916 = vpop.f32.mrf.mxu0
    %v917 = vadd.f32 0.0, %v916
    %918 = vmatprep.mubr.f32.mxu0 0.0
    %919 = vmatmul.mubr.f32.gmra.mxu0 %v838
    %v920 = vpop.f32.mrf.mxu0
    %v921 = vadd.f32 0.0, %v920
    %v922 = vpop.f32.mrf.mxu0
    %v923 = vadd.f32 0.0, %v922
    %924 = vmatprep.mubr.f32.mxu0 0.0
    %925 = vmatmul.mubr.f32.gmra.mxu0 %v840
    %v926 = vpop.f32.mrf.mxu0
    %v927 = vadd.f32 0.0, %v926
    %v928 = vpop.f32.mrf.mxu0
    %v929 = vadd.f32 0.0, %v928
    %930 = vdwg.mxu0
    %931 = vrot.lane.b32.xlu0 %v525, 88
    %v932 = vpop.permute.xlu0 %931
    %933 = vrot.lane.b32.xlu0 %v530, 88
    %v934 = vpop.permute.xlu0 %933
    %935 = vrot.lane.b32.xlu0 %v535, 88
    %v936 = vpop.permute.xlu0 %935
    %937 = vrot.lane.b32.xlu0 %v540, 88
    %v938 = vpop.permute.xlu0 %937
    %v939 = vsel %vm833, %v932, 0
    %v941 = vsel %vm833, %v934, 0
    %v943 = vsel %vm833, %v936, 0
    %v945 = vsel %vm833, %v938, 0
    %947 = vmatprep.subr.mxu0 0.0
    %948 = vmatpush1.msra.mxu0 0.0
    %949 = vmatprep.subr.mxu0 0.0
    %950 = vmatpush1.msra.mxu0 0.0
    %951 = vmatprep.subr.mxu0 0.0
    %952 = vmatpush1.msra.mxu0 0.0
    %953 = vmatprep.subr.mxu0 0.0
    %954 = vmatpush1.msra.mxu0 0.0
    %955 = vmatprep.subr.mxu0 0.0
    %956 = vmatpush1.msra.mxu0 0.0
    %957 = vmatprep.subr.mxu0 0.0
    %958 = vmatpush1.msra.mxu0 0.0
    %959 = vmatprep.subr.mxu0 0.0
    %960 = vmatpush1.msra.mxu0 0.0
    %961 = vmatprep.subr.mxu0 0.0
    %962 = vmatpush1.msra.mxu0 0.0
    %963 = vmatprep.subr.mxu0 0.0
    %964 = vmatpush1.msra.mxu0 0.0
    %965 = vmatprep.subr.mxu0 0.0
    %966 = vmatpush1.msra.mxu0 0.0
    %967 = vmatprep.subr.mxu0 0.0
    %968 = vmatpush1.msra.mxu0 0.0
    %969 = vmatprep.subr.mxu0 0.0
    %970 = vmatpush1.msra.mxu0 0.0
    %971 = vmatprep.subr.mxu0 0.0
    %972 = vmatpush1.msra.mxu0 0.0
    %973 = vmatprep.subr.mxu0 0.0
    %974 = vmatpush1.msra.mxu0 0.0
    %975 = vmatprep.subr.mxu0 0.0
    %976 = vmatpush1.msra.mxu0 0.0
    %977 = vmatprep.subr.mxu0 %v54
    %978 = vmatpush1.msra.mxu0 %v53
    %979 = vmatprep.subr.mxu0 0.0
    %980 = vmatpush2.msra.mxu0 0.0
    %981 = vmatprep.subr.mxu0 0.0
    %982 = vmatpush2.msra.mxu0 0.0
    %983 = vmatprep.subr.mxu0 0.0
    %984 = vmatpush2.msra.mxu0 0.0
    %985 = vmatprep.subr.mxu0 0.0
    %986 = vmatpush2.msra.mxu0 0.0
    %987 = vmatprep.subr.mxu0 0.0
    %988 = vmatpush2.msra.mxu0 0.0
    %989 = vmatprep.subr.mxu0 0.0
    %990 = vmatpush2.msra.mxu0 0.0
    %991 = vmatprep.subr.mxu0 0.0
    %992 = vmatpush2.msra.mxu0 0.0
    %993 = vmatprep.subr.mxu0 0.0
    %994 = vmatpush2.msra.mxu0 0.0
    %995 = vmatprep.subr.mxu0 0.0
    %996 = vmatpush2.msra.mxu0 0.0
    %997 = vmatprep.subr.mxu0 0.0
    %998 = vmatpush2.msra.mxu0 0.0
    %999 = vmatprep.subr.mxu0 0.0
    %1000 = vmatpush2.msra.mxu0 0.0
    %1001 = vmatprep.subr.mxu0 0.0
    %1002 = vmatpush2.msra.mxu0 0.0
    %1003 = vmatprep.subr.mxu0 0.0
    %1004 = vmatpush2.msra.mxu0 0.0
    %1005 = vmatprep.subr.mxu0 0.0
    %1006 = vmatpush2.msra.mxu0 0.0
    %1007 = vmatprep.subr.mxu0 0.0
    %1008 = vmatpush2.msra.mxu0 0.0
    %1009 = vmatprep.subr.mxu0 0.0
    %1010 = vmatpush2.msra.mxu0 0.0
    %1011 = vmatprep.mubr.f32.mxu0 0.0
    %1012 = vmatmul.mubr.f32.gmra.mxu0 %v939
    %v1013 = vpop.f32.mrf.mxu0
    %v1014 = vadd.f32 0.0, %v1013
    %v1015 = vpop.f32.mrf.mxu0
    %v1016 = vadd.f32 0.0, %v1015
    %1017 = vmatprep.mubr.f32.mxu0 0.0
    %1018 = vmatmul.mubr.f32.gmra.mxu0 %v941
    %v1019 = vpop.f32.mrf.mxu0
    %v1020 = vadd.f32 0.0, %v1019
    %v1021 = vpop.f32.mrf.mxu0
    %v1022 = vadd.f32 0.0, %v1021
    %1023 = vmatprep.mubr.f32.mxu0 0.0
    %1024 = vmatmul.mubr.f32.gmra.mxu0 %v943
    %v1025 = vpop.f32.mrf.mxu0
    %v1026 = vadd.f32 0.0, %v1025
    %v1027 = vpop.f32.mrf.mxu0
    %v1028 = vadd.f32 0.0, %v1027
    %1029 = vmatprep.mubr.f32.mxu0 0.0
    %1030 = vmatmul.mubr.f32.gmra.mxu0 %v945
    %v1031 = vpop.f32.mrf.mxu0
    %v1032 = vadd.f32 0.0, %v1031
    %v1033 = vpop.f32.mrf.mxu0
    %v1034 = vadd.f32 0.0, %v1033
    %1035 = vdwg.mxu0
    %v1037 = vlaneseq
    %v1038 = vshrl.u32 %v1037, 7
    %v1039 = vsub.s32 0, %v1038
    %v1040 = vrot.slane %v209, %v1039
    %v1041 = vlaneseq
    %v1042 = vshrl.u32 %v1041, 7
    %v1043 = vsub.s32 1, %v1042
    %v1044 = vrot.slane %v209, %v1043
    %v1047 = vmul.f32 %v690, %v1040
    %v1048 = vmul.f32 %v692, %v1044
    %v1049 = vmul.f32 %v696, %v1040
    %v1050 = vmul.f32 %v698, %v1044
    %v1051 = vmul.f32 %v702, %v1040
    %v1052 = vmul.f32 %v704, %v1044
    %v1053 = vmul.f32 %v708, %v1040
    %v1054 = vmul.f32 %v710, %v1044
    %v1055 = vmul.f32 %v1047, 1.442695
    %v1056 = vpow.pop %v1055
    %v1057 = vmul.f32 %v1048, 1.442695
    %v1058 = vpow.pop %v1057
    %v1059 = vmul.f32 %v1049, 1.442695
    %v1060 = vpow.pop %v1059
    %v1061 = vmul.f32 %v1050, 1.442695
    %v1062 = vpow.pop %v1061
    %v1063 = vmul.f32 %v1051, 1.442695
    %v1064 = vpow.pop %v1063
    %v1065 = vmul.f32 %v1052, 1.442695
    %v1066 = vpow.pop %v1065
    %v1067 = vmul.f32 %v1053, 1.442695
    %v1068 = vpow.pop %v1067
    %v1069 = vmul.f32 %v1054, 1.442695
    %v1070 = vpow.pop %v1069
    %v1071 = vmul.f32 %v909, %v799
    %v1072 = vmul.f32 %v911, %v801
    %v1073 = vmul.f32 %v915, %v805
    %v1074 = vmul.f32 %v917, %v807
    %v1075 = vmul.f32 %v921, %v811
    %v1076 = vmul.f32 %v923, %v813
    %v1077 = vmul.f32 %v927, %v817
    %v1078 = vmul.f32 %v929, %v819
    %v1079 = vmul.f32 %v1056, 0.0
    %v1080 = vmul.f32 %v1058, 0.0
    %v1081 = vadd.f32 %v1079, %v1071
    %v1082 = vadd.f32 %v1080, %v1072
    %v1083 = vmul.f32 %v1060, %v1081
    %v1084 = vmul.f32 %v1062, %v1082
    %v1085 = vadd.f32 %v1083, %v1073
    %v1086 = vadd.f32 %v1084, %v1074
    %v1087 = vmul.f32 %v1064, %v1085
    %v1088 = vmul.f32 %v1066, %v1086
    %v1089 = vadd.f32 %v1087, %v1075
    %v1090 = vadd.f32 %v1088, %v1076
    %v1091 = vmul.f32 %v1068, %v1089
    %v1092 = vmul.f32 %v1070, %v1090
    %v1093 = vadd.f32 %v1091, %v1077
    %v1094 = vadd.f32 %v1092, %v1078
    %v1095 = vmul.f32 %v1081, %v1014
    %v1096 = vmul.f32 %v1082, %v1016
    %v1097 = vmul.f32 %v1085, %v1020
    %v1098 = vmul.f32 %v1086, %v1022
    %v1099 = vmul.f32 %v1089, %v1026
    %v1100 = vmul.f32 %v1090, %v1028
    %v1101 = vmul.f32 %v1093, %v1032
    %v1102 = vmul.f32 %v1094, %v1034
    %v1103 = vmul.f32 %v546, %v350
    %v1104 = vmul.f32 %v546, %v373
    %v1105 = vmul.f32 %v546, %v402
    %v1106 = vmul.f32 %v546, %v437
    %1111 = vrot.lane.b32.xlu0 %v1103, 64
    %v1112 = vpop.permute.xlu0 %1111
    %1113 = vrot.lane.b32.xlu0 %v1104, 64
    %v1114 = vpop.permute.xlu0 %1113
    %1115 = vrot.lane.b32.xlu0 %v1105, 64
    %v1116 = vpop.permute.xlu0 %1115
    %1117 = vrot.lane.b32.xlu0 %v1106, 64
    %v1118 = vpop.permute.xlu0 %1117
    %1123 = vmatprep.subr.mxu0 0.0
    %1124 = vmatpush1.msra.mxu0 %v70
    %1125 = vmatprep.subr.mxu0 0.0
    %1126 = vmatpush1.msra.mxu0 %v69
    %1127 = vmatprep.subr.mxu0 0.0
    %1128 = vmatpush1.msra.mxu0 %v68
    %1129 = vmatprep.subr.mxu0 0.0
    %1130 = vmatpush1.msra.mxu0 %v67
    %1131 = vmatprep.subr.mxu0 0.0
    %1132 = vmatpush1.msra.mxu0 %v66
    %1133 = vmatprep.subr.mxu0 0.0
    %1134 = vmatpush1.msra.mxu0 %v65
    %1135 = vmatprep.subr.mxu0 0.0
    %1136 = vmatpush1.msra.mxu0 %v64
    %1137 = vmatprep.subr.mxu0 0.0
    %1138 = vmatpush1.msra.mxu0 %v63
    %1139 = vmatprep.subr.mxu0 0.0
    %1140 = vmatpush1.msra.mxu0 %v62
    %1141 = vmatprep.subr.mxu0 0.0
    %1142 = vmatpush1.msra.mxu0 %v61
    %1143 = vmatprep.subr.mxu0 0.0
    %1144 = vmatpush1.msra.mxu0 %v60
    %1145 = vmatprep.subr.mxu0 0.0
    %1146 = vmatpush1.msra.mxu0 %v59
    %1147 = vmatprep.subr.mxu0 0.0
    %1148 = vmatpush1.msra.mxu0 %v58
    %1149 = vmatprep.subr.mxu0 0.0
    %1150 = vmatpush1.msra.mxu0 %v57
    %1151 = vmatprep.subr.mxu0 0.0
    %1152 = vmatpush1.msra.mxu0 %v56
    %1153 = vmatprep.subr.mxu0 0.0
    %1154 = vmatpush1.msra.mxu0 %v55
    %1155 = vmatprep.subr.mxu0 0.0
    %1156 = vmatpush2.msra.mxu0 %v86
    %1157 = vmatprep.subr.mxu0 0.0
    %1158 = vmatpush2.msra.mxu0 %v85
    %1159 = vmatprep.subr.mxu0 0.0
    %1160 = vmatpush2.msra.mxu0 %v84
    %1161 = vmatprep.subr.mxu0 0.0
    %1162 = vmatpush2.msra.mxu0 %v83
    %1163 = vmatprep.subr.mxu0 0.0
    %1164 = vmatpush2.msra.mxu0 %v82
    %1165 = vmatprep.subr.mxu0 0.0
    %1166 = vmatpush2.msra.mxu0 %v81
    %1167 = vmatprep.subr.mxu0 0.0
    %1168 = vmatpush2.msra.mxu0 %v80
    %1169 = vmatprep.subr.mxu0 0.0
    %1170 = vmatpush2.msra.mxu0 %v79
    %1171 = vmatprep.subr.mxu0 0.0
    %1172 = vmatpush2.msra.mxu0 %v78
    %1173 = vmatprep.subr.mxu0 0.0
    %1174 = vmatpush2.msra.mxu0 %v77
    %1175 = vmatprep.subr.mxu0 0.0
    %1176 = vmatpush2.msra.mxu0 %v76
    %1177 = vmatprep.subr.mxu0 0.0
    %1178 = vmatpush2.msra.mxu0 %v75
    %1179 = vmatprep.subr.mxu0 0.0
    %1180 = vmatpush2.msra.mxu0 %v74
    %1181 = vmatprep.subr.mxu0 0.0
    %1182 = vmatpush2.msra.mxu0 %v73
    %1183 = vmatprep.subr.mxu0 0.0
    %1184 = vmatpush2.msra.mxu0 %v72
    %1185 = vmatprep.subr.mxu0 0.0
    %1186 = vmatpush2.msra.mxu0 %v71
    %1187 = vmatprep.mubr.f32.mxu0 %v1096
    %1188 = vmatmul.mubr.f32.gmra.mxu0 %v1095
    %v1189 = vpop.f32.mrf.mxu0
    %v1190 = vadd.f32 %v1112, %v1189
    %v1191 = vpop.f32.mrf.mxu0
    %1192 = vmatprep.mubr.f32.mxu0 %v1098
    %1193 = vmatmul.mubr.f32.gmra.mxu0 %v1097
    %v1194 = vpop.f32.mrf.mxu0
    %v1195 = vadd.f32 %v1114, %v1194
    %v1196 = vpop.f32.mrf.mxu0
    %1197 = vmatprep.mubr.f32.mxu0 %v1100
    %1198 = vmatmul.mubr.f32.gmra.mxu0 %v1099
    %v1199 = vpop.f32.mrf.mxu0
    %v1200 = vadd.f32 %v1116, %v1199
    %v1201 = vpop.f32.mrf.mxu0
    %1202 = vmatprep.mubr.f32.mxu0 %v1102
    %1203 = vmatmul.mubr.f32.gmra.mxu0 %v1101
    %v1204 = vpop.f32.mrf.mxu0
    %v1205 = vadd.f32 %v1118, %v1204
    %v1206 = vpop.f32.mrf.mxu0
    %1207 = vdwg.mxu0
    %v1208 = vxor.u32 %v312, 2147483648
    %v1209 = vxor.u32 %v317, 2147483648
    %v1210 = vxor.u32 %v322, 2147483648
    %v1211 = vxor.u32 %v327, 2147483648
    %v1212 = vmul.f32 %v1208, 1.442695
    %v1213 = vpow.pop %v1212
    %v1214 = vmul.f32 %v1209, 1.442695
    %v1215 = vpow.pop %v1214
    %v1216 = vmul.f32 %v1210, 1.442695
    %v1217 = vpow.pop %v1216
    %v1218 = vmul.f32 %v1211, 1.442695
    %v1219 = vpow.pop %v1218
    %v1220 = vadd.f32 %v1213, 1.0
    %v1221 = vadd.f32 %v1215, 1.0
    %v1222 = vadd.f32 %v1217, 1.0
    %v1223 = vadd.f32 %v1219, 1.0
    %v1224 = vrcp.pop %v1220
    %v1225 = vmul.f32 1.0, %v1224
    %v1226 = vrcp.pop %v1221
    %v1227 = vmul.f32 1.0, %v1226
    %v1228 = vrcp.pop %v1222
    %v1229 = vmul.f32 1.0, %v1228
    %v1230 = vrcp.pop %v1223
    %v1231 = vmul.f32 1.0, %v1230
    %v1232 = vmul.f32 %v312, %v1225
    %v1233 = vmul.f32 %v317, %v1227
    %v1234 = vmul.f32 %v322, %v1229
    %v1235 = vmul.f32 %v327, %v1231
    %1240 = vrot.lane.b32.xlu0 %v1232, 96
    %v1241 = vpop.permute.xlu0 %1240
    %1242 = vrot.lane.b32.xlu0 %v1233, 96
    %v1243 = vpop.permute.xlu0 %1242
    %1244 = vrot.lane.b32.xlu0 %v1234, 96
    %v1245 = vpop.permute.xlu0 %1244
    %1246 = vrot.lane.b32.xlu0 %v1235, 96
    %v1247 = vpop.permute.xlu0 %1246
    %v1252 = vmul.f32 %v1190, %v1241
    %v1253 = vmul.f32 %v1195, %v1243
    %v1254 = vmul.f32 %v1200, %v1245
    %v1255 = vmul.f32 %v1205, %v1247
    %1257 = vrot.lane.b32.xlu0 %v406, 32
    %v1258 = vpop.permute.xlu0 %1257
    %v1260 = vmul.f32 %v327, %v1258
    %1262 = vrot.lane.b32.xlu0 %v1260, 32
    %v1263 = vpop.permute.xlu0 %1262
    %v1265 = vadd.f32 %v333, %v1263
    %1267 = vrot.lane.b32.xlu0 %v377, 32
    %v1268 = vpop.permute.xlu0 %1267
    %v1270 = vmul.f32 %v322, %v1268
    %1272 = vrot.lane.b32.xlu0 %v1270, 32
    %v1273 = vpop.permute.xlu0 %1272
    %v1275 = vadd.f32 %v1265, %v1273
    %1277 = vrot.lane.b32.xlu0 %v354, 32
    %v1278 = vpop.permute.xlu0 %1277
    %v1280 = vmul.f32 %v317, %v1278
    %1282 = vrot.lane.b32.xlu0 %v1280, 32
    %v1283 = vpop.permute.xlu0 %1282
    %v1285 = vadd.f32 %v1275, %v1283
    %1287 = vrot.lane.b32.xlu0 %v337, 32
    %v1288 = vpop.permute.xlu0 %1287
    %v1290 = vmul.f32 %v312, %v1288
    %1292 = vrot.lane.b32.xlu0 %v1290, 32
    %v1293 = vpop.permute.xlu0 %1292
    %v1295 = vadd.f32 %v1285, %v1293
    %v1296 = vxor.u32 %v1295, 2147483648
    %v1297 = vmul.f32 %v1296, 1.442695
    %v1298 = vpow.pop %v1297
    %v1299 = vadd.f32 %v1298, 1.0
    %v1300 = vrcp.pop %v1299
    %v1301 = vmul.f32 1.0, %v1300
    %v1302 = vmul.f32 %v1295, %v1301
    %v1303 = vmul.f32 %v327, %v1268
    %1305 = vrot.lane.b32.xlu0 %v1303, 32
    %v1306 = vpop.permute.xlu0 %1305
    %v1308 = vadd.f32 %v333, %v1306
    %v1309 = vmul.f32 %v322, %v1278
    %1311 = vrot.lane.b32.xlu0 %v1309, 32
    %v1312 = vpop.permute.xlu0 %1311
    %v1314 = vadd.f32 %v1308, %v1312
    %v1315 = vmul.f32 %v317, %v1288
    %1317 = vrot.lane.b32.xlu0 %v1315, 32
    %v1318 = vpop.permute.xlu0 %1317
    %v1320 = vadd.f32 %v1314, %v1318
    %v1321 = vxor.u32 %v1320, 2147483648
    %v1322 = vmul.f32 %v1321, 1.442695
    %v1323 = vpow.pop %v1322
    %v1324 = vadd.f32 %v1323, 1.0
    %v1325 = vrcp.pop %v1324
    %v1326 = vmul.f32 1.0, %v1325
    %v1327 = vmul.f32 %v1320, %v1326
    %v1328 = vmul.f32 %v327, %v1278
    %1330 = vrot.lane.b32.xlu0 %v1328, 32
    %v1331 = vpop.permute.xlu0 %1330
    %v1333 = vadd.f32 %v333, %v1331
    %v1334 = vmul.f32 %v322, %v1288
    %1336 = vrot.lane.b32.xlu0 %v1334, 32
    %v1337 = vpop.permute.xlu0 %1336
    %v1339 = vadd.f32 %v1333, %v1337
    %v1340 = vxor.u32 %v1339, 2147483648
    %v1341 = vmul.f32 %v1340, 1.442695
    %v1342 = vpow.pop %v1341
    %v1343 = vadd.f32 %v1342, 1.0
    %v1344 = vrcp.pop %v1343
    %v1345 = vmul.f32 1.0, %v1344
    %v1346 = vmul.f32 %v1339, %v1345
    %v1347 = vmul.f32 %v327, %v1288
    %1349 = vrot.lane.b32.xlu0 %v1347, 32
    %v1350 = vpop.permute.xlu0 %1349
    %v1352 = vadd.f32 %v333, %v1350
    %v1353 = vxor.u32 %v1352, 2147483648
    %v1354 = vmul.f32 %v1353, 1.442695
    %v1355 = vpow.pop %v1354
    %v1356 = vadd.f32 %v1355, 1.0
    %v1357 = vrcp.pop %v1356
    %v1358 = vmul.f32 1.0, %v1357
    %v1359 = vmul.f32 %v1352, %v1358
    %1364 = vrot.lane.b32.xlu0 %v1302, 32
    %v1365 = vpop.permute.xlu0 %1364
    %1366 = vrot.lane.b32.xlu0 %v1327, 32
    %v1367 = vpop.permute.xlu0 %1366
    %1368 = vrot.lane.b32.xlu0 %v1346, 32
    %v1369 = vpop.permute.xlu0 %1368
    %1370 = vrot.lane.b32.xlu0 %v1359, 32
    %v1371 = vpop.permute.xlu0 %1370
    %v1372 = vsel %vm232, %v1365, 0
    %v1374 = vsel %vm232, %v1367, 0
    %v1376 = vsel %vm232, %v1369, 0
    %v1378 = vsel %vm232, %v1371, 0
    %1380 = vmatprep.subr.mxu0 0.0
    %1381 = vmatpush1.msra.mxu0 0.0
    %1382 = vmatprep.subr.mxu0 0.0
    %1383 = vmatpush1.msra.mxu0 0.0
    %1384 = vmatprep.subr.mxu0 0.0
    %1385 = vmatpush1.msra.mxu0 0.0
    %1386 = vmatprep.subr.mxu0 0.0
    %1387 = vmatpush1.msra.mxu0 0.0
    %1388 = vmatprep.subr.mxu0 0.0
    %1389 = vmatpush1.msra.mxu0 0.0
    %1390 = vmatprep.subr.mxu0 0.0
    %1391 = vmatpush1.msra.mxu0 0.0
    %1392 = vmatprep.subr.mxu0 0.0
    %1393 = vmatpush1.msra.mxu0 0.0
    %1394 = vmatprep.subr.mxu0 0.0
    %1395 = vmatpush1.msra.mxu0 0.0
    %1396 = vmatprep.subr.mxu0 0.0
    %1397 = vmatpush1.msra.mxu0 0.0
    %1398 = vmatprep.subr.mxu0 0.0
    %1399 = vmatpush1.msra.mxu0 0.0
    %1400 = vmatprep.subr.mxu0 0.0
    %1401 = vmatpush1.msra.mxu0 0.0
    %1402 = vmatprep.subr.mxu0 0.0
    %1403 = vmatpush1.msra.mxu0 0.0
    %1404 = vmatprep.subr.mxu0 0.0
    %1405 = vmatpush1.msra.mxu0 %v219
    %1406 = vmatprep.subr.mxu0 0.0
    %1407 = vmatpush1.msra.mxu0 %v218
    %1408 = vmatprep.subr.mxu0 0.0
    %1409 = vmatpush1.msra.mxu0 %v217
    %1410 = vmatprep.subr.mxu0 0.0
    %1411 = vmatpush1.msra.mxu0 %v216
    %1412 = vmatprep.subr.mxu0 0.0
    %1413 = vmatpush2.msra.mxu0 0.0
    %1414 = vmatprep.subr.mxu0 0.0
    %1415 = vmatpush2.msra.mxu0 0.0
    %1416 = vmatprep.subr.mxu0 0.0
    %1417 = vmatpush2.msra.mxu0 0.0
    %1418 = vmatprep.subr.mxu0 0.0
    %1419 = vmatpush2.msra.mxu0 0.0
    %1420 = vmatprep.subr.mxu0 0.0
    %1421 = vmatpush2.msra.mxu0 0.0
    %1422 = vmatprep.subr.mxu0 0.0
    %1423 = vmatpush2.msra.mxu0 0.0
    %1424 = vmatprep.subr.mxu0 0.0
    %1425 = vmatpush2.msra.mxu0 0.0
    %1426 = vmatprep.subr.mxu0 0.0
    %1427 = vmatpush2.msra.mxu0 0.0
    %1428 = vmatprep.subr.mxu0 0.0
    %1429 = vmatpush2.msra.mxu0 0.0
    %1430 = vmatprep.subr.mxu0 0.0
    %1431 = vmatpush2.msra.mxu0 0.0
    %1432 = vmatprep.subr.mxu0 0.0
    %1433 = vmatpush2.msra.mxu0 0.0
    %1434 = vmatprep.subr.mxu0 0.0
    %1435 = vmatpush2.msra.mxu0 0.0
    %1436 = vmatprep.subr.mxu0 0.0
    %1437 = vmatpush2.msra.mxu0 0.0
    %1438 = vmatprep.subr.mxu0 0.0
    %1439 = vmatpush2.msra.mxu0 0.0
    %1440 = vmatprep.subr.mxu0 0.0
    %1441 = vmatpush2.msra.mxu0 0.0
    %1442 = vmatprep.subr.mxu0 0.0
    %1443 = vmatpush2.msra.mxu0 0.0
    %1444 = vmatprep.mubr.f32.mxu0 0.0
    %1445 = vmatmul.mubr.f32.gmra.mxu0 %v1372
    %v1446 = vpop.f32.mrf.mxu0
    %v1447 = vadd.f32 0.0, %v1446
    %v1448 = vpop.f32.mrf.mxu0
    %1449 = vmatprep.mubr.f32.mxu0 0.0
    %1450 = vmatmul.mubr.f32.gmra.mxu0 %v1374
    %v1451 = vpop.f32.mrf.mxu0
    %v1452 = vadd.f32 0.0, %v1451
    %v1453 = vpop.f32.mrf.mxu0
    %1454 = vmatprep.mubr.f32.mxu0 0.0
    %1455 = vmatmul.mubr.f32.gmra.mxu0 %v1376
    %v1456 = vpop.f32.mrf.mxu0
    %v1457 = vadd.f32 0.0, %v1456
    %v1458 = vpop.f32.mrf.mxu0
    %1459 = vmatprep.mubr.f32.mxu0 0.0
    %1460 = vmatmul.mubr.f32.gmra.mxu0 %v1378
    %v1461 = vpop.f32.mrf.mxu0
    %v1462 = vadd.f32 0.0, %v1461
    %v1463 = vpop.f32.mrf.mxu0
    %1464 = vdwg.mxu0
    %1466 = vrot.lane.b32.xlu0 %v546, 96
    %v1467 = vpop.permute.xlu0 %1466
    %v1469 = vadd.f32 %v1447, %v1467
    %v1470 = vadd.f32 %v1452, %v1467
    %v1471 = vadd.f32 %v1457, %v1467
    %v1472 = vadd.f32 %v1462, %v1467
    %v1473 = vmax.f32 %v1469, 0.0
    %v1474 = vmax.f32 %v1470, 0.0
    %v1475 = vmax.f32 %v1471, 0.0
    %v1476 = vmax.f32 %v1472, 0.0
    %v1477 = vand.u32 2147483647, %v1469
    %v1478 = vand.u32 2147483647, %v1470
    %v1479 = vand.u32 2147483647, %v1471
    %v1480 = vand.u32 2147483647, %v1472
    %v1481 = vsub.f32 0.0, %v1477
    %v1482 = vsub.f32 0.0, %v1478
    %v1483 = vsub.f32 0.0, %v1479
    %v1484 = vsub.f32 0.0, %v1480
    %v1485 = vmul.f32 %v1481, 1.442695
    %v1486 = vpow.pop %v1485
    %v1487 = vmul.f32 %v1482, 1.442695
    %v1488 = vpow.pop %v1487
    %v1489 = vmul.f32 %v1483, 1.442695
    %v1490 = vpow.pop %v1489
    %v1491 = vmul.f32 %v1484, 1.442695
    %v1492 = vpow.pop %v1491
    %v1493 = vadd.f32 %v1486, 1.0
    %v1494 = vlog2.pop %v1493
    %v1495 = vmul.f32 %v1494, 0.6931472
    %v1496 = vmul.f32 -0.5, %v1486
    %v1497 = vadd.f32 %v1496, 1.0
    %v1498 = vmul.f32 %v1497, %v1486
    %v1499 = vand.u32 2147483647, %v1486
    %vm1500 = vcmp.lt.f32.partialorder %v1499, 0.0004427343
    %v1501 = vsel %vm1500, %v1498, %v1495
    %v1502 = vadd.f32 %v1488, 1.0
    %v1503 = vlog2.pop %v1502
    %v1504 = vmul.f32 %v1503, 0.6931472
    %v1505 = vmul.f32 -0.5, %v1488
    %v1506 = vadd.f32 %v1505, 1.0
    %v1507 = vmul.f32 %v1506, %v1488
    %v1508 = vand.u32 2147483647, %v1488
    %vm1509 = vcmp.lt.f32.partialorder %v1508, 0.0004427343
    %v1510 = vsel %vm1509, %v1507, %v1504
    %v1511 = vadd.f32 %v1490, 1.0
    %v1512 = vlog2.pop %v1511
    %v1513 = vmul.f32 %v1512, 0.6931472
    %v1514 = vmul.f32 -0.5, %v1490
    %v1515 = vadd.f32 %v1514, 1.0
    %v1516 = vmul.f32 %v1515, %v1490
    %v1517 = vand.u32 2147483647, %v1490
    %vm1518 = vcmp.lt.f32.partialorder %v1517, 0.0004427343
    %v1519 = vsel %vm1518, %v1516, %v1513
    %v1520 = vadd.f32 %v1492, 1.0
    %v1521 = vlog2.pop %v1520
    %v1522 = vmul.f32 %v1521, 0.6931472
    %v1523 = vmul.f32 -0.5, %v1492
    %v1524 = vadd.f32 %v1523, 1.0
    %v1525 = vmul.f32 %v1524, %v1492
    %v1526 = vand.u32 2147483647, %v1492
    %vm1527 = vcmp.lt.f32.partialorder %v1526, 0.0004427343
    %v1528 = vsel %vm1527, %v1525, %v1522
    %v1529 = vadd.f32 %v1473, %v1501
    %v1530 = vadd.f32 %v1474, %v1510
    %v1531 = vadd.f32 %v1475, %v1519
    %v1532 = vadd.f32 %v1476, %v1528
    %v1534 = vsel %vm232, %v1529, 0
    %v1537 = vsel %vm232, %v1530, 0
    %v1540 = vsel %vm232, %v1531, 0
    %v1543 = vsel %vm232, %v1532, 0
    %1545 = vmatprep.subr.mxu0 0.0
    %1546 = vmatpush1.msra.mxu0 0.0
    %1547 = vmatprep.subr.mxu0 0.0
    %1548 = vmatpush1.msra.mxu0 0.0
    %1549 = vmatprep.subr.mxu0 0.0
    %1550 = vmatpush1.msra.mxu0 0.0
    %1551 = vmatprep.subr.mxu0 0.0
    %1552 = vmatpush1.msra.mxu0 0.0
    %1553 = vmatprep.subr.mxu0 0.0
    %1554 = vmatpush1.msra.mxu0 0.0
    %1555 = vmatprep.subr.mxu0 0.0
    %1556 = vmatpush1.msra.mxu0 0.0
    %1557 = vmatprep.subr.mxu0 0.0
    %1558 = vmatpush1.msra.mxu0 0.0
    %1559 = vmatprep.subr.mxu0 0.0
    %1560 = vmatpush1.msra.mxu0 0.0
    %1561 = vmatprep.subr.mxu0 0.0
    %1562 = vmatpush1.msra.mxu0 0.0
    %1563 = vmatprep.subr.mxu0 0.0
    %1564 = vmatpush1.msra.mxu0 0.0
    %1565 = vmatprep.subr.mxu0 0.0
    %1566 = vmatpush1.msra.mxu0 0.0
    %1567 = vmatprep.subr.mxu0 0.0
    %1568 = vmatpush1.msra.mxu0 0.0
    %1569 = vmatprep.subr.mxu0 %v52
    %1570 = vmatpush1.msra.mxu0 %v51
    %1571 = vmatprep.subr.mxu0 %v50
    %1572 = vmatpush1.msra.mxu0 %v49
    %1573 = vmatprep.subr.mxu0 %v48
    %1574 = vmatpush1.msra.mxu0 %v47
    %1575 = vmatprep.subr.mxu0 %v46
    %1576 = vmatpush1.msra.mxu0 %v45
    %1577 = vmatprep.subr.mxu0 0.0
    %1578 = vmatpush2.msra.mxu0 0.0
    %1579 = vmatprep.subr.mxu0 0.0
    %1580 = vmatpush2.msra.mxu0 0.0
    %1581 = vmatprep.subr.mxu0 0.0
    %1582 = vmatpush2.msra.mxu0 0.0
    %1583 = vmatprep.subr.mxu0 0.0
    %1584 = vmatpush2.msra.mxu0 0.0
    %1585 = vmatprep.subr.mxu0 0.0
    %1586 = vmatpush2.msra.mxu0 0.0
    %1587 = vmatprep.subr.mxu0 0.0
    %1588 = vmatpush2.msra.mxu0 0.0
    %1589 = vmatprep.subr.mxu0 0.0
    %1590 = vmatpush2.msra.mxu0 0.0
    %1591 = vmatprep.subr.mxu0 0.0
    %1592 = vmatpush2.msra.mxu0 0.0
    %1593 = vmatprep.subr.mxu0 0.0
    %1594 = vmatpush2.msra.mxu0 0.0
    %1595 = vmatprep.subr.mxu0 0.0
    %1596 = vmatpush2.msra.mxu0 0.0
    %1597 = vmatprep.subr.mxu0 0.0
    %1598 = vmatpush2.msra.mxu0 0.0
    %1599 = vmatprep.subr.mxu0 0.0
    %1600 = vmatpush2.msra.mxu0 0.0
    %1601 = vmatprep.subr.mxu0 0.0
    %1602 = vmatpush2.msra.mxu0 0.0
    %1603 = vmatprep.subr.mxu0 0.0
    %1604 = vmatpush2.msra.mxu0 0.0
    %1605 = vmatprep.subr.mxu0 0.0
    %1606 = vmatpush2.msra.mxu0 0.0
    %1607 = vmatprep.subr.mxu0 0.0
    %1608 = vmatpush2.msra.mxu0 0.0
    %1609 = vmatprep.mubr.f32.mxu0 0.0
    %1610 = vmatmul.mubr.f32.gmra.mxu0 %v1534
    %v1611 = vpop.f32.mrf.mxu0
    %v1612 = vadd.f32 0.0, %v1611
    %v1613 = vpop.f32.mrf.mxu0
    %v1614 = vadd.f32 0.0, %v1613
    %1615 = vmatprep.mubr.f32.mxu0 0.0
    %1616 = vmatmul.mubr.f32.gmra.mxu0 %v1537
    %v1617 = vpop.f32.mrf.mxu0
    %v1618 = vadd.f32 0.0, %v1617
    %v1619 = vpop.f32.mrf.mxu0
    %v1620 = vadd.f32 0.0, %v1619
    %1621 = vmatprep.mubr.f32.mxu0 0.0
    %1622 = vmatmul.mubr.f32.gmra.mxu0 %v1540
    %v1623 = vpop.f32.mrf.mxu0
    %v1624 = vadd.f32 0.0, %v1623
    %v1625 = vpop.f32.mrf.mxu0
    %v1626 = vadd.f32 0.0, %v1625
    %1627 = vmatprep.mubr.f32.mxu0 0.0
    %1628 = vmatmul.mubr.f32.gmra.mxu0 %v1543
    %v1629 = vpop.f32.mrf.mxu0
    %v1630 = vadd.f32 0.0, %v1629
    %v1631 = vpop.f32.mrf.mxu0
    %v1632 = vadd.f32 0.0, %v1631
    %1633 = vdwg.mxu0
    %v1638 = vmul.f32 %v1529, %v1365
    %v1639 = vmul.f32 %v1530, %v1367
    %v1640 = vmul.f32 %v1531, %v1369
    %v1641 = vmul.f32 %v1532, %v1371
    %v1643 = vsel %vm232, %v1638, 0
    %v1646 = vsel %vm232, %v1639, 0
    %v1649 = vsel %vm232, %v1640, 0
    %v1652 = vsel %vm232, %v1641, 0
    %1654 = vmatprep.subr.mxu0 0.0
    %1655 = vmatpush1.msra.mxu0 0.0
    %1656 = vmatprep.subr.mxu0 0.0
    %1657 = vmatpush1.msra.mxu0 0.0
    %1658 = vmatprep.subr.mxu0 0.0
    %1659 = vmatpush1.msra.mxu0 0.0
    %1660 = vmatprep.subr.mxu0 0.0
    %1661 = vmatpush1.msra.mxu0 0.0
    %1662 = vmatprep.subr.mxu0 0.0
    %1663 = vmatpush1.msra.mxu0 0.0
    %1664 = vmatprep.subr.mxu0 0.0
    %1665 = vmatpush1.msra.mxu0 0.0
    %1666 = vmatprep.subr.mxu0 0.0
    %1667 = vmatpush1.msra.mxu0 0.0
    %1668 = vmatprep.subr.mxu0 0.0
    %1669 = vmatpush1.msra.mxu0 0.0
    %1670 = vmatprep.subr.mxu0 0.0
    %1671 = vmatpush1.msra.mxu0 0.0
    %1672 = vmatprep.subr.mxu0 0.0
    %1673 = vmatpush1.msra.mxu0 0.0
    %1674 = vmatprep.subr.mxu0 0.0
    %1675 = vmatpush1.msra.mxu0 0.0
    %1676 = vmatprep.subr.mxu0 0.0
    %1677 = vmatpush1.msra.mxu0 0.0
    %1678 = vmatprep.subr.mxu0 %v52
    %1679 = vmatpush1.msra.mxu0 %v51
    %1680 = vmatprep.subr.mxu0 %v50
    %1681 = vmatpush1.msra.mxu0 %v49
    %1682 = vmatprep.subr.mxu0 %v48
    %1683 = vmatpush1.msra.mxu0 %v47
    %1684 = vmatprep.subr.mxu0 %v46
    %1685 = vmatpush1.msra.mxu0 %v45
    %1686 = vmatprep.subr.mxu0 0.0
    %1687 = vmatpush2.msra.mxu0 0.0
    %1688 = vmatprep.subr.mxu0 0.0
    %1689 = vmatpush2.msra.mxu0 0.0
    %1690 = vmatprep.subr.mxu0 0.0
    %1691 = vmatpush2.msra.mxu0 0.0
    %1692 = vmatprep.subr.mxu0 0.0
    %1693 = vmatpush2.msra.mxu0 0.0
    %1694 = vmatprep.subr.mxu0 0.0
    %1695 = vmatpush2.msra.mxu0 0.0
    %1696 = vmatprep.subr.mxu0 0.0
    %1697 = vmatpush2.msra.mxu0 0.0
    %1698 = vmatprep.subr.mxu0 0.0
    %1699 = vmatpush2.msra.mxu0 0.0
    %1700 = vmatprep.subr.mxu0 0.0
    %1701 = vmatpush2.msra.mxu0 0.0
    %1702 = vmatprep.subr.mxu0 0.0
    %1703 = vmatpush2.msra.mxu0 0.0
    %1704 = vmatprep.subr.mxu0 0.0
    %1705 = vmatpush2.msra.mxu0 0.0
    %1706 = vmatprep.subr.mxu0 0.0
    %1707 = vmatpush2.msra.mxu0 0.0
    %1708 = vmatprep.subr.mxu0 0.0
    %1709 = vmatpush2.msra.mxu0 0.0
    %1710 = vmatprep.subr.mxu0 0.0
    %1711 = vmatpush2.msra.mxu0 0.0
    %1712 = vmatprep.subr.mxu0 0.0
    %1713 = vmatpush2.msra.mxu0 0.0
    %1714 = vmatprep.subr.mxu0 0.0
    %1715 = vmatpush2.msra.mxu0 0.0
    %1716 = vmatprep.subr.mxu0 0.0
    %1717 = vmatpush2.msra.mxu0 0.0
    %1718 = vmatprep.mubr.f32.mxu0 0.0
    %1719 = vmatmul.mubr.f32.gmra.mxu0 %v1643
    %v1720 = vpop.f32.mrf.mxu0
    %v1721 = vadd.f32 0.0, %v1720
    %v1722 = vpop.f32.mrf.mxu0
    %v1723 = vadd.f32 0.0, %v1722
    %1724 = vmatprep.mubr.f32.mxu0 0.0
    %1725 = vmatmul.mubr.f32.gmra.mxu0 %v1646
    %v1726 = vpop.f32.mrf.mxu0
    %v1727 = vadd.f32 0.0, %v1726
    %v1728 = vpop.f32.mrf.mxu0
    %v1729 = vadd.f32 0.0, %v1728
    %1730 = vmatprep.mubr.f32.mxu0 0.0
    %1731 = vmatmul.mubr.f32.gmra.mxu0 %v1649
    %v1732 = vpop.f32.mrf.mxu0
    %v1733 = vadd.f32 0.0, %v1732
    %v1734 = vpop.f32.mrf.mxu0
    %v1735 = vadd.f32 0.0, %v1734
    %1736 = vmatprep.mubr.f32.mxu0 0.0
    %1737 = vmatmul.mubr.f32.gmra.mxu0 %v1652
    %v1738 = vpop.f32.mrf.mxu0
    %v1739 = vadd.f32 0.0, %v1738
    %v1740 = vpop.f32.mrf.mxu0
    %v1741 = vadd.f32 0.0, %v1740
    %1742 = vdwg.mxu0
    %1747 = vrot.lane.b32.xlu0 %v1447, 96
    %v1748 = vpop.permute.xlu0 %1747
    %1749 = vrot.lane.b32.xlu0 %v1452, 96
    %v1750 = vpop.permute.xlu0 %1749
    %1751 = vrot.lane.b32.xlu0 %v1457, 96
    %v1752 = vpop.permute.xlu0 %1751
    %1753 = vrot.lane.b32.xlu0 %v1462, 96
    %v1754 = vpop.permute.xlu0 %1753
    %v1755 = vsel %vm833, %v1748, 0
    %v1757 = vsel %vm833, %v1750, 0
    %v1759 = vsel %vm833, %v1752, 0
    %v1761 = vsel %vm833, %v1754, 0
    %1763 = vmatprep.subr.mxu0 0.0
    %1764 = vmatpush1.msra.mxu0 0.0
    %1765 = vmatprep.subr.mxu0 0.0
    %1766 = vmatpush1.msra.mxu0 0.0
    %1767 = vmatprep.subr.mxu0 0.0
    %1768 = vmatpush1.msra.mxu0 0.0
    %1769 = vmatprep.subr.mxu0 0.0
    %1770 = vmatpush1.msra.mxu0 0.0
    %1771 = vmatprep.subr.mxu0 0.0
    %1772 = vmatpush1.msra.mxu0 0.0
    %1773 = vmatprep.subr.mxu0 0.0
    %1774 = vmatpush1.msra.mxu0 0.0
    %1775 = vmatprep.subr.mxu0 0.0
    %1776 = vmatpush1.msra.mxu0 0.0
    %1777 = vmatprep.subr.mxu0 0.0
    %1778 = vmatpush1.msra.mxu0 0.0
    %1779 = vmatprep.subr.mxu0 0.0
    %1780 = vmatpush1.msra.mxu0 0.0
    %1781 = vmatprep.subr.mxu0 0.0
    %1782 = vmatpush1.msra.mxu0 0.0
    %1783 = vmatprep.subr.mxu0 0.0
    %1784 = vmatpush1.msra.mxu0 0.0
    %1785 = vmatprep.subr.mxu0 0.0
    %1786 = vmatpush1.msra.mxu0 0.0
    %1787 = vmatprep.subr.mxu0 0.0
    %1788 = vmatpush1.msra.mxu0 0.0
    %1789 = vmatprep.subr.mxu0 0.0
    %1790 = vmatpush1.msra.mxu0 0.0
    %1791 = vmatprep.subr.mxu0 0.0
    %1792 = vmatpush1.msra.mxu0 0.0
    %1793 = vmatprep.subr.mxu0 %v54
    %1794 = vmatpush1.msra.mxu0 %v53
    %1795 = vmatprep.subr.mxu0 0.0
    %1796 = vmatpush2.msra.mxu0 0.0
    %1797 = vmatprep.subr.mxu0 0.0
    %1798 = vmatpush2.msra.mxu0 0.0
    %1799 = vmatprep.subr.mxu0 0.0
    %1800 = vmatpush2.msra.mxu0 0.0
    %1801 = vmatprep.subr.mxu0 0.0
    %1802 = vmatpush2.msra.mxu0 0.0
    %1803 = vmatprep.subr.mxu0 0.0
    %1804 = vmatpush2.msra.mxu0 0.0
    %1805 = vmatprep.subr.mxu0 0.0
    %1806 = vmatpush2.msra.mxu0 0.0
    %1807 = vmatprep.subr.mxu0 0.0
    %1808 = vmatpush2.msra.mxu0 0.0
    %1809 = vmatprep.subr.mxu0 0.0
    %1810 = vmatpush2.msra.mxu0 0.0
    %1811 = vmatprep.subr.mxu0 0.0
    %1812 = vmatpush2.msra.mxu0 0.0
    %1813 = vmatprep.subr.mxu0 0.0
    %1814 = vmatpush2.msra.mxu0 0.0
    %1815 = vmatprep.subr.mxu0 0.0
    %1816 = vmatpush2.msra.mxu0 0.0
    %1817 = vmatprep.subr.mxu0 0.0
    %1818 = vmatpush2.msra.mxu0 0.0
    %1819 = vmatprep.subr.mxu0 0.0
    %1820 = vmatpush2.msra.mxu0 0.0
    %1821 = vmatprep.subr.mxu0 0.0
    %1822 = vmatpush2.msra.mxu0 0.0
    %1823 = vmatprep.subr.mxu0 0.0
    %1824 = vmatpush2.msra.mxu0 0.0
    %1825 = vmatprep.subr.mxu0 0.0
    %1826 = vmatpush2.msra.mxu0 0.0
    %1827 = vmatprep.mubr.f32.mxu0 0.0
    %1828 = vmatmul.mubr.f32.gmra.mxu0 %v1755
    %v1829 = vpop.f32.mrf.mxu0
    %v1830 = vadd.f32 0.0, %v1829
    %v1831 = vpop.f32.mrf.mxu0
    %v1832 = vadd.f32 0.0, %v1831
    %1833 = vmatprep.mubr.f32.mxu0 0.0
    %1834 = vmatmul.mubr.f32.gmra.mxu0 %v1757
    %v1835 = vpop.f32.mrf.mxu0
    %v1836 = vadd.f32 0.0, %v1835
    %v1837 = vpop.f32.mrf.mxu0
    %v1838 = vadd.f32 0.0, %v1837
    %1839 = vmatprep.mubr.f32.mxu0 0.0
    %1840 = vmatmul.mubr.f32.gmra.mxu0 %v1759
    %v1841 = vpop.f32.mrf.mxu0
    %v1842 = vadd.f32 0.0, %v1841
    %v1843 = vpop.f32.mrf.mxu0
    %v1844 = vadd.f32 0.0, %v1843
    %1845 = vmatprep.mubr.f32.mxu0 0.0
    %1846 = vmatmul.mubr.f32.gmra.mxu0 %v1761
    %v1847 = vpop.f32.mrf.mxu0
    %v1848 = vadd.f32 0.0, %v1847
    %v1849 = vpop.f32.mrf.mxu0
    %v1850 = vadd.f32 0.0, %v1849
    %1851 = vdwg.mxu0
    %1852 = vrot.lane.b32.xlu0 %v1447, 88
    %v1853 = vpop.permute.xlu0 %1852
    %1854 = vrot.lane.b32.xlu0 %v1452, 88
    %v1855 = vpop.permute.xlu0 %1854
    %1856 = vrot.lane.b32.xlu0 %v1457, 88
    %v1857 = vpop.permute.xlu0 %1856
    %1858 = vrot.lane.b32.xlu0 %v1462, 88
    %v1859 = vpop.permute.xlu0 %1858
    %v1860 = vsel %vm833, %v1853, 0
    %v1862 = vsel %vm833, %v1855, 0
    %v1864 = vsel %vm833, %v1857, 0
    %v1866 = vsel %vm833, %v1859, 0
    %1868 = vmatprep.subr.mxu0 0.0
    %1869 = vmatpush1.msra.mxu0 0.0
    %1870 = vmatprep.subr.mxu0 0.0
    %1871 = vmatpush1.msra.mxu0 0.0
    %1872 = vmatprep.subr.mxu0 0.0
    %1873 = vmatpush1.msra.mxu0 0.0
    %1874 = vmatprep.subr.mxu0 0.0
    %1875 = vmatpush1.msra.mxu0 0.0
    %1876 = vmatprep.subr.mxu0 0.0
    %1877 = vmatpush1.msra.mxu0 0.0
    %1878 = vmatprep.subr.mxu0 0.0
    %1879 = vmatpush1.msra.mxu0 0.0
    %1880 = vmatprep.subr.mxu0 0.0
    %1881 = vmatpush1.msra.mxu0 0.0
    %1882 = vmatprep.subr.mxu0 0.0
    %1883 = vmatpush1.msra.mxu0 0.0
    %1884 = vmatprep.subr.mxu0 0.0
    %1885 = vmatpush1.msra.mxu0 0.0
    %1886 = vmatprep.subr.mxu0 0.0
    %1887 = vmatpush1.msra.mxu0 0.0
    %1888 = vmatprep.subr.mxu0 0.0
    %1889 = vmatpush1.msra.mxu0 0.0
    %1890 = vmatprep.subr.mxu0 0.0
    %1891 = vmatpush1.msra.mxu0 0.0
    %1892 = vmatprep.subr.mxu0 0.0
    %1893 = vmatpush1.msra.mxu0 0.0
    %1894 = vmatprep.subr.mxu0 0.0
    %1895 = vmatpush1.msra.mxu0 0.0
    %1896 = vmatprep.subr.mxu0 0.0
    %1897 = vmatpush1.msra.mxu0 0.0
    %1898 = vmatprep.subr.mxu0 %v54
    %1899 = vmatpush1.msra.mxu0 %v53
    %1900 = vmatprep.subr.mxu0 0.0
    %1901 = vmatpush2.msra.mxu0 0.0
    %1902 = vmatprep.subr.mxu0 0.0
    %1903 = vmatpush2.msra.mxu0 0.0
    %1904 = vmatprep.subr.mxu0 0.0
    %1905 = vmatpush2.msra.mxu0 0.0
    %1906 = vmatprep.subr.mxu0 0.0
    %1907 = vmatpush2.msra.mxu0 0.0
    %1908 = vmatprep.subr.mxu0 0.0
    %1909 = vmatpush2.msra.mxu0 0.0
    %1910 = vmatprep.subr.mxu0 0.0
    %1911 = vmatpush2.msra.mxu0 0.0
    %1912 = vmatprep.subr.mxu0 0.0
    %1913 = vmatpush2.msra.mxu0 0.0
    %1914 = vmatprep.subr.mxu0 0.0
    %1915 = vmatpush2.msra.mxu0 0.0
    %1916 = vmatprep.subr.mxu0 0.0
    %1917 = vmatpush2.msra.mxu0 0.0
    %1918 = vmatprep.subr.mxu0 0.0
    %1919 = vmatpush2.msra.mxu0 0.0
    %1920 = vmatprep.subr.mxu0 0.0
    %1921 = vmatpush2.msra.mxu0 0.0
    %1922 = vmatprep.subr.mxu0 0.0
    %1923 = vmatpush2.msra.mxu0 0.0
    %1924 = vmatprep.subr.mxu0 0.0
    %1925 = vmatpush2.msra.mxu0 0.0
    %1926 = vmatprep.subr.mxu0 0.0
    %1927 = vmatpush2.msra.mxu0 0.0
    %1928 = vmatprep.subr.mxu0 0.0
    %1929 = vmatpush2.msra.mxu0 0.0
    %1930 = vmatprep.subr.mxu0 0.0
    %1931 = vmatpush2.msra.mxu0 0.0
    %1932 = vmatprep.mubr.f32.mxu0 0.0
    %1933 = vmatmul.mubr.f32.gmra.mxu0 %v1860
    %v1934 = vpop.f32.mrf.mxu0
    %v1935 = vadd.f32 0.0, %v1934
    %v1936 = vpop.f32.mrf.mxu0
    %v1937 = vadd.f32 0.0, %v1936
    %1938 = vmatprep.mubr.f32.mxu0 0.0
    %1939 = vmatmul.mubr.f32.gmra.mxu0 %v1862
    %v1940 = vpop.f32.mrf.mxu0
    %v1941 = vadd.f32 0.0, %v1940
    %v1942 = vpop.f32.mrf.mxu0
    %v1943 = vadd.f32 0.0, %v1942
    %1944 = vmatprep.mubr.f32.mxu0 0.0
    %1945 = vmatmul.mubr.f32.gmra.mxu0 %v1864
    %v1946 = vpop.f32.mrf.mxu0
    %v1947 = vadd.f32 0.0, %v1946
    %v1948 = vpop.f32.mrf.mxu0
    %v1949 = vadd.f32 0.0, %v1948
    %1950 = vmatprep.mubr.f32.mxu0 0.0
    %1951 = vmatmul.mubr.f32.gmra.mxu0 %v1866
    %v1952 = vpop.f32.mrf.mxu0
    %v1953 = vadd.f32 0.0, %v1952
    %v1954 = vpop.f32.mrf.mxu0
    %v1955 = vadd.f32 0.0, %v1954
    %1956 = vdwg.mxu0
    %v1958 = vlaneseq
    %v1959 = vshrl.u32 %v1958, 7
    %v1960 = vsub.s32 0, %v1959
    %v1961 = vrot.slane %v211, %v1960
    %v1962 = vlaneseq
    %v1963 = vshrl.u32 %v1962, 7
    %v1964 = vsub.s32 1, %v1963
    %v1965 = vrot.slane %v211, %v1964
    %v1968 = vmul.f32 %v1612, %v1961
    %v1969 = vmul.f32 %v1614, %v1965
    %v1970 = vmul.f32 %v1618, %v1961
    %v1971 = vmul.f32 %v1620, %v1965
    %v1972 = vmul.f32 %v1624, %v1961
    %v1973 = vmul.f32 %v1626, %v1965
    %v1974 = vmul.f32 %v1630, %v1961
    %v1975 = vmul.f32 %v1632, %v1965
    %v1976 = vmul.f32 %v1968, 1.442695
    %v1977 = vpow.pop %v1976
    %v1978 = vmul.f32 %v1969, 1.442695
    %v1979 = vpow.pop %v1978
    %v1980 = vmul.f32 %v1970, 1.442695
    %v1981 = vpow.pop %v1980
    %v1982 = vmul.f32 %v1971, 1.442695
    %v1983 = vpow.pop %v1982
    %v1984 = vmul.f32 %v1972, 1.442695
    %v1985 = vpow.pop %v1984
    %v1986 = vmul.f32 %v1973, 1.442695
    %v1987 = vpow.pop %v1986
    %v1988 = vmul.f32 %v1974, 1.442695
    %v1989 = vpow.pop %v1988
    %v1990 = vmul.f32 %v1975, 1.442695
    %v1991 = vpow.pop %v1990
    %v1992 = vmul.f32 %v1830, %v1721
    %v1993 = vmul.f32 %v1832, %v1723
    %v1994 = vmul.f32 %v1836, %v1727
    %v1995 = vmul.f32 %v1838, %v1729
    %v1996 = vmul.f32 %v1842, %v1733
    %v1997 = vmul.f32 %v1844, %v1735
    %v1998 = vmul.f32 %v1848, %v1739
    %v1999 = vmul.f32 %v1850, %v1741
    %v2000 = vmul.f32 %v1989, 0.0
    %v2001 = vmul.f32 %v1991, 0.0
    %v2002 = vadd.f32 %v2000, %v1998
    %v2003 = vadd.f32 %v2001, %v1999
    %v2004 = vmul.f32 %v1985, %v2002
    %v2005 = vmul.f32 %v1987, %v2003
    %v2006 = vadd.f32 %v2004, %v1996
    %v2007 = vadd.f32 %v2005, %v1997
    %v2008 = vmul.f32 %v1981, %v2006
    %v2009 = vmul.f32 %v1983, %v2007
    %v2010 = vadd.f32 %v2008, %v1994
    %v2011 = vadd.f32 %v2009, %v1995
    %v2012 = vmul.f32 %v1977, %v2010
    %v2013 = vmul.f32 %v1979, %v2011
    %v2014 = vadd.f32 %v2012, %v1992
    %v2015 = vadd.f32 %v2013, %v1993
    %v2016 = vmul.f32 %v2014, %v1935
    %v2017 = vmul.f32 %v2015, %v1937
    %v2018 = vmul.f32 %v2010, %v1941
    %v2019 = vmul.f32 %v2011, %v1943
    %v2020 = vmul.f32 %v2006, %v1947
    %v2021 = vmul.f32 %v2007, %v1949
    %v2022 = vmul.f32 %v2002, %v1953
    %v2023 = vmul.f32 %v2003, %v1955
    %v2024 = vmul.f32 %v546, %v1302
    %v2025 = vmul.f32 %v546, %v1327
    %v2026 = vmul.f32 %v546, %v1346
    %v2027 = vmul.f32 %v546, %v1359
    %2032 = vrot.lane.b32.xlu0 %v2024, 32
    %v2033 = vpop.permute.xlu0 %2032
    %2034 = vrot.lane.b32.xlu0 %v2025, 32
    %v2035 = vpop.permute.xlu0 %2034
    %2036 = vrot.lane.b32.xlu0 %v2026, 32
    %v2037 = vpop.permute.xlu0 %2036
    %2038 = vrot.lane.b32.xlu0 %v2027, 32
    %v2039 = vpop.permute.xlu0 %2038
    %2044 = vmatprep.subr.mxu0 0.0
    %2045 = vmatpush1.msra.mxu0 %v70
    %2046 = vmatprep.subr.mxu0 0.0
    %2047 = vmatpush1.msra.mxu0 %v69
    %2048 = vmatprep.subr.mxu0 0.0
    %2049 = vmatpush1.msra.mxu0 %v68
    %2050 = vmatprep.subr.mxu0 0.0
    %2051 = vmatpush1.msra.mxu0 %v67
    %2052 = vmatprep.subr.mxu0 0.0
    %2053 = vmatpush1.msra.mxu0 %v66
    %2054 = vmatprep.subr.mxu0 0.0
    %2055 = vmatpush1.msra.mxu0 %v65
    %2056 = vmatprep.subr.mxu0 0.0
    %2057 = vmatpush1.msra.mxu0 %v64
    %2058 = vmatprep.subr.mxu0 0.0
    %2059 = vmatpush1.msra.mxu0 %v63
    %2060 = vmatprep.subr.mxu0 0.0
    %2061 = vmatpush1.msra.mxu0 %v62
    %2062 = vmatprep.subr.mxu0 0.0
    %2063 = vmatpush1.msra.mxu0 %v61
    %2064 = vmatprep.subr.mxu0 0.0
    %2065 = vmatpush1.msra.mxu0 %v60
    %2066 = vmatprep.subr.mxu0 0.0
    %2067 = vmatpush1.msra.mxu0 %v59
    %2068 = vmatprep.subr.mxu0 0.0
    %2069 = vmatpush1.msra.mxu0 %v58
    %2070 = vmatprep.subr.mxu0 0.0
    %2071 = vmatpush1.msra.mxu0 %v57
    %2072 = vmatprep.subr.mxu0 0.0
    %2073 = vmatpush1.msra.mxu0 %v56
    %2074 = vmatprep.subr.mxu0 0.0
    %2075 = vmatpush1.msra.mxu0 %v55
    %2076 = vmatprep.subr.mxu0 0.0
    %2077 = vmatpush2.msra.mxu0 %v86
    %2078 = vmatprep.subr.mxu0 0.0
    %2079 = vmatpush2.msra.mxu0 %v85
    %2080 = vmatprep.subr.mxu0 0.0
    %2081 = vmatpush2.msra.mxu0 %v84
    %2082 = vmatprep.subr.mxu0 0.0
    %2083 = vmatpush2.msra.mxu0 %v83
    %2084 = vmatprep.subr.mxu0 0.0
    %2085 = vmatpush2.msra.mxu0 %v82
    %2086 = vmatprep.subr.mxu0 0.0
    %2087 = vmatpush2.msra.mxu0 %v81
    %2088 = vmatprep.subr.mxu0 0.0
    %2089 = vmatpush2.msra.mxu0 %v80
    %2090 = vmatprep.subr.mxu0 0.0
    %2091 = vmatpush2.msra.mxu0 %v79
    %2092 = vmatprep.subr.mxu0 0.0
    %2093 = vmatpush2.msra.mxu0 %v78
    %2094 = vmatprep.subr.mxu0 0.0
    %2095 = vmatpush2.msra.mxu0 %v77
    %2096 = vmatprep.subr.mxu0 0.0
    %2097 = vmatpush2.msra.mxu0 %v76
    %2098 = vmatprep.subr.mxu0 0.0
    %2099 = vmatpush2.msra.mxu0 %v75
    %2100 = vmatprep.subr.mxu0 0.0
    %2101 = vmatpush2.msra.mxu0 %v74
    %2102 = vmatprep.subr.mxu0 0.0
    %2103 = vmatpush2.msra.mxu0 %v73
    %2104 = vmatprep.subr.mxu0 0.0
    %2105 = vmatpush2.msra.mxu0 %v72
    %2106 = vmatprep.subr.mxu0 0.0
    %2107 = vmatpush2.msra.mxu0 %v71
    %2108 = vmatprep.mubr.f32.mxu0 %v2017
    %2109 = vmatmul.mubr.f32.gmra.mxu0 %v2016
    %v2110 = vpop.f32.mrf.mxu0
    %v2111 = vadd.f32 %v2033, %v2110
    %v2112 = vpop.f32.mrf.mxu0
    %2113 = vmatprep.mubr.f32.mxu0 %v2019
    %2114 = vmatmul.mubr.f32.gmra.mxu0 %v2018
    %v2115 = vpop.f32.mrf.mxu0
    %v2116 = vadd.f32 %v2035, %v2115
    %v2117 = vpop.f32.mrf.mxu0
    %2118 = vmatprep.mubr.f32.mxu0 %v2021
    %2119 = vmatmul.mubr.f32.gmra.mxu0 %v2020
    %v2120 = vpop.f32.mrf.mxu0
    %v2121 = vadd.f32 %v2037, %v2120
    %v2122 = vpop.f32.mrf.mxu0
    %2123 = vmatprep.mubr.f32.mxu0 %v2023
    %2124 = vmatmul.mubr.f32.gmra.mxu0 %v2022
    %v2125 = vpop.f32.mrf.mxu0
    %v2126 = vadd.f32 %v2039, %v2125
    %v2127 = vpop.f32.mrf.mxu0
    %2128 = vdwg.mxu0
    %2129 = vrot.lane.b32.xlu0 %v1232, 32
    %v2130 = vpop.permute.xlu0 %2129
    %2131 = vrot.lane.b32.xlu0 %v1233, 32
    %v2132 = vpop.permute.xlu0 %2131
    %2133 = vrot.lane.b32.xlu0 %v1234, 32
    %v2134 = vpop.permute.xlu0 %2133
    %2135 = vrot.lane.b32.xlu0 %v1235, 32
    %v2136 = vpop.permute.xlu0 %2135
    %v2141 = vmul.f32 %v2111, %v2130
    %v2142 = vmul.f32 %v2116, %v2132
    %v2143 = vmul.f32 %v2121, %v2134
    %v2144 = vmul.f32 %v2126, %v2136
    %2149 = vrot.lane.b32.xlu0 %v2141, 32
    %v2150 = vpop.permute.xlu0 %2149
    %2151 = vrot.lane.b32.xlu0 %v2142, 32
    %v2152 = vpop.permute.xlu0 %2151
    %2153 = vrot.lane.b32.xlu0 %v2143, 32
    %v2154 = vpop.permute.xlu0 %2153
    %2155 = vrot.lane.b32.xlu0 %v2144, 32
    %v2156 = vpop.permute.xlu0 %2155
    %v2161 = vsel %vm232, %v1252, %v2150
    %v2162 = vsel %vm232, %v1253, %v2152
    %v2163 = vsel %vm232, %v1254, %v2154
    %v2164 = vsel %vm232, %v1255, %v2156
    %v2165 = vld [vmem:[%s9] sm:$0xff]
    %v2166 = vld [vmem:[%s9 + $0x8] sm:$0xff]
    %v2167 = vld [vmem:[%s9 + $0x10] sm:$0xff]
    %v2168 = vld [vmem:[%s9 + $0x18] sm:$0xff]
    %v2169 = vld [vmem:[%s9 + $0x20] sm:$0xff]
    %v2170 = vld [vmem:[%s9 + $0x28] sm:$0xff]
    %v2171 = vld [vmem:[%s9 + $0x30] sm:$0xff]
    %v2172 = vld [vmem:[%s9 + $0x38] sm:$0xff]
    %vm2173 = vcmask 523264
    %v2175 = vsel %vm2173, %v2161, 0
    %v2178 = vsel %vm2173, %v2162, 0
    %v2181 = vsel %vm2173, %v2163, 0
    %v2184 = vsel %vm2173, %v2164, 0
    %2186 = vmatprep.subr.mxu0 0.0
    %2187 = vmatpush1.msra.mxu0 0.0
    %2188 = vmatprep.subr.mxu0 0.0
    %2189 = vmatpush1.msra.mxu0 0.0
    %2190 = vmatprep.subr.mxu0 0.0
    %2191 = vmatpush1.msra.mxu0 0.0
    %2192 = vmatprep.subr.mxu0 0.0
    %2193 = vmatpush1.msra.mxu0 0.0
    %2194 = vmatprep.subr.mxu0 0.0
    %2195 = vmatpush1.msra.mxu0 0.0
    %2196 = vmatprep.subr.mxu0 0.0
    %2197 = vmatpush1.msra.mxu0 0.0
    %2198 = vmatprep.subr.mxu0 0.0
    %2199 = vmatpush1.msra.mxu0 0.0
    %2200 = vmatprep.subr.mxu0 0.0
    %2201 = vmatpush1.msra.mxu0 0.0
    %2202 = vmatprep.subr.mxu0 0.0
    %2203 = vmatpush1.msra.mxu0 %v2172
    %2204 = vmatprep.subr.mxu0 0.0
    %2205 = vmatpush1.msra.mxu0 %v2171
    %2206 = vmatprep.subr.mxu0 0.0
    %2207 = vmatpush1.msra.mxu0 %v2170
    %2208 = vmatprep.subr.mxu0 0.0
    %2209 = vmatpush1.msra.mxu0 %v2169
    %2210 = vmatprep.subr.mxu0 0.0
    %2211 = vmatpush1.msra.mxu0 %v2168
    %2212 = vmatprep.subr.mxu0 0.0
    %2213 = vmatpush1.msra.mxu0 %v2167
    %2214 = vmatprep.subr.mxu0 0.0
    %2215 = vmatpush1.msra.mxu0 %v2166
    %2216 = vmatprep.subr.mxu0 0.0
    %2217 = vmatpush1.msra.mxu0 %v2165
    %2218 = vmatprep.subr.mxu0 0.0
    %2219 = vmatpush2.msra.mxu0 0.0
    %2220 = vmatprep.subr.mxu0 0.0
    %2221 = vmatpush2.msra.mxu0 0.0
    %2222 = vmatprep.subr.mxu0 0.0
    %2223 = vmatpush2.msra.mxu0 0.0
    %2224 = vmatprep.subr.mxu0 0.0
    %2225 = vmatpush2.msra.mxu0 0.0
    %2226 = vmatprep.subr.mxu0 0.0
    %2227 = vmatpush2.msra.mxu0 0.0
    %2228 = vmatprep.subr.mxu0 0.0
    %2229 = vmatpush2.msra.mxu0 0.0
    %2230 = vmatprep.subr.mxu0 0.0
    %2231 = vmatpush2.msra.mxu0 0.0
    %2232 = vmatprep.subr.mxu0 0.0
    %2233 = vmatpush2.msra.mxu0 0.0
    %2234 = vmatprep.subr.mxu0 0.0
    %2235 = vmatpush2.msra.mxu0 0.0
    %2236 = vmatprep.subr.mxu0 0.0
    %2237 = vmatpush2.msra.mxu0 0.0
    %2238 = vmatprep.subr.mxu0 0.0
    %2239 = vmatpush2.msra.mxu0 0.0
    %2240 = vmatprep.subr.mxu0 0.0
    %2241 = vmatpush2.msra.mxu0 0.0
    %2242 = vmatprep.subr.mxu0 0.0
    %2243 = vmatpush2.msra.mxu0 0.0
    %2244 = vmatprep.subr.mxu0 0.0
    %2245 = vmatpush2.msra.mxu0 0.0
    %2246 = vmatprep.subr.mxu0 0.0
    %2247 = vmatpush2.msra.mxu0 0.0
    %2248 = vmatprep.subr.mxu0 0.0
    %2249 = vmatpush2.msra.mxu0 0.0
    %2250 = vmatprep.mubr.f32.mxu0 0.0
    %2251 = vmatmul.mubr.f32.gmra.mxu0 %v2175
    %v2252 = vpop.f32.mrf.mxu0
    %v2253 = vadd.f32 %v204, %v2252
    %v2254 = vpop.f32.mrf.mxu0
    %2255 = vmatprep.mubr.f32.mxu0 0.0
    %2256 = vmatmul.mubr.f32.gmra.mxu0 %v2178
    %v2257 = vpop.f32.mrf.mxu0
    %v2258 = vadd.f32 %v205, %v2257
    %v2259 = vpop.f32.mrf.mxu0
    %2260 = vmatprep.mubr.f32.mxu0 0.0
    %2261 = vmatmul.mubr.f32.gmra.mxu0 %v2181
    %v2262 = vpop.f32.mrf.mxu0
    %v2263 = vadd.f32 %v206, %v2262
    %v2264 = vpop.f32.mrf.mxu0
    %2265 = vmatprep.mubr.f32.mxu0 0.0
    %2266 = vmatmul.mubr.f32.gmra.mxu0 %v2184
    %v2267 = vpop.f32.mrf.mxu0
    %v2268 = vadd.f32 %v207, %v2267
    %v2269 = vpop.f32.mrf.mxu0
    %2270 = vdwg.mxu0
    %v2271 = vsel %vm232, %v2253, 0.0
    %2272 = vadd.xlane.f32.xlu0 %v2271
    %v2273 = vpop.xlane.xlu0 %2272
    %v2274 = vsel %vm232, %v2258, 0.0
    %2275 = vadd.xlane.f32.xlu0 %v2274
    %v2276 = vpop.xlane.xlu0 %2275
    %v2277 = vsel %vm232, %v2263, 0.0
    %2278 = vadd.xlane.f32.xlu0 %v2277
    %v2279 = vpop.xlane.xlu0 %2278
    %v2280 = vsel %vm232, %v2268, 0.0
    %2281 = vadd.xlane.f32.xlu0 %v2280
    %v2282 = vpop.xlane.xlu0 %2281
    %v2283 = vrcp.pop 32.0
    %v2284 = vmul.f32 %v2273, %v2283
    %v2285 = vmul.f32 %v2276, %v2283
    %v2286 = vmul.f32 %v2279, %v2283
    %v2287 = vmul.f32 %v2282, %v2283
    %v2288 = vsub.f32 %v2253, %v2284
    %v2289 = vsub.f32 %v2258, %v2285
    %v2290 = vsub.f32 %v2263, %v2286
    %v2291 = vsub.f32 %v2268, %v2287
    %v2292 = vmul.f32 %v2288, %v2288
    %v2293 = vmul.f32 %v2289, %v2289
    %v2294 = vmul.f32 %v2290, %v2290
    %v2295 = vmul.f32 %v2291, %v2291
    %v2296 = vsel %vm232, %v2292, 0.0
    %2297 = vadd.xlane.f32.xlu0 %v2296
    %v2298 = vpop.xlane.xlu0 %2297
    %v2299 = vsel %vm232, %v2293, 0.0
    %2300 = vadd.xlane.f32.xlu0 %v2299
    %v2301 = vpop.xlane.xlu0 %2300
    %v2302 = vsel %vm232, %v2294, 0.0
    %2303 = vadd.xlane.f32.xlu0 %v2302
    %v2304 = vpop.xlane.xlu0 %2303
    %v2305 = vsel %vm232, %v2295, 0.0
    %2306 = vadd.xlane.f32.xlu0 %v2305
    %v2307 = vpop.xlane.xlu0 %2306
    %v2308 = vmul.f32 %v2298, %v2283
    %v2309 = vmul.f32 %v2301, %v2283
    %v2310 = vmul.f32 %v2304, %v2283
    %v2311 = vmul.f32 %v2307, %v2283
    %v2312 = vadd.f32 %v2308, 1e-05
    %v2313 = vadd.f32 %v2309, 1e-05
    %v2314 = vadd.f32 %v2310, 1e-05
    %v2315 = vadd.f32 %v2311, 1e-05
    %v2316 = vrsqrt.pop %v2312
    %v2317 = vrsqrt.pop %v2313
    %v2318 = vrsqrt.pop %v2314
    %v2319 = vrsqrt.pop %v2315
    %v2320 = vmul.f32 %v2288, %v2316
    %v2321 = vmul.f32 %v2289, %v2317
    %v2322 = vmul.f32 %v2290, %v2318
    %v2323 = vmul.f32 %v2291, %v2319
    %v2324 = vlaneseq
    %v2325 = vshrl.u32 %v2324, 7
    %v2326 = vsub.s32 0, %v2325
    %v2327 = vrot.slane %v208, %v2326
    %v2328 = vmul.f32 %v2320, %v2327
    %v2329 = vmul.f32 %v2321, %v2327
    %v2330 = vmul.f32 %v2322, %v2327
    %v2331 = vmul.f32 %v2323, %v2327
    %2333 = vrot.lane.b32.xlu0 %v2327, 96
    %v2334 = vpop.permute.xlu0 %2333
    %v2336 = vadd.f32 %v2328, %v2334
    %v2337 = vadd.f32 %v2329, %v2334
    %v2338 = vadd.f32 %v2330, %v2334
    %v2339 = vadd.f32 %v2331, %v2334
    %v2341 = vsel %vm232, %v2336, 0
    %v2344 = vsel %vm232, %v2337, 0
    %v2347 = vsel %vm232, %v2338, 0
    %v2350 = vsel %vm232, %v2339, 0
    %2352 = vmatprep.subr.mxu0 0.0
    %2353 = vmatpush1.msra.mxu0 0.0
    %2354 = vmatprep.subr.mxu0 0.0
    %2355 = vmatpush1.msra.mxu0 0.0
    %2356 = vmatprep.subr.mxu0 0.0
    %2357 = vmatpush1.msra.mxu0 0.0
    %2358 = vmatprep.subr.mxu0 0.0
    %2359 = vmatpush1.msra.mxu0 0.0
    %2360 = vmatprep.subr.mxu0 0.0
    %2361 = vmatpush1.msra.mxu0 0.0
    %2362 = vmatprep.subr.mxu0 0.0
    %2363 = vmatpush1.msra.mxu0 0.0
    %2364 = vmatprep.subr.mxu0 0.0
    %2365 = vmatpush1.msra.mxu0 0.0
    %2366 = vmatprep.subr.mxu0 0.0
    %2367 = vmatpush1.msra.mxu0 0.0
    %2368 = vmatprep.subr.mxu0 0.0
    %2369 = vmatpush1.msra.mxu0 0.0
    %2370 = vmatprep.subr.mxu0 0.0
    %2371 = vmatpush1.msra.mxu0 0.0
    %2372 = vmatprep.subr.mxu0 0.0
    %2373 = vmatpush1.msra.mxu0 0.0
    %2374 = vmatprep.subr.mxu0 0.0
    %2375 = vmatpush1.msra.mxu0 0.0
    %2376 = vmatprep.subr.mxu0 0.0
    %2377 = vmatpush1.msra.mxu0 %v223
    %2378 = vmatprep.subr.mxu0 0.0
    %2379 = vmatpush1.msra.mxu0 %v222
    %2380 = vmatprep.subr.mxu0 0.0
    %2381 = vmatpush1.msra.mxu0 %v221
    %2382 = vmatprep.subr.mxu0 0.0
    %2383 = vmatpush1.msra.mxu0 %v220
    %2384 = vmatprep.subr.mxu0 0.0
    %2385 = vmatpush2.msra.mxu0 0.0
    %2386 = vmatprep.subr.mxu0 0.0
    %2387 = vmatpush2.msra.mxu0 0.0
    %2388 = vmatprep.subr.mxu0 0.0
    %2389 = vmatpush2.msra.mxu0 0.0
    %2390 = vmatprep.subr.mxu0 0.0
    %2391 = vmatpush2.msra.mxu0 0.0
    %2392 = vmatprep.subr.mxu0 0.0
    %2393 = vmatpush2.msra.mxu0 0.0
    %2394 = vmatprep.subr.mxu0 0.0
    %2395 = vmatpush2.msra.mxu0 0.0
    %2396 = vmatprep.subr.mxu0 0.0
    %2397 = vmatpush2.msra.mxu0 0.0
    %2398 = vmatprep.subr.mxu0 0.0
    %2399 = vmatpush2.msra.mxu0 0.0
    %2400 = vmatprep.subr.mxu0 0.0
    %2401 = vmatpush2.msra.mxu0 0.0
    %2402 = vmatprep.subr.mxu0 0.0
    %2403 = vmatpush2.msra.mxu0 0.0
    %2404 = vmatprep.subr.mxu0 0.0
    %2405 = vmatpush2.msra.mxu0 0.0
    %2406 = vmatprep.subr.mxu0 0.0
    %2407 = vmatpush2.msra.mxu0 0.0
    %2408 = vmatprep.subr.mxu0 0.0
    %2409 = vmatpush2.msra.mxu0 0.0
    %2410 = vmatprep.subr.mxu0 0.0
    %2411 = vmatpush2.msra.mxu0 0.0
    %2412 = vmatprep.subr.mxu0 0.0
    %2413 = vmatpush2.msra.mxu0 0.0
    %2414 = vmatprep.subr.mxu0 0.0
    %2415 = vmatpush2.msra.mxu0 0.0
    %2416 = vmatprep.mubr.f32.mxu0 0.0
    %2417 = vmatmul.mubr.f32.gmra.mxu0 %v2341
    %v2418 = vpop.f32.mrf.mxu0
    %v2419 = vadd.f32 %v333, %v2418
    %v2420 = vpop.f32.mrf.mxu0
    %2421 = vmatprep.mubr.f32.mxu0 0.0
    %2422 = vmatmul.mubr.f32.gmra.mxu0 %v2344
    %v2423 = vpop.f32.mrf.mxu0
    %v2424 = vadd.f32 %v333, %v2423
    %v2425 = vpop.f32.mrf.mxu0
    %2426 = vmatprep.mubr.f32.mxu0 0.0
    %2427 = vmatmul.mubr.f32.gmra.mxu0 %v2347
    %v2428 = vpop.f32.mrf.mxu0
    %v2429 = vadd.f32 %v333, %v2428
    %v2430 = vpop.f32.mrf.mxu0
    %2431 = vmatprep.mubr.f32.mxu0 0.0
    %2432 = vmatmul.mubr.f32.gmra.mxu0 %v2350
    %v2433 = vpop.f32.mrf.mxu0
    %v2434 = vadd.f32 %v333, %v2433
    %v2435 = vpop.f32.mrf.mxu0
    %2436 = vdwg.mxu0
    %v2437 = vmax.f32 %v2419, 0.0
    %v2438 = vmax.f32 %v2424, 0.0
    %v2439 = vmax.f32 %v2429, 0.0
    %v2440 = vmax.f32 %v2434, 0.0
    %2442 = vrot.lane.b32.xlu0 %v333, 96
    %v2443 = vpop.permute.xlu0 %2442
    %v2446 = vsel %vm232, %v2437, 0
    %v2449 = vsel %vm232, %v2438, 0
    %v2452 = vsel %vm232, %v2439, 0
    %v2455 = vsel %vm232, %v2440, 0
    %2457 = vmatprep.subr.mxu0 0.0
    %2458 = vmatpush1.msra.mxu0 0.0
    %2459 = vmatprep.subr.mxu0 0.0
    %2460 = vmatpush1.msra.mxu0 0.0
    %2461 = vmatprep.subr.mxu0 0.0
    %2462 = vmatpush1.msra.mxu0 0.0
    %2463 = vmatprep.subr.mxu0 0.0
    %2464 = vmatpush1.msra.mxu0 0.0
    %2465 = vmatprep.subr.mxu0 0.0
    %2466 = vmatpush1.msra.mxu0 0.0
    %2467 = vmatprep.subr.mxu0 0.0
    %2468 = vmatpush1.msra.mxu0 0.0
    %2469 = vmatprep.subr.mxu0 0.0
    %2470 = vmatpush1.msra.mxu0 0.0
    %2471 = vmatprep.subr.mxu0 0.0
    %2472 = vmatpush1.msra.mxu0 0.0
    %2473 = vmatprep.subr.mxu0 0.0
    %2474 = vmatpush1.msra.mxu0 0.0
    %2475 = vmatprep.subr.mxu0 0.0
    %2476 = vmatpush1.msra.mxu0 0.0
    %2477 = vmatprep.subr.mxu0 0.0
    %2478 = vmatpush1.msra.mxu0 0.0
    %2479 = vmatprep.subr.mxu0 0.0
    %2480 = vmatpush1.msra.mxu0 0.0
    %2481 = vmatprep.subr.mxu0 0.0
    %2482 = vmatpush1.msra.mxu0 %v227
    %2483 = vmatprep.subr.mxu0 0.0
    %2484 = vmatpush1.msra.mxu0 %v226
    %2485 = vmatprep.subr.mxu0 0.0
    %2486 = vmatpush1.msra.mxu0 %v225
    %2487 = vmatprep.subr.mxu0 0.0
    %2488 = vmatpush1.msra.mxu0 %v224
    %2489 = vmatprep.subr.mxu0 0.0
    %2490 = vmatpush2.msra.mxu0 0.0
    %2491 = vmatprep.subr.mxu0 0.0
    %2492 = vmatpush2.msra.mxu0 0.0
    %2493 = vmatprep.subr.mxu0 0.0
    %2494 = vmatpush2.msra.mxu0 0.0
    %2495 = vmatprep.subr.mxu0 0.0
    %2496 = vmatpush2.msra.mxu0 0.0
    %2497 = vmatprep.subr.mxu0 0.0
    %2498 = vmatpush2.msra.mxu0 0.0
    %2499 = vmatprep.subr.mxu0 0.0
    %2500 = vmatpush2.msra.mxu0 0.0
    %2501 = vmatprep.subr.mxu0 0.0
    %2502 = vmatpush2.msra.mxu0 0.0
    %2503 = vmatprep.subr.mxu0 0.0
    %2504 = vmatpush2.msra.mxu0 0.0
    %2505 = vmatprep.subr.mxu0 0.0
    %2506 = vmatpush2.msra.mxu0 0.0
    %2507 = vmatprep.subr.mxu0 0.0
    %2508 = vmatpush2.msra.mxu0 0.0
    %2509 = vmatprep.subr.mxu0 0.0
    %2510 = vmatpush2.msra.mxu0 0.0
    %2511 = vmatprep.subr.mxu0 0.0
    %2512 = vmatpush2.msra.mxu0 0.0
    %2513 = vmatprep.subr.mxu0 0.0
    %2514 = vmatpush2.msra.mxu0 0.0
    %2515 = vmatprep.subr.mxu0 0.0
    %2516 = vmatpush2.msra.mxu0 0.0
    %2517 = vmatprep.subr.mxu0 0.0
    %2518 = vmatpush2.msra.mxu0 0.0
    %2519 = vmatprep.subr.mxu0 0.0
    %2520 = vmatpush2.msra.mxu0 0.0
    %2521 = vmatprep.mubr.f32.mxu0 0.0
    %2522 = vmatmul.mubr.f32.gmra.mxu0 %v2446
    %v2523 = vpop.f32.mrf.mxu0
    %v2524 = vadd.f32 %v2443, %v2523
    %v2525 = vpop.f32.mrf.mxu0
    %2526 = vmatprep.mubr.f32.mxu0 0.0
    %2527 = vmatmul.mubr.f32.gmra.mxu0 %v2449
    %v2528 = vpop.f32.mrf.mxu0
    %v2529 = vadd.f32 %v2443, %v2528
    %v2530 = vpop.f32.mrf.mxu0
    %2531 = vmatprep.mubr.f32.mxu0 0.0
    %2532 = vmatmul.mubr.f32.gmra.mxu0 %v2452
    %v2533 = vpop.f32.mrf.mxu0
    %v2534 = vadd.f32 %v2443, %v2533
    %v2535 = vpop.f32.mrf.mxu0
    %2536 = vmatprep.mubr.f32.mxu0 0.0
    %2537 = vmatmul.mubr.f32.gmra.mxu0 %v2455
    %v2538 = vpop.f32.mrf.mxu0
    %v2539 = vadd.f32 %v2443, %v2538
    %v2540 = vpop.f32.mrf.mxu0
    %2541 = vdwg.mxu0
    %v2542 = vadd.f32 %v2336, %v2524
    %v2543 = vadd.f32 %v2337, %v2529
    %v2544 = vadd.f32 %v2338, %v2534
    %v2545 = vadd.f32 %v2339, %v2539
    %v2546 = vsel %vm232, %v2542, 0.0
    %2547 = vadd.xlane.f32.xlu0 %v2546
    %v2548 = vpop.xlane.xlu0 %2547
    %v2549 = vsel %vm232, %v2543, 0.0
    %2550 = vadd.xlane.f32.xlu0 %v2549
    %v2551 = vpop.xlane.xlu0 %2550
    %v2552 = vsel %vm232, %v2544, 0.0
    %2553 = vadd.xlane.f32.xlu0 %v2552
    %v2554 = vpop.xlane.xlu0 %2553
    %v2555 = vsel %vm232, %v2545, 0.0
    %2556 = vadd.xlane.f32.xlu0 %v2555
    %v2557 = vpop.xlane.xlu0 %2556
    %v2558 = vmul.f32 %v2548, %v2283
    %v2559 = vmul.f32 %v2551, %v2283
    %v2560 = vmul.f32 %v2554, %v2283
    %v2561 = vmul.f32 %v2557, %v2283
    %v2562 = vsub.f32 %v2542, %v2558
    %v2563 = vsub.f32 %v2543, %v2559
    %v2564 = vsub.f32 %v2544, %v2560
    %v2565 = vsub.f32 %v2545, %v2561
    %v2566 = vmul.f32 %v2562, %v2562
    %v2567 = vmul.f32 %v2563, %v2563
    %v2568 = vmul.f32 %v2564, %v2564
    %v2569 = vmul.f32 %v2565, %v2565
    %v2570 = vsel %vm232, %v2566, 0.0
    %2571 = vadd.xlane.f32.xlu0 %v2570
    %v2572 = vpop.xlane.xlu0 %2571
    %v2573 = vsel %vm232, %v2567, 0.0
    %2574 = vadd.xlane.f32.xlu0 %v2573
    %v2575 = vpop.xlane.xlu0 %2574
    %v2576 = vsel %vm232, %v2568, 0.0
    %2577 = vadd.xlane.f32.xlu0 %v2576
    %v2578 = vpop.xlane.xlu0 %2577
    %v2579 = vsel %vm232, %v2569, 0.0
    %2580 = vadd.xlane.f32.xlu0 %v2579
    %v2581 = vpop.xlane.xlu0 %2580
    %v2582 = vmul.f32 %v2572, %v2283
    %v2583 = vmul.f32 %v2575, %v2283
    %v2584 = vmul.f32 %v2578, %v2283
    %v2585 = vmul.f32 %v2581, %v2283
    %v2586 = vadd.f32 %v2582, 1e-05
    %v2587 = vadd.f32 %v2583, 1e-05
    %v2588 = vadd.f32 %v2584, 1e-05
    %v2589 = vadd.f32 %v2585, 1e-05
    %v2590 = vrsqrt.pop %v2586
    %v2591 = vrsqrt.pop %v2587
    %v2592 = vrsqrt.pop %v2588
    %v2593 = vrsqrt.pop %v2589
    %v2594 = vmul.f32 %v2562, %v2590
    %v2595 = vmul.f32 %v2563, %v2591
    %v2596 = vmul.f32 %v2564, %v2592
    %v2597 = vmul.f32 %v2565, %v2593
    %2598 = vrot.lane.b32.xlu0 %v2327, 64
    %v2599 = vpop.permute.xlu0 %2598
    %v2601 = vmul.f32 %v2594, %v2599
    %v2602 = vmul.f32 %v2595, %v2599
    %v2603 = vmul.f32 %v2596, %v2599
    %v2604 = vmul.f32 %v2597, %v2599
    %2605 = vrot.lane.b32.xlu0 %v2327, 32
    %v2606 = vpop.permute.xlu0 %2605
    %v2608 = vadd.f32 %v2601, %v2606
    %v2609 = vadd.f32 %v2602, %v2606
    %v2610 = vadd.f32 %v2603, %v2606
    %v2611 = vadd.f32 %v2604, %v2606
    %v2612 = vsel %vm232, %v2608, 0.0
    %2613 = vadd.xlane.f32.xlu0 %v2612
    %v2614 = vpop.xlane.xlu0 %2613
    %v2615 = vsel %vm232, %v2609, 0.0
    %2616 = vadd.xlane.f32.xlu0 %v2615
    %v2617 = vpop.xlane.xlu0 %2616
    %v2618 = vsel %vm232, %v2610, 0.0
    %2619 = vadd.xlane.f32.xlu0 %v2618
    %v2620 = vpop.xlane.xlu0 %2619
    %v2621 = vsel %vm232, %v2611, 0.0
    %2622 = vadd.xlane.f32.xlu0 %v2621
    %v2623 = vpop.xlane.xlu0 %2622
    %v2624 = vmul.f32 %v2614, %v2283
    %v2625 = vmul.f32 %v2617, %v2283
    %v2626 = vmul.f32 %v2620, %v2283
    %v2627 = vmul.f32 %v2623, %v2283
    %v2628 = vsub.f32 %v2608, %v2624
    %v2629 = vsub.f32 %v2609, %v2625
    %v2630 = vsub.f32 %v2610, %v2626
    %v2631 = vsub.f32 %v2611, %v2627
    %v2632 = vmul.f32 %v2628, %v2628
    %v2633 = vmul.f32 %v2629, %v2629
    %v2634 = vmul.f32 %v2630, %v2630
    %v2635 = vmul.f32 %v2631, %v2631
    %v2636 = vsel %vm232, %v2632, 0.0
    %2637 = vadd.xlane.f32.xlu0 %v2636
    %v2638 = vpop.xlane.xlu0 %2637
    %v2639 = vsel %vm232, %v2633, 0.0
    %2640 = vadd.xlane.f32.xlu0 %v2639
    %v2641 = vpop.xlane.xlu0 %2640
    %v2642 = vsel %vm232, %v2634, 0.0
    %2643 = vadd.xlane.f32.xlu0 %v2642
    %v2644 = vpop.xlane.xlu0 %2643
    %v2645 = vsel %vm232, %v2635, 0.0
    %2646 = vadd.xlane.f32.xlu0 %v2645
    %v2647 = vpop.xlane.xlu0 %2646
    %v2648 = vmul.f32 %v2638, %v2283
    %v2649 = vmul.f32 %v2641, %v2283
    %v2650 = vmul.f32 %v2644, %v2283
    %v2651 = vmul.f32 %v2647, %v2283
    %v2652 = vadd.f32 %v2648, 1e-05
    %v2653 = vadd.f32 %v2649, 1e-05
    %v2654 = vadd.f32 %v2650, 1e-05
    %v2655 = vadd.f32 %v2651, 1e-05
    %v2656 = vrsqrt.pop %v2652
    %v2657 = vrsqrt.pop %v2653
    %v2658 = vrsqrt.pop %v2654
    %v2659 = vrsqrt.pop %v2655
    %v2660 = vmul.f32 %v2628, %v2656
    %v2661 = vmul.f32 %v2629, %v2657
    %v2662 = vmul.f32 %v2630, %v2658
    %v2663 = vmul.f32 %v2631, %v2659
    %v2665 = vmul.f32 %v2660, %v200
    %v2666 = vmul.f32 %v2661, %v200
    %v2667 = vmul.f32 %v2662, %v200
    %v2668 = vmul.f32 %v2663, %v200
    %2669 = vrot.lane.b32.xlu0 %v200, 96
    %v2670 = vpop.permute.xlu0 %2669
    %v2672 = vadd.f32 %v2665, %v2670
    %v2673 = vadd.f32 %v2666, %v2670
    %v2674 = vadd.f32 %v2667, %v2670
    %v2675 = vadd.f32 %v2668, %v2670
    %2677 = vrot.lane.b32.xlu0 %v2673, 32
    %v2678 = vpop.permute.xlu0 %2677
    %2681 = vrot.lane.b32.xlu0 %v2674, 64
    %v2682 = vpop.permute.xlu0 %2681
    %2685 = vrot.lane.b32.xlu0 %v2675, 96
    %v2686 = vpop.permute.xlu0 %2685
    %v2688 = vsel %vm232, %v2672, %v2678
    %v2689 = vsel %vm2173, %v2688, %v2682
    %vm2690 = vcmask 785408
    %v2691 = vsel %vm2690, %v2689, %v2686
    %v2692 = vld [vmem:[%s5] sm:$0xff]
    %v2693 = vld [vmem:[%s5 + $0x8] sm:$0xff]
    %v2694 = vld [vmem:[%s5 + $0x10] sm:$0xff]
    %v2695 = vld [vmem:[%s5 + $0x18] sm:$0xff]
    %v2696 = vld [vmem:[%s5 + $0x20] sm:$0xff]
    %v2697 = vld [vmem:[%s5 + $0x28] sm:$0xff]
    %v2698 = vld [vmem:[%s5 + $0x30] sm:$0xff]
    %v2699 = vld [vmem:[%s5 + $0x38] sm:$0xff]
    %v2700 = vld [vmem:[%s5 + $0x40] sm:$0xff]
    %v2701 = vld [vmem:[%s5 + $0x48] sm:$0xff]
    %v2702 = vld [vmem:[%s5 + $0x50] sm:$0xff]
    %v2703 = vld [vmem:[%s5 + $0x58] sm:$0xff]
    %v2704 = vld [vmem:[%s5 + $0x60] sm:$0xff]
    %v2705 = vld [vmem:[%s5 + $0x68] sm:$0xff]
    %v2706 = vld [vmem:[%s5 + $0x70] sm:$0xff]
    %v2707 = vld [vmem:[%s5 + $0x78] sm:$0xff]
    %2708 = vrot.lane.b32.xlu0 %v200, 32
    %v2709 = vpop.permute.xlu0 %2708
    %2711 = vmatprep.subr.mxu0 0.0
    %2712 = vmatpush1.msra.mxu0 %v2707
    %2713 = vmatprep.subr.mxu0 0.0
    %2714 = vmatpush1.msra.mxu0 %v2706
    %2715 = vmatprep.subr.mxu0 0.0
    %2716 = vmatpush1.msra.mxu0 %v2705
    %2717 = vmatprep.subr.mxu0 0.0
    %2718 = vmatpush1.msra.mxu0 %v2704
    %2719 = vmatprep.subr.mxu0 0.0
    %2720 = vmatpush1.msra.mxu0 %v2703
    %2721 = vmatprep.subr.mxu0 0.0
    %2722 = vmatpush1.msra.mxu0 %v2702
    %2723 = vmatprep.subr.mxu0 0.0
    %2724 = vmatpush1.msra.mxu0 %v2701
    %2725 = vmatprep.subr.mxu0 0.0
    %2726 = vmatpush1.msra.mxu0 %v2700
    %2727 = vmatprep.subr.mxu0 0.0
    %2728 = vmatpush1.msra.mxu0 %v2699
    %2729 = vmatprep.subr.mxu0 0.0
    %2730 = vmatpush1.msra.mxu0 %v2698
    %2731 = vmatprep.subr.mxu0 0.0
    %2732 = vmatpush1.msra.mxu0 %v2697
    %2733 = vmatprep.subr.mxu0 0.0
    %2734 = vmatpush1.msra.mxu0 %v2696
    %2735 = vmatprep.subr.mxu0 0.0
    %2736 = vmatpush1.msra.mxu0 %v2695
    %2737 = vmatprep.subr.mxu0 0.0
    %2738 = vmatpush1.msra.mxu0 %v2694
    %2739 = vmatprep.subr.mxu0 0.0
    %2740 = vmatpush1.msra.mxu0 %v2693
    %2741 = vmatprep.subr.mxu0 0.0
    %2742 = vmatpush1.msra.mxu0 %v2692
    %2743 = vmatprep.subr.mxu0 0.0
    %2744 = vmatpush2.msra.mxu0 0.0
    %2745 = vmatprep.subr.mxu0 0.0
    %2746 = vmatpush2.msra.mxu0 0.0
    %2747 = vmatprep.subr.mxu0 0.0
    %2748 = vmatpush2.msra.mxu0 0.0
    %2749 = vmatprep.subr.mxu0 0.0
    %2750 = vmatpush2.msra.mxu0 0.0
    %2751 = vmatprep.subr.mxu0 0.0
    %2752 = vmatpush2.msra.mxu0 0.0
    %2753 = vmatprep.subr.mxu0 0.0
    %2754 = vmatpush2.msra.mxu0 0.0
    %2755 = vmatprep.subr.mxu0 0.0
    %2756 = vmatpush2.msra.mxu0 0.0
    %2757 = vmatprep.subr.mxu0 0.0
    %2758 = vmatpush2.msra.mxu0 0.0
    %2759 = vmatprep.subr.mxu0 0.0
    %2760 = vmatpush2.msra.mxu0 0.0
    %2761 = vmatprep.subr.mxu0 0.0
    %2762 = vmatpush2.msra.mxu0 0.0
    %2763 = vmatprep.subr.mxu0 0.0
    %2764 = vmatpush2.msra.mxu0 0.0
    %2765 = vmatprep.subr.mxu0 0.0
    %2766 = vmatpush2.msra.mxu0 0.0
    %2767 = vmatprep.subr.mxu0 0.0
    %2768 = vmatpush2.msra.mxu0 0.0
    %2769 = vmatprep.subr.mxu0 0.0
    %2770 = vmatpush2.msra.mxu0 0.0
    %2771 = vmatprep.subr.mxu0 0.0
    %2772 = vmatpush2.msra.mxu0 0.0
    %2773 = vmatprep.subr.mxu0 0.0
    %2774 = vmatpush2.msra.mxu0 0.0
    %2775 = vmatprep.mubr.f32.mxu0 0.0
    %2776 = vmatmul.mubr.f32.gmra.mxu0 %v2691
    %v2777 = vpop.f32.mrf.mxu0
    %v2778 = vadd.f32 %v2709, %v2777
    %v2779 = vpop.f32.mrf.mxu0
    %2780 = vdwg.mxu0
    %v2781 = vmul.f32 %v2778, %v108
    %v2782 = vadd.f32 %v2781, %v94
    %2783 = vst.msk [vmem:[#allocation2] sm:$0xff] %vm833, %v2782
    // Predicated region
    $region54: #{_lambda_.1} parent=1 // pred_check
      _
    $region55: #{_lambda_.1} parent=1 // pred_check_branch
      %2785 = sbr.rel (0) target = $region57
    $region56: #{_lambda_.1} parent=1 // pred_region
      %s2787 = ssub.s32 128, 128
      %2788 = vsyncadd [#allocation3], %s2787
      %s2790 = sshll.u32 [#allocation2], 4
      %s2791 = int_to_ptr.vmem [resolvable:$true] %s2790
      %2793 = dma.vmem_to_hbm [thread:$0]  %s2791, 128, %s13, [#allocation3]
    $region57: #{_lambda_.1} parent=1 // pred_fallthru
      _
    // Predicated region
    $region58: #{_lambda_.1} parent=1 // pred_check
      _
    $region59: #{_lambda_.1} parent=1 // pred_check_branch
      %2795 = sbr.rel (0) target = $region61
    $region60: #{_lambda_.1} parent=1 // pred_region
      %2796 = dma.done [#allocation3], 128
    $region61: #{_lambda_.1} parent=1 // pred_fallthru
      _
    %2797 = vsyncpa [#allocation3], 1

</llo_original>
